<compile_context>
chip_gen: v7x
topology: tpu7x:2x2x1
jax: 0.10.0
libtpu: 0.0.40
codegen_flags: <defaults>
</compile_context>

<pallas_src>
import jax
import jax.numpy as jnp
from jax.experimental import pallas as pl
from jax.experimental.pallas import tpu as pltpu

FEATS = 4        # self.n_feats
N_WINDOW = 8     # n_window (== seq length of the input here)
HIDDEN = 32      # hidden_size
NUM_LAYERS = 2   # num_layers
BATCH = 2
OUT_PAD = 128    # lane-dense output width (wrapper slices back to FEATS)


def _make_fused_kernel(T, B, H):
    """Builds the fused autoencoder kernel for static (T, B, H)."""
    H2 = 2 * H

    def sigmoid(v):
        # logistic(v) == 0.5*(1+tanh(v/2)): single EUP op, no VPU divide, f32-stable.
        return 0.5 * (jnp.tanh(0.5 * v) + 1.0)

    def kernel(x_ref,       # (T*B, H)   f32, features zero-padded F -> H lanes
               w_ref,       # (8H, 3H)   bf16, per-layer [W_ih ; W_hh] slabs
               b_ref,       # (8, 3H)    f32, rows 2l = b_ih_l + [b_hh_l[:2H]|0],
                            #                 rows 2l+1 = b_hh_l (only [2H:] used)
               wfc_ref,     # (H, 128)   bf16 (lanes >= F are zero)
               bfc_ref,     # (1, 128)   f32
               out_ref):    # (T*B, 128) f32

        def cell(gi_t, h, whh_bf, bhn):
            # PyTorch GRU gate order [r | z | n]; b_hh[:2H] already folded into gi_t.
            gh = jnp.dot(h.astype(jnp.bfloat16), whh_bf,
                         preferred_element_type=jnp.float32)
            rz = sigmoid(gi_t[:, :H2] + gh[:, :H2])       # r|z in one transcendental
            r = rz[:, :H]
            z = rz[:, H:]
            n = jnp.tanh(gi_t[:, H2:] + r * (gh[:, H2:] + bhn))
            return n + z * (h - n)                        # == (1-z)*n + z*h

        def run_layer(layer, x_in, h0, broadcast_input=False):
            # Static slab offsets (layer is a Python int).
            row0 = 2 * H * layer
            wih_bf = w_ref[row0:row0 + H, :]                     # (H, 3H) bf16
            whh_bf = w_ref[row0 + H:row0 + 2 * H, :]             # (H, 3H) bf16
            bih = b_ref[2 * layer:2 * layer + 1, :]              # (1, 3H) f32
            bhn = b_ref[2 * layer + 1:2 * layer + 2, H2:]        # (1, H)  f32
            # Hoisted input projection: one matmul covers every timestep.
            gi_all = jnp.dot(x_in.astype(jnp.bfloat16), wih_bf,
                             preferred_element_type=jnp.float32) + bih
            h = h0
            hs = []
            for t in range(T):                                   # static full unroll
                gi_t = gi_all if broadcast_input else gi_all[t * B:(t + 1) * B, :]
                h = cell(gi_t, h, whh_bf, bhn)
                hs.append(h)
            return h, jnp.concatenate(hs, axis=0)                # (B,H), (T*B,H)

        h_zero = jnp.zeros((B, H), jnp.float32)

        # ----- Encoder -----
        # TODO(synk): nn.GRU inter-layer dropout is train-mode-only; eval semantics here.
        h_e0, seq_e0 = run_layer(0, x_ref[...], h_zero)
        h_e1, _ = run_layer(1, seq_e0, h_zero)

        # ----- Decoder: context = hidden[-1] repeated, h0 = encoder hidden stack -----
        _, seq_d0 = run_layer(2, h_e1, h_e0, broadcast_input=True)
        _, seq_d1 = run_layer(3, seq_d0, h_e1)

        # ----- Output projection: lane-dense (T*B, 128) store -----
        out_ref[...] = (jnp.dot(seq_d1.astype(jnp.bfloat16), wfc_ref[...],
                                preferred_element_type=jnp.float32) + bfc_ref[...])

    return kernel


def pack_params(params, feats=FEATS, hidden=HIDDEN):
    """Pre-pack PyTorch-layout params into consolidated kernel slabs ONCE."""
    H, H2 = hidden, 2 * hidden
    w_rows, b_rows = [], []
    for which in ('enc', 'dec'):
        for (w_ih, w_hh, b_ih, b_hh) in params[which]:
            wihT = jnp.transpose(w_ih).astype(jnp.float32)           # (Din, 3H)
            din = wihT.shape[0]
            if din < H:                                              # zero-pad rows F->H
                wihT = jnp.pad(wihT, ((0, H - din), (0, 0)))
            whhT = jnp.transpose(w_hh).astype(jnp.float32)           # (H, 3H)
            w_rows += [wihT, whhT]
            b_hh32 = b_hh.astype(jnp.float32)
            bih_folded = b_ih.astype(jnp.float32) + jnp.concatenate(
                [b_hh32[:H2], jnp.zeros((H,), jnp.float32)])
            b_rows += [bih_folded, b_hh32]
    w_slab = jnp.concatenate(w_rows, axis=0).astype(jnp.bfloat16)    # (8H, 3H) bf16
    b_slab = jnp.stack(b_rows, axis=0)                               # (8, 3H)  f32
    w_fc, b_fc = params['fc']
    wfc_pad = jnp.pad(jnp.transpose(w_fc).astype(jnp.float32),
                      ((0, 0), (0, OUT_PAD - feats))).astype(jnp.bfloat16)   # (H,128)
    bfc_pad = jnp.pad(b_fc.astype(jnp.float32).reshape(1, -1),
                      ((0, 0), (0, OUT_PAD - feats)))                        # (1,128)
    return (w_slab, b_slab, wfc_pad, bfc_pad)


@jax.jit
def gru_autoencoder_forward(x, packed):
    """x: (B, T, feats) batch-first, like the PyTorch module. Returns (B, T, feats)."""
    B, T, F = x.shape
    w_slab, b_slab, wfc, bfc = packed
    H = wfc.shape[0]
    x_flat = jnp.transpose(x, (1, 0, 2)).reshape(T * B, F).astype(jnp.float32)
    x_pad = jnp.pad(x_flat, ((0, 0), (0, H - F)))                    # F -> H lanes
    vmem = pl.BlockSpec(memory_space=pltpu.MemorySpace.VMEM)
    rec = pl.pallas_call(
        _make_fused_kernel(T, B, H),
        out_shape=jax.ShapeDtypeStruct((T * B, OUT_PAD), jnp.float32),
        in_specs=[vmem] * 5,
        out_specs=vmem,
    )(x_pad, w_slab, b_slab, wfc, bfc)
    return jnp.transpose(rec[:, :F].reshape(T, B, F), (1, 0, 2))


def init_params(key, feats=FEATS, hidden=HIDDEN, num_layers=NUM_LAYERS):
    """Deterministic PyTorch-style init: U(-1/sqrt(H), 1/sqrt(H))."""
    k = 1.0 / float(jnp.sqrt(jnp.float32(hidden)))
    keys = jax.random.split(key, 2 * num_layers * 4 + 2)
    idx = 0
    params = {'enc': [], 'dec': []}
    for which, in0 in (('enc', feats), ('dec', hidden)):
        for layer in range(num_layers):
            din = in0 if layer == 0 else hidden
            w_ih = jax.random.uniform(keys[idx], (3 * hidden, din), jnp.float32, -k, k); idx += 1
            w_hh = jax.random.uniform(keys[idx], (3 * hidden, hidden), jnp.float32, -k, k); idx += 1
            b_ih = jax.random.uniform(keys[idx], (3 * hidden,), jnp.float32, -k, k); idx += 1
            b_hh = jax.random.uniform(keys[idx], (3 * hidden,), jnp.float32, -k, k); idx += 1
            params[which].append((w_ih, w_hh, b_ih, b_hh))
    w_fc = jax.random.uniform(keys[idx], (feats, hidden), jnp.float32, -k, k); idx += 1
    b_fc = jax.random.uniform(keys[idx], (feats,), jnp.float32, -k, k)
    params['fc'] = (w_fc, b_fc)
    return params


if __name__ == "__main__":
    key = jax.random.PRNGKey(0)
    kp, kx = jax.random.split(key)
    params = init_params(kp)
    packed = pack_params(params)          # pre-pack weights once, outside the hot path
    x = jax.random.normal(kx, (BATCH, N_WINDOW, FEATS), jnp.float32)
    out = gru_autoencoder_forward(x, packed)
    jax.block_until_ready(out)
    assert out.shape == (BATCH, N_WINDOW, FEATS)
    assert out.dtype == jnp.float32
    print("KERNEL_OK")
</pallas_src>

<mosaic_0001>
module attributes {stable_mosaic.version = 11 : i64} {
  func.func @kernel(%arg0: memref<16x32xf32, #tpu.memory_space<vmem>>, %arg1: memref<256x96xbf16, #tpu.memory_space<vmem>>, %arg2: memref<8x96xf32, #tpu.memory_space<vmem>>, %arg3: memref<32x128xbf16, #tpu.memory_space<vmem>>, %arg4: memref<1x128xf32, #tpu.memory_space<vmem>>, %arg5: memref<16x128xf32, #tpu.memory_space<vmem>>) attributes {dimension_semantics = [], scalar_prefetch = 0 : i64, scratch_operands = 0 : i64, tpu.core_type = #tpu.core_type<tc>} {
    %cst = arith.constant 0.000000e+00 : f32
    %0 = vector.broadcast %cst : f32 to vector<2x32xf32>
    %c0 = arith.constant 0 : index
    %c0_0 = arith.constant 0 : index
    %1 = vector.load %arg0[%c0, %c0_0] : memref<16x32xf32, #tpu.memory_space<vmem>>, vector<16x32xf32>
    %c0_1 = arith.constant 0 : index
    %c0_2 = arith.constant 0 : index
    %2 = vector.load %arg1[%c0_1, %c0_2] : memref<256x96xbf16, #tpu.memory_space<vmem>>, vector<32x96xbf16>
    %c32 = arith.constant 32 : index
    %c0_3 = arith.constant 0 : index
    %3 = vector.load %arg1[%c32, %c0_3] : memref<256x96xbf16, #tpu.memory_space<vmem>>, vector<32x96xbf16>
    %c0_4 = arith.constant 0 : index
    %c0_5 = arith.constant 0 : index
    %4 = vector.load %arg2[%c0_4, %c0_5] : memref<8x96xf32, #tpu.memory_space<vmem>>, vector<1x96xf32>
    %c1 = arith.constant 1 : index
    %c64 = arith.constant 64 : index
    %5 = vector.load %arg2[%c1, %c64] : memref<8x96xf32, #tpu.memory_space<vmem>>, vector<1x32xf32>
    %6 = arith.truncf %1 : vector<16x32xf32> to vector<16x32xbf16>
    %cst_6 = arith.constant dense<0.000000e+00> : vector<16x96xf32>
    %7 = tpu.matmul %6, %2, %cst_6 {dimension_numbers = #tpu.dot_dimension_numbers<[1], [0], [0], [1], [0, 0, 1, 1], [], []>} : vector<16x32xbf16>, vector<32x96xbf16>, vector<16x96xf32> -> vector<16x96xf32>
    %8 = vector.broadcast %4 : vector<1x96xf32> to vector<16x96xf32>
    %9 = arith.addf %7, %8 : vector<16x96xf32>
    %10 = vector.extract_strided_slice %9 {offsets = [0, 0], sizes = [2, 96], strides = [1, 1]} : vector<16x96xf32> to vector<2x96xf32>
    %11 = arith.truncf %0 : vector<2x32xf32> to vector<2x32xbf16>
    %cst_7 = arith.constant dense<0.000000e+00> : vector<2x96xf32>
    %12 = tpu.matmul %11, %3, %cst_7 {dimension_numbers = #tpu.dot_dimension_numbers<[1], [0], [0], [1], [0, 0, 1, 1], [], []>} : vector<2x32xbf16>, vector<32x96xbf16>, vector<2x96xf32> -> vector<2x96xf32>
    %13 = vector.extract_strided_slice %10 {offsets = [0, 0], sizes = [2, 64], strides = [1, 1]} : vector<2x96xf32> to vector<2x64xf32>
    %14 = vector.extract_strided_slice %12 {offsets = [0, 0], sizes = [2, 64], strides = [1, 1]} : vector<2x96xf32> to vector<2x64xf32>
    %15 = arith.addf %13, %14 : vector<2x64xf32>
    %cst_8 = arith.constant 5.000000e-01 : f32
    %16 = vector.broadcast %cst_8 : f32 to vector<2x64xf32>
    %17 = arith.mulf %16, %15 : vector<2x64xf32>
    %18 = math.tanh %17 : vector<2x64xf32>
    %cst_9 = arith.constant 1.000000e+00 : f32
    %19 = vector.broadcast %cst_9 : f32 to vector<2x64xf32>
    %20 = arith.addf %18, %19 : vector<2x64xf32>
    %cst_10 = arith.constant 5.000000e-01 : f32
    %21 = vector.broadcast %cst_10 : f32 to vector<2x64xf32>
    %22 = arith.mulf %21, %20 : vector<2x64xf32>
    %23 = vector.extract_strided_slice %22 {offsets = [0, 0], sizes = [2, 32], strides = [1, 1]} : vector<2x64xf32> to vector<2x32xf32>
    %24 = vector.extract_strided_slice %22 {offsets = [0, 32], sizes = [2, 32], strides = [1, 1]} : vector<2x64xf32> to vector<2x32xf32>
    %25 = vector.extract_strided_slice %10 {offsets = [0, 64], sizes = [2, 32], strides = [1, 1]} : vector<2x96xf32> to vector<2x32xf32>
    %26 = vector.extract_strided_slice %12 {offsets = [0, 64], sizes = [2, 32], strides = [1, 1]} : vector<2x96xf32> to vector<2x32xf32>
    %27 = vector.broadcast %5 : vector<1x32xf32> to vector<2x32xf32>
    %28 = arith.addf %26, %27 : vector<2x32xf32>
    %29 = arith.mulf %23, %28 : vector<2x32xf32>
    %30 = arith.addf %25, %29 : vector<2x32xf32>
    %31 = math.tanh %30 : vector<2x32xf32>
    %32 = arith.subf %0, %31 : vector<2x32xf32>
    %33 = arith.mulf %24, %32 : vector<2x32xf32>
    %34 = arith.addf %31, %33 : vector<2x32xf32>
    %35 = vector.extract_strided_slice %9 {offsets = [2, 0], sizes = [2, 96], strides = [1, 1]} : vector<16x96xf32> to vector<2x96xf32>
    %36 = arith.truncf %34 : vector<2x32xf32> to vector<2x32xbf16>
    %cst_11 = arith.constant dense<0.000000e+00> : vector<2x96xf32>
    %37 = tpu.matmul %36, %3, %cst_11 {dimension_numbers = #tpu.dot_dimension_numbers<[1], [0], [0], [1], [0, 0, 1, 1], [], []>} : vector<2x32xbf16>, vector<32x96xbf16>, vector<2x96xf32> -> vector<2x96xf32>
    %38 = vector.extract_strided_slice %35 {offsets = [0, 0], sizes = [2, 64], strides = [1, 1]} : vector<2x96xf32> to vector<2x64xf32>
    %39 = vector.extract_strided_slice %37 {offsets = [0, 0], sizes = [2, 64], strides = [1, 1]} : vector<2x96xf32> to vector<2x64xf32>
    %40 = arith.addf %38, %39 : vector<2x64xf32>
    %cst_12 = arith.constant 5.000000e-01 : f32
    %41 = vector.broadcast %cst_12 : f32 to vector<2x64xf32>
    %42 = arith.mulf %41, %40 : vector<2x64xf32>
    %43 = math.tanh %42 : vector<2x64xf32>
    %cst_13 = arith.constant 1.000000e+00 : f32
    %44 = vector.broadcast %cst_13 : f32 to vector<2x64xf32>
    %45 = arith.addf %43, %44 : vector<2x64xf32>
    %cst_14 = arith.constant 5.000000e-01 : f32
    %46 = vector.broadcast %cst_14 : f32 to vector<2x64xf32>
    %47 = arith.mulf %46, %45 : vector<2x64xf32>
    %48 = vector.extract_strided_slice %47 {offsets = [0, 0], sizes = [2, 32], strides = [1, 1]} : vector<2x64xf32> to vector<2x32xf32>
    %49 = vector.extract_strided_slice %47 {offsets = [0, 32], sizes = [2, 32], strides = [1, 1]} : vector<2x64xf32> to vector<2x32xf32>
    %50 = vector.extract_strided_slice %35 {offsets = [0, 64], sizes = [2, 32], strides = [1, 1]} : vector<2x96xf32> to vector<2x32xf32>
    %51 = vector.extract_strided_slice %37 {offsets = [0, 64], sizes = [2, 32], strides = [1, 1]} : vector<2x96xf32> to vector<2x32xf32>
    %52 = vector.broadcast %5 : vector<1x32xf32> to vector<2x32xf32>
    %53 = arith.addf %51, %52 : vector<2x32xf32>
    %54 = arith.mulf %48, %53 : vector<2x32xf32>
    %55 = arith.addf %50, %54 : vector<2x32xf32>
    %56 = math.tanh %55 : vector<2x32xf32>
    %57 = arith.subf %34, %56 : vector<2x32xf32>
    %58 = arith.mulf %49, %57 : vector<2x32xf32>
    %59 = arith.addf %56, %58 : vector<2x32xf32>
    %60 = vector.extract_strided_slice %9 {offsets = [4, 0], sizes = [2, 96], strides = [1, 1]} : vector<16x96xf32> to vector<2x96xf32>
    %61 = arith.truncf %59 : vector<2x32xf32> to vector<2x32xbf16>
    %cst_15 = arith.constant dense<0.000000e+00> : vector<2x96xf32>
    %62 = tpu.matmul %61, %3, %cst_15 {dimension_numbers = #tpu.dot_dimension_numbers<[1], [0], [0], [1], [0, 0, 1, 1], [], []>} : vector<2x32xbf16>, vector<32x96xbf16>, vector<2x96xf32> -> vector<2x96xf32>
    %63 = vector.extract_strided_slice %60 {offsets = [0, 0], sizes = [2, 64], strides = [1, 1]} : vector<2x96xf32> to vector<2x64xf32>
    %64 = vector.extract_strided_slice %62 {offsets = [0, 0], sizes = [2, 64], strides = [1, 1]} : vector<2x96xf32> to vector<2x64xf32>
    %65 = arith.addf %63, %64 : vector<2x64xf32>
    %cst_16 = arith.constant 5.000000e-01 : f32
    %66 = vector.broadcast %cst_16 : f32 to vector<2x64xf32>
    %67 = arith.mulf %66, %65 : vector<2x64xf32>
    %68 = math.tanh %67 : vector<2x64xf32>
    %cst_17 = arith.constant 1.000000e+00 : f32
    %69 = vector.broadcast %cst_17 : f32 to vector<2x64xf32>
    %70 = arith.addf %68, %69 : vector<2x64xf32>
    %cst_18 = arith.constant 5.000000e-01 : f32
    %71 = vector.broadcast %cst_18 : f32 to vector<2x64xf32>
    %72 = arith.mulf %71, %70 : vector<2x64xf32>
    %73 = vector.extract_strided_slice %72 {offsets = [0, 0], sizes = [2, 32], strides = [1, 1]} : vector<2x64xf32> to vector<2x32xf32>
    %74 = vector.extract_strided_slice %72 {offsets = [0, 32], sizes = [2, 32], strides = [1, 1]} : vector<2x64xf32> to vector<2x32xf32>
    %75 = vector.extract_strided_slice %60 {offsets = [0, 64], sizes = [2, 32], strides = [1, 1]} : vector<2x96xf32> to vector<2x32xf32>
    %76 = vector.extract_strided_slice %62 {offsets = [0, 64], sizes = [2, 32], strides = [1, 1]} : vector<2x96xf32> to vector<2x32xf32>
    %77 = vector.broadcast %5 : vector<1x32xf32> to vector<2x32xf32>
    %78 = arith.addf %76, %77 : vector<2x32xf32>
    %79 = arith.mulf %73, %78 : vector<2x32xf32>
    %80 = arith.addf %75, %79 : vector<2x32xf32>
    %81 = math.tanh %80 : vector<2x32xf32>
    %82 = arith.subf %59, %81 : vector<2x32xf32>
    %83 = arith.mulf %74, %82 : vector<2x32xf32>
    %84 = arith.addf %81, %83 : vector<2x32xf32>
    %85 = vector.extract_strided_slice %9 {offsets = [6, 0], sizes = [2, 96], strides = [1, 1]} : vector<16x96xf32> to vector<2x96xf32>
    %86 = arith.truncf %84 : vector<2x32xf32> to vector<2x32xbf16>
    %cst_19 = arith.constant dense<0.000000e+00> : vector<2x96xf32>
    %87 = tpu.matmul %86, %3, %cst_19 {dimension_numbers = #tpu.dot_dimension_numbers<[1], [0], [0], [1], [0, 0, 1, 1], [], []>} : vector<2x32xbf16>, vector<32x96xbf16>, vector<2x96xf32> -> vector<2x96xf32>
    %88 = vector.extract_strided_slice %85 {offsets = [0, 0], sizes = [2, 64], strides = [1, 1]} : vector<2x96xf32> to vector<2x64xf32>
    %89 = vector.extract_strided_slice %87 {offsets = [0, 0], sizes = [2, 64], strides = [1, 1]} : vector<2x96xf32> to vector<2x64xf32>
    %90 = arith.addf %88, %89 : vector<2x64xf32>
    %cst_20 = arith.constant 5.000000e-01 : f32
    %91 = vector.broadcast %cst_20 : f32 to vector<2x64xf32>
    %92 = arith.mulf %91, %90 : vector<2x64xf32>
    %93 = math.tanh %92 : vector<2x64xf32>
    %cst_21 = arith.constant 1.000000e+00 : f32
    %94 = vector.broadcast %cst_21 : f32 to vector<2x64xf32>
    %95 = arith.addf %93, %94 : vector<2x64xf32>
    %cst_22 = arith.constant 5.000000e-01 : f32
    %96 = vector.broadcast %cst_22 : f32 to vector<2x64xf32>
    %97 = arith.mulf %96, %95 : vector<2x64xf32>
    %98 = vector.extract_strided_slice %97 {offsets = [0, 0], sizes = [2, 32], strides = [1, 1]} : vector<2x64xf32> to vector<2x32xf32>
    %99 = vector.extract_strided_slice %97 {offsets = [0, 32], sizes = [2, 32], strides = [1, 1]} : vector<2x64xf32> to vector<2x32xf32>
    %100 = vector.extract_strided_slice %85 {offsets = [0, 64], sizes = [2, 32], strides = [1, 1]} : vector<2x96xf32> to vector<2x32xf32>
    %101 = vector.extract_strided_slice %87 {offsets = [0, 64], sizes = [2, 32], strides = [1, 1]} : vector<2x96xf32> to vector<2x32xf32>
    %102 = vector.broadcast %5 : vector<1x32xf32> to vector<2x32xf32>
    %103 = arith.addf %101, %102 : vector<2x32xf32>
    %104 = arith.mulf %98, %103 : vector<2x32xf32>
    %105 = arith.addf %100, %104 : vector<2x32xf32>
    %106 = math.tanh %105 : vector<2x32xf32>
    %107 = arith.subf %84, %106 : vector<2x32xf32>
    %108 = arith.mulf %99, %107 : vector<2x32xf32>
    %109 = arith.addf %106, %108 : vector<2x32xf32>
    %110 = vector.extract_strided_slice %9 {offsets = [8, 0], sizes = [2, 96], strides = [1, 1]} : vector<16x96xf32> to vector<2x96xf32>
    %111 = arith.truncf %109 : vector<2x32xf32> to vector<2x32xbf16>
    %cst_23 = arith.constant dense<0.000000e+00> : vector<2x96xf32>
    %112 = tpu.matmul %111, %3, %cst_23 {dimension_numbers = #tpu.dot_dimension_numbers<[1], [0], [0], [1], [0, 0, 1, 1], [], []>} : vector<2x32xbf16>, vector<32x96xbf16>, vector<2x96xf32> -> vector<2x96xf32>
    %113 = vector.extract_strided_slice %110 {offsets = [0, 0], sizes = [2, 64], strides = [1, 1]} : vector<2x96xf32> to vector<2x64xf32>
    %114 = vector.extract_strided_slice %112 {offsets = [0, 0], sizes = [2, 64], strides = [1, 1]} : vector<2x96xf32> to vector<2x64xf32>
    %115 = arith.addf %113, %114 : vector<2x64xf32>
    %cst_24 = arith.constant 5.000000e-01 : f32
    %116 = vector.broadcast %cst_24 : f32 to vector<2x64xf32>
    %117 = arith.mulf %116, %115 : vector<2x64xf32>
    %118 = math.tanh %117 : vector<2x64xf32>
    %cst_25 = arith.constant 1.000000e+00 : f32
    %119 = vector.broadcast %cst_25 : f32 to vector<2x64xf32>
    %120 = arith.addf %118, %119 : vector<2x64xf32>
    %cst_26 = arith.constant 5.000000e-01 : f32
    %121 = vector.broadcast %cst_26 : f32 to vector<2x64xf32>
    %122 = arith.mulf %121, %120 : vector<2x64xf32>
    %123 = vector.extract_strided_slice %122 {offsets = [0, 0], sizes = [2, 32], strides = [1, 1]} : vector<2x64xf32> to vector<2x32xf32>
    %124 = vector.extract_strided_slice %122 {offsets = [0, 32], sizes = [2, 32], strides = [1, 1]} : vector<2x64xf32> to vector<2x32xf32>
    %125 = vector.extract_strided_slice %110 {offsets = [0, 64], sizes = [2, 32], strides = [1, 1]} : vector<2x96xf32> to vector<2x32xf32>
    %126 = vector.extract_strided_slice %112 {offsets = [0, 64], sizes = [2, 32], strides = [1, 1]} : vector<2x96xf32> to vector<2x32xf32>
    %127 = vector.broadcast %5 : vector<1x32xf32> to vector<2x32xf32>
    %128 = arith.addf %126, %127 : vector<2x32xf32>
    %129 = arith.mulf %123, %128 : vector<2x32xf32>
    %130 = arith.addf %125, %129 : vector<2x32xf32>
    %131 = math.tanh %130 : vector<2x32xf32>
    %132 = arith.subf %109, %131 : vector<2x32xf32>
    %133 = arith.mulf %124, %132 : vector<2x32xf32>
    %134 = arith.addf %131, %133 : vector<2x32xf32>
    %135 = vector.extract_strided_slice %9 {offsets = [10, 0], sizes = [2, 96], strides = [1, 1]} : vector<16x96xf32> to vector<2x96xf32>
    %136 = arith.truncf %134 : vector<2x32xf32> to vector<2x32xbf16>
    %cst_27 = arith.constant dense<0.000000e+00> : vector<2x96xf32>
    %137 = tpu.matmul %136, %3, %cst_27 {dimension_numbers = #tpu.dot_dimension_numbers<[1], [0], [0], [1], [0, 0, 1, 1], [], []>} : vector<2x32xbf16>, vector<32x96xbf16>, vector<2x96xf32> -> vector<2x96xf32>
    %138 = vector.extract_strided_slice %135 {offsets = [0, 0], sizes = [2, 64], strides = [1, 1]} : vector<2x96xf32> to vector<2x64xf32>
    %139 = vector.extract_strided_slice %137 {offsets = [0, 0], sizes = [2, 64], strides = [1, 1]} : vector<2x96xf32> to vector<2x64xf32>
    %140 = arith.addf %138, %139 : vector<2x64xf32>
    %cst_28 = arith.constant 5.000000e-01 : f32
    %141 = vector.broadcast %cst_28 : f32 to vector<2x64xf32>
    %142 = arith.mulf %141, %140 : vector<2x64xf32>
    %143 = math.tanh %142 : vector<2x64xf32>
    %cst_29 = arith.constant 1.000000e+00 : f32
    %144 = vector.broadcast %cst_29 : f32 to vector<2x64xf32>
    %145 = arith.addf %143, %144 : vector<2x64xf32>
    %cst_30 = arith.constant 5.000000e-01 : f32
    %146 = vector.broadcast %cst_30 : f32 to vector<2x64xf32>
    %147 = arith.mulf %146, %145 : vector<2x64xf32>
    %148 = vector.extract_strided_slice %147 {offsets = [0, 0], sizes = [2, 32], strides = [1, 1]} : vector<2x64xf32> to vector<2x32xf32>
    %149 = vector.extract_strided_slice %147 {offsets = [0, 32], sizes = [2, 32], strides = [1, 1]} : vector<2x64xf32> to vector<2x32xf32>
    %150 = vector.extract_strided_slice %135 {offsets = [0, 64], sizes = [2, 32], strides = [1, 1]} : vector<2x96xf32> to vector<2x32xf32>
    %151 = vector.extract_strided_slice %137 {offsets = [0, 64], sizes = [2, 32], strides = [1, 1]} : vector<2x96xf32> to vector<2x32xf32>
    %152 = vector.broadcast %5 : vector<1x32xf32> to vector<2x32xf32>
    %153 = arith.addf %151, %152 : vector<2x32xf32>
    %154 = arith.mulf %148, %153 : vector<2x32xf32>
    %155 = arith.addf %150, %154 : vector<2x32xf32>
    %156 = math.tanh %155 : vector<2x32xf32>
    %157 = arith.subf %134, %156 : vector<2x32xf32>
    %158 = arith.mulf %149, %157 : vector<2x32xf32>
    %159 = arith.addf %156, %158 : vector<2x32xf32>
    %160 = vector.extract_strided_slice %9 {offsets = [12, 0], sizes = [2, 96], strides = [1, 1]} : vector<16x96xf32> to vector<2x96xf32>
    %161 = arith.truncf %159 : vector<2x32xf32> to vector<2x32xbf16>
    %cst_31 = arith.constant dense<0.000000e+00> : vector<2x96xf32>
    %162 = tpu.matmul %161, %3, %cst_31 {dimension_numbers = #tpu.dot_dimension_numbers<[1], [0], [0], [1], [0, 0, 1, 1], [], []>} : vector<2x32xbf16>, vector<32x96xbf16>, vector<2x96xf32> -> vector<2x96xf32>
    %163 = vector.extract_strided_slice %160 {offsets = [0, 0], sizes = [2, 64], strides = [1, 1]} : vector<2x96xf32> to vector<2x64xf32>
    %164 = vector.extract_strided_slice %162 {offsets = [0, 0], sizes = [2, 64], strides = [1, 1]} : vector<2x96xf32> to vector<2x64xf32>
    %165 = arith.addf %163, %164 : vector<2x64xf32>
    %cst_32 = arith.constant 5.000000e-01 : f32
    %166 = vector.broadcast %cst_32 : f32 to vector<2x64xf32>
    %167 = arith.mulf %166, %165 : vector<2x64xf32>
    %168 = math.tanh %167 : vector<2x64xf32>
    %cst_33 = arith.constant 1.000000e+00 : f32
    %169 = vector.broadcast %cst_33 : f32 to vector<2x64xf32>
    %170 = arith.addf %168, %169 : vector<2x64xf32>
    %cst_34 = arith.constant 5.000000e-01 : f32
    %171 = vector.broadcast %cst_34 : f32 to vector<2x64xf32>
    %172 = arith.mulf %171, %170 : vector<2x64xf32>
    %173 = vector.extract_strided_slice %172 {offsets = [0, 0], sizes = [2, 32], strides = [1, 1]} : vector<2x64xf32> to vector<2x32xf32>
    %174 = vector.extract_strided_slice %172 {offsets = [0, 32], sizes = [2, 32], strides = [1, 1]} : vector<2x64xf32> to vector<2x32xf32>
    %175 = vector.extract_strided_slice %160 {offsets = [0, 64], sizes = [2, 32], strides = [1, 1]} : vector<2x96xf32> to vector<2x32xf32>
    %176 = vector.extract_strided_slice %162 {offsets = [0, 64], sizes = [2, 32], strides = [1, 1]} : vector<2x96xf32> to vector<2x32xf32>
    %177 = vector.broadcast %5 : vector<1x32xf32> to vector<2x32xf32>
    %178 = arith.addf %176, %177 : vector<2x32xf32>
    %179 = arith.mulf %173, %178 : vector<2x32xf32>
    %180 = arith.addf %175, %179 : vector<2x32xf32>
    %181 = math.tanh %180 : vector<2x32xf32>
    %182 = arith.subf %159, %181 : vector<2x32xf32>
    %183 = arith.mulf %174, %182 : vector<2x32xf32>
    %184 = arith.addf %181, %183 : vector<2x32xf32>
    %185 = vector.extract_strided_slice %9 {offsets = [14, 0], sizes = [2, 96], strides = [1, 1]} : vector<16x96xf32> to vector<2x96xf32>
    %186 = arith.truncf %184 : vector<2x32xf32> to vector<2x32xbf16>
    %cst_35 = arith.constant dense<0.000000e+00> : vector<2x96xf32>
    %187 = tpu.matmul %186, %3, %cst_35 {dimension_numbers = #tpu.dot_dimension_numbers<[1], [0], [0], [1], [0, 0, 1, 1], [], []>} : vector<2x32xbf16>, vector<32x96xbf16>, vector<2x96xf32> -> vector<2x96xf32>
    %188 = vector.extract_strided_slice %185 {offsets = [0, 0], sizes = [2, 64], strides = [1, 1]} : vector<2x96xf32> to vector<2x64xf32>
    %189 = vector.extract_strided_slice %187 {offsets = [0, 0], sizes = [2, 64], strides = [1, 1]} : vector<2x96xf32> to vector<2x64xf32>
    %190 = arith.addf %188, %189 : vector<2x64xf32>
    %cst_36 = arith.constant 5.000000e-01 : f32
    %191 = vector.broadcast %cst_36 : f32 to vector<2x64xf32>
    %192 = arith.mulf %191, %190 : vector<2x64xf32>
    %193 = math.tanh %192 : vector<2x64xf32>
    %cst_37 = arith.constant 1.000000e+00 : f32
    %194 = vector.broadcast %cst_37 : f32 to vector<2x64xf32>
    %195 = arith.addf %193, %194 : vector<2x64xf32>
    %cst_38 = arith.constant 5.000000e-01 : f32
    %196 = vector.broadcast %cst_38 : f32 to vector<2x64xf32>
    %197 = arith.mulf %196, %195 : vector<2x64xf32>
    %198 = vector.extract_strided_slice %197 {offsets = [0, 0], sizes = [2, 32], strides = [1, 1]} : vector<2x64xf32> to vector<2x32xf32>
    %199 = vector.extract_strided_slice %197 {offsets = [0, 32], sizes = [2, 32], strides = [1, 1]} : vector<2x64xf32> to vector<2x32xf32>
    %200 = vector.extract_strided_slice %185 {offsets = [0, 64], sizes = [2, 32], strides = [1, 1]} : vector<2x96xf32> to vector<2x32xf32>
    %201 = vector.extract_strided_slice %187 {offsets = [0, 64], sizes = [2, 32], strides = [1, 1]} : vector<2x96xf32> to vector<2x32xf32>
    %202 = vector.broadcast %5 : vector<1x32xf32> to vector<2x32xf32>
    %203 = arith.addf %201, %202 : vector<2x32xf32>
    %204 = arith.mulf %198, %203 : vector<2x32xf32>
    %205 = arith.addf %200, %204 : vector<2x32xf32>
    %206 = math.tanh %205 : vector<2x32xf32>
    %207 = arith.subf %184, %206 : vector<2x32xf32>
    %208 = arith.mulf %199, %207 : vector<2x32xf32>
    %209 = arith.addf %206, %208 : vector<2x32xf32>
    %210 = tpu.concatenate %34, %59, %84, %109, %134, %159, %184, %209 in 0 : vector<2x32xf32>, vector<2x32xf32>, vector<2x32xf32>, vector<2x32xf32>, vector<2x32xf32>, vector<2x32xf32>, vector<2x32xf32>, vector<2x32xf32> -> vector<16x32xf32>
    %c64_39 = arith.constant 64 : index
    %c0_40 = arith.constant 0 : index
    %211 = vector.load %arg1[%c64_39, %c0_40] : memref<256x96xbf16, #tpu.memory_space<vmem>>, vector<32x96xbf16>
    %c96 = arith.constant 96 : index
    %c0_41 = arith.constant 0 : index
    %212 = vector.load %arg1[%c96, %c0_41] : memref<256x96xbf16, #tpu.memory_space<vmem>>, vector<32x96xbf16>
    %c2 = arith.constant 2 : index
    %c0_42 = arith.constant 0 : index
    %213 = vector.load %arg2[%c2, %c0_42] : memref<8x96xf32, #tpu.memory_space<vmem>>, vector<1x96xf32>
    %c3 = arith.constant 3 : index
    %c64_43 = arith.constant 64 : index
    %214 = vector.load %arg2[%c3, %c64_43] : memref<8x96xf32, #tpu.memory_space<vmem>>, vector<1x32xf32>
    %215 = arith.truncf %210 : vector<16x32xf32> to vector<16x32xbf16>
    %cst_44 = arith.constant dense<0.000000e+00> : vector<16x96xf32>
    %216 = tpu.matmul %215, %211, %cst_44 {dimension_numbers = #tpu.dot_dimension_numbers<[1], [0], [0], [1], [0, 0, 1, 1], [], []>} : vector<16x32xbf16>, vector<32x96xbf16>, vector<16x96xf32> -> vector<16x96xf32>
    %217 = vector.broadcast %213 : vector<1x96xf32> to vector<16x96xf32>
    %218 = arith.addf %216, %217 : vector<16x96xf32>
    %219 = vector.extract_strided_slice %218 {offsets = [0, 0], sizes = [2, 96], strides = [1, 1]} : vector<16x96xf32> to vector<2x96xf32>
    %220 = arith.truncf %0 : vector<2x32xf32> to vector<2x32xbf16>
    %cst_45 = arith.constant dense<0.000000e+00> : vector<2x96xf32>
    %221 = tpu.matmul %220, %212, %cst_45 {dimension_numbers = #tpu.dot_dimension_numbers<[1], [0], [0], [1], [0, 0, 1, 1], [], []>} : vector<2x32xbf16>, vector<32x96xbf16>, vector<2x96xf32> -> vector<2x96xf32>
    %222 = vector.extract_strided_slice %219 {offsets = [0, 0], sizes = [2, 64], strides = [1, 1]} : vector<2x96xf32> to vector<2x64xf32>
    %223 = vector.extract_strided_slice %221 {offsets = [0, 0], sizes = [2, 64], strides = [1, 1]} : vector<2x96xf32> to vector<2x64xf32>
    %224 = arith.addf %222, %223 : vector<2x64xf32>
    %cst_46 = arith.constant 5.000000e-01 : f32
    %225 = vector.broadcast %cst_46 : f32 to vector<2x64xf32>
    %226 = arith.mulf %225, %224 : vector<2x64xf32>
    %227 = math.tanh %226 : vector<2x64xf32>
    %cst_47 = arith.constant 1.000000e+00 : f32
    %228 = vector.broadcast %cst_47 : f32 to vector<2x64xf32>
    %229 = arith.addf %227, %228 : vector<2x64xf32>
    %cst_48 = arith.constant 5.000000e-01 : f32
    %230 = vector.broadcast %cst_48 : f32 to vector<2x64xf32>
    %231 = arith.mulf %230, %229 : vector<2x64xf32>
    %232 = vector.extract_strided_slice %231 {offsets = [0, 0], sizes = [2, 32], strides = [1, 1]} : vector<2x64xf32> to vector<2x32xf32>
    %233 = vector.extract_strided_slice %231 {offsets = [0, 32], sizes = [2, 32], strides = [1, 1]} : vector<2x64xf32> to vector<2x32xf32>
    %234 = vector.extract_strided_slice %219 {offsets = [0, 64], sizes = [2, 32], strides = [1, 1]} : vector<2x96xf32> to vector<2x32xf32>
    %235 = vector.extract_strided_slice %221 {offsets = [0, 64], sizes = [2, 32], strides = [1, 1]} : vector<2x96xf32> to vector<2x32xf32>
    %236 = vector.broadcast %214 : vector<1x32xf32> to vector<2x32xf32>
    %237 = arith.addf %235, %236 : vector<2x32xf32>
    %238 = arith.mulf %232, %237 : vector<2x32xf32>
    %239 = arith.addf %234, %238 : vector<2x32xf32>
    %240 = math.tanh %239 : vector<2x32xf32>
    %241 = arith.subf %0, %240 : vector<2x32xf32>
    %242 = arith.mulf %233, %241 : vector<2x32xf32>
    %243 = arith.addf %240, %242 : vector<2x32xf32>
    %244 = vector.extract_strided_slice %218 {offsets = [2, 0], sizes = [2, 96], strides = [1, 1]} : vector<16x96xf32> to vector<2x96xf32>
    %245 = arith.truncf %243 : vector<2x32xf32> to vector<2x32xbf16>
    %cst_49 = arith.constant dense<0.000000e+00> : vector<2x96xf32>
    %246 = tpu.matmul %245, %212, %cst_49 {dimension_numbers = #tpu.dot_dimension_numbers<[1], [0], [0], [1], [0, 0, 1, 1], [], []>} : vector<2x32xbf16>, vector<32x96xbf16>, vector<2x96xf32> -> vector<2x96xf32>
    %247 = vector.extract_strided_slice %244 {offsets = [0, 0], sizes = [2, 64], strides = [1, 1]} : vector<2x96xf32> to vector<2x64xf32>
    %248 = vector.extract_strided_slice %246 {offsets = [0, 0], sizes = [2, 64], strides = [1, 1]} : vector<2x96xf32> to vector<2x64xf32>
    %249 = arith.addf %247, %248 : vector<2x64xf32>
    %cst_50 = arith.constant 5.000000e-01 : f32
    %250 = vector.broadcast %cst_50 : f32 to vector<2x64xf32>
    %251 = arith.mulf %250, %249 : vector<2x64xf32>
    %252 = math.tanh %251 : vector<2x64xf32>
    %cst_51 = arith.constant 1.000000e+00 : f32
    %253 = vector.broadcast %cst_51 : f32 to vector<2x64xf32>
    %254 = arith.addf %252, %253 : vector<2x64xf32>
    %cst_52 = arith.constant 5.000000e-01 : f32
    %255 = vector.broadcast %cst_52 : f32 to vector<2x64xf32>
    %256 = arith.mulf %255, %254 : vector<2x64xf32>
    %257 = vector.extract_strided_slice %256 {offsets = [0, 0], sizes = [2, 32], strides = [1, 1]} : vector<2x64xf32> to vector<2x32xf32>
    %258 = vector.extract_strided_slice %256 {offsets = [0, 32], sizes = [2, 32], strides = [1, 1]} : vector<2x64xf32> to vector<2x32xf32>
    %259 = vector.extract_strided_slice %244 {offsets = [0, 64], sizes = [2, 32], strides = [1, 1]} : vector<2x96xf32> to vector<2x32xf32>
    %260 = vector.extract_strided_slice %246 {offsets = [0, 64], sizes = [2, 32], strides = [1, 1]} : vector<2x96xf32> to vector<2x32xf32>
    %261 = vector.broadcast %214 : vector<1x32xf32> to vector<2x32xf32>
    %262 = arith.addf %260, %261 : vector<2x32xf32>
    %263 = arith.mulf %257, %262 : vector<2x32xf32>
    %264 = arith.addf %259, %263 : vector<2x32xf32>
    %265 = math.tanh %264 : vector<2x32xf32>
    %266 = arith.subf %243, %265 : vector<2x32xf32>
    %267 = arith.mulf %258, %266 : vector<2x32xf32>
    %268 = arith.addf %265, %267 : vector<2x32xf32>
    %269 = vector.extract_strided_slice %218 {offsets = [4, 0], sizes = [2, 96], strides = [1, 1]} : vector<16x96xf32> to vector<2x96xf32>
    %270 = arith.truncf %268 : vector<2x32xf32> to vector<2x32xbf16>
    %cst_53 = arith.constant dense<0.000000e+00> : vector<2x96xf32>
    %271 = tpu.matmul %270, %212, %cst_53 {dimension_numbers = #tpu.dot_dimension_numbers<[1], [0], [0], [1], [0, 0, 1, 1], [], []>} : vector<2x32xbf16>, vector<32x96xbf16>, vector<2x96xf32> -> vector<2x96xf32>
    %272 = vector.extract_strided_slice %269 {offsets = [0, 0], sizes = [2, 64], strides = [1, 1]} : vector<2x96xf32> to vector<2x64xf32>
    %273 = vector.extract_strided_slice %271 {offsets = [0, 0], sizes = [2, 64], strides = [1, 1]} : vector<2x96xf32> to vector<2x64xf32>
    %274 = arith.addf %272, %273 : vector<2x64xf32>
    %cst_54 = arith.constant 5.000000e-01 : f32
    %275 = vector.broadcast %cst_54 : f32 to vector<2x64xf32>
    %276 = arith.mulf %275, %274 : vector<2x64xf32>
    %277 = math.tanh %276 : vector<2x64xf32>
    %cst_55 = arith.constant 1.000000e+00 : f32
    %278 = vector.broadcast %cst_55 : f32 to vector<2x64xf32>
    %279 = arith.addf %277, %278 : vector<2x64xf32>
    %cst_56 = arith.constant 5.000000e-01 : f32
    %280 = vector.broadcast %cst_56 : f32 to vector<2x64xf32>
    %281 = arith.mulf %280, %279 : vector<2x64xf32>
    %282 = vector.extract_strided_slice %281 {offsets = [0, 0], sizes = [2, 32], strides = [1, 1]} : vector<2x64xf32> to vector<2x32xf32>
    %283 = vector.extract_strided_slice %281 {offsets = [0, 32], sizes = [2, 32], strides = [1, 1]} : vector<2x64xf32> to vector<2x32xf32>
    %284 = vector.extract_strided_slice %269 {offsets = [0, 64], sizes = [2, 32], strides = [1, 1]} : vector<2x96xf32> to vector<2x32xf32>
    %285 = vector.extract_strided_slice %271 {offsets = [0, 64], sizes = [2, 32], strides = [1, 1]} : vector<2x96xf32> to vector<2x32xf32>
    %286 = vector.broadcast %214 : vector<1x32xf32> to vector<2x32xf32>
    %287 = arith.addf %285, %286 : vector<2x32xf32>
    %288 = arith.mulf %282, %287 : vector<2x32xf32>
    %289 = arith.addf %284, %288 : vector<2x32xf32>
    %290 = math.tanh %289 : vector<2x32xf32>
    %291 = arith.subf %268, %290 : vector<2x32xf32>
    %292 = arith.mulf %283, %291 : vector<2x32xf32>
    %293 = arith.addf %290, %292 : vector<2x32xf32>
    %294 = vector.extract_strided_slice %218 {offsets = [6, 0], sizes = [2, 96], strides = [1, 1]} : vector<16x96xf32> to vector<2x96xf32>
    %295 = arith.truncf %293 : vector<2x32xf32> to vector<2x32xbf16>
    %cst_57 = arith.constant dense<0.000000e+00> : vector<2x96xf32>
    %296 = tpu.matmul %295, %212, %cst_57 {dimension_numbers = #tpu.dot_dimension_numbers<[1], [0], [0], [1], [0, 0, 1, 1], [], []>} : vector<2x32xbf16>, vector<32x96xbf16>, vector<2x96xf32> -> vector<2x96xf32>
    %297 = vector.extract_strided_slice %294 {offsets = [0, 0], sizes = [2, 64], strides = [1, 1]} : vector<2x96xf32> to vector<2x64xf32>
    %298 = vector.extract_strided_slice %296 {offsets = [0, 0], sizes = [2, 64], strides = [1, 1]} : vector<2x96xf32> to vector<2x64xf32>
    %299 = arith.addf %297, %298 : vector<2x64xf32>
    %cst_58 = arith.constant 5.000000e-01 : f32
    %300 = vector.broadcast %cst_58 : f32 to vector<2x64xf32>
    %301 = arith.mulf %300, %299 : vector<2x64xf32>
    %302 = math.tanh %301 : vector<2x64xf32>
    %cst_59 = arith.constant 1.000000e+00 : f32
    %303 = vector.broadcast %cst_59 : f32 to vector<2x64xf32>
    %304 = arith.addf %302, %303 : vector<2x64xf32>
    %cst_60 = arith.constant 5.000000e-01 : f32
    %305 = vector.broadcast %cst_60 : f32 to vector<2x64xf32>
    %306 = arith.mulf %305, %304 : vector<2x64xf32>
    %307 = vector.extract_strided_slice %306 {offsets = [0, 0], sizes = [2, 32], strides = [1, 1]} : vector<2x64xf32> to vector<2x32xf32>
    %308 = vector.extract_strided_slice %306 {offsets = [0, 32], sizes = [2, 32], strides = [1, 1]} : vector<2x64xf32> to vector<2x32xf32>
    %309 = vector.extract_strided_slice %294 {offsets = [0, 64], sizes = [2, 32], strides = [1, 1]} : vector<2x96xf32> to vector<2x32xf32>
    %310 = vector.extract_strided_slice %296 {offsets = [0, 64], sizes = [2, 32], strides = [1, 1]} : vector<2x96xf32> to vector<2x32xf32>
    %311 = vector.broadcast %214 : vector<1x32xf32> to vector<2x32xf32>
    %312 = arith.addf %310, %311 : vector<2x32xf32>
    %313 = arith.mulf %307, %312 : vector<2x32xf32>
    %314 = arith.addf %309, %313 : vector<2x32xf32>
    %315 = math.tanh %314 : vector<2x32xf32>
    %316 = arith.subf %293, %315 : vector<2x32xf32>
    %317 = arith.mulf %308, %316 : vector<2x32xf32>
    %318 = arith.addf %315, %317 : vector<2x32xf32>
    %319 = vector.extract_strided_slice %218 {offsets = [8, 0], sizes = [2, 96], strides = [1, 1]} : vector<16x96xf32> to vector<2x96xf32>
    %320 = arith.truncf %318 : vector<2x32xf32> to vector<2x32xbf16>
    %cst_61 = arith.constant dense<0.000000e+00> : vector<2x96xf32>
    %321 = tpu.matmul %320, %212, %cst_61 {dimension_numbers = #tpu.dot_dimension_numbers<[1], [0], [0], [1], [0, 0, 1, 1], [], []>} : vector<2x32xbf16>, vector<32x96xbf16>, vector<2x96xf32> -> vector<2x96xf32>
    %322 = vector.extract_strided_slice %319 {offsets = [0, 0], sizes = [2, 64], strides = [1, 1]} : vector<2x96xf32> to vector<2x64xf32>
    %323 = vector.extract_strided_slice %321 {offsets = [0, 0], sizes = [2, 64], strides = [1, 1]} : vector<2x96xf32> to vector<2x64xf32>
    %324 = arith.addf %322, %323 : vector<2x64xf32>
    %cst_62 = arith.constant 5.000000e-01 : f32
    %325 = vector.broadcast %cst_62 : f32 to vector<2x64xf32>
    %326 = arith.mulf %325, %324 : vector<2x64xf32>
    %327 = math.tanh %326 : vector<2x64xf32>
    %cst_63 = arith.constant 1.000000e+00 : f32
    %328 = vector.broadcast %cst_63 : f32 to vector<2x64xf32>
    %329 = arith.addf %327, %328 : vector<2x64xf32>
    %cst_64 = arith.constant 5.000000e-01 : f32
    %330 = vector.broadcast %cst_64 : f32 to vector<2x64xf32>
    %331 = arith.mulf %330, %329 : vector<2x64xf32>
    %332 = vector.extract_strided_slice %331 {offsets = [0, 0], sizes = [2, 32], strides = [1, 1]} : vector<2x64xf32> to vector<2x32xf32>
    %333 = vector.extract_strided_slice %331 {offsets = [0, 32], sizes = [2, 32], strides = [1, 1]} : vector<2x64xf32> to vector<2x32xf32>
    %334 = vector.extract_strided_slice %319 {offsets = [0, 64], sizes = [2, 32], strides = [1, 1]} : vector<2x96xf32> to vector<2x32xf32>
    %335 = vector.extract_strided_slice %321 {offsets = [0, 64], sizes = [2, 32], strides = [1, 1]} : vector<2x96xf32> to vector<2x32xf32>
    %336 = vector.broadcast %214 : vector<1x32xf32> to vector<2x32xf32>
    %337 = arith.addf %335, %336 : vector<2x32xf32>
    %338 = arith.mulf %332, %337 : vector<2x32xf32>
    %339 = arith.addf %334, %338 : vector<2x32xf32>
    %340 = math.tanh %339 : vector<2x32xf32>
    %341 = arith.subf %318, %340 : vector<2x32xf32>
    %342 = arith.mulf %333, %341 : vector<2x32xf32>
    %343 = arith.addf %340, %342 : vector<2x32xf32>
    %344 = vector.extract_strided_slice %218 {offsets = [10, 0], sizes = [2, 96], strides = [1, 1]} : vector<16x96xf32> to vector<2x96xf32>
    %345 = arith.truncf %343 : vector<2x32xf32> to vector<2x32xbf16>
    %cst_65 = arith.constant dense<0.000000e+00> : vector<2x96xf32>
    %346 = tpu.matmul %345, %212, %cst_65 {dimension_numbers = #tpu.dot_dimension_numbers<[1], [0], [0], [1], [0, 0, 1, 1], [], []>} : vector<2x32xbf16>, vector<32x96xbf16>, vector<2x96xf32> -> vector<2x96xf32>
    %347 = vector.extract_strided_slice %344 {offsets = [0, 0], sizes = [2, 64], strides = [1, 1]} : vector<2x96xf32> to vector<2x64xf32>
    %348 = vector.extract_strided_slice %346 {offsets = [0, 0], sizes = [2, 64], strides = [1, 1]} : vector<2x96xf32> to vector<2x64xf32>
    %349 = arith.addf %347, %348 : vector<2x64xf32>
    %cst_66 = arith.constant 5.000000e-01 : f32
    %350 = vector.broadcast %cst_66 : f32 to vector<2x64xf32>
    %351 = arith.mulf %350, %349 : vector<2x64xf32>
    %352 = math.tanh %351 : vector<2x64xf32>
    %cst_67 = arith.constant 1.000000e+00 : f32
    %353 = vector.broadcast %cst_67 : f32 to vector<2x64xf32>
    %354 = arith.addf %352, %353 : vector<2x64xf32>
    %cst_68 = arith.constant 5.000000e-01 : f32
    %355 = vector.broadcast %cst_68 : f32 to vector<2x64xf32>
    %356 = arith.mulf %355, %354 : vector<2x64xf32>
    %357 = vector.extract_strided_slice %356 {offsets = [0, 0], sizes = [2, 32], strides = [1, 1]} : vector<2x64xf32> to vector<2x32xf32>
    %358 = vector.extract_strided_slice %356 {offsets = [0, 32], sizes = [2, 32], strides = [1, 1]} : vector<2x64xf32> to vector<2x32xf32>
    %359 = vector.extract_strided_slice %344 {offsets = [0, 64], sizes = [2, 32], strides = [1, 1]} : vector<2x96xf32> to vector<2x32xf32>
    %360 = vector.extract_strided_slice %346 {offsets = [0, 64], sizes = [2, 32], strides = [1, 1]} : vector<2x96xf32> to vector<2x32xf32>
    %361 = vector.broadcast %214 : vector<1x32xf32> to vector<2x32xf32>
    %362 = arith.addf %360, %361 : vector<2x32xf32>
    %363 = arith.mulf %357, %362 : vector<2x32xf32>
    %364 = arith.addf %359, %363 : vector<2x32xf32>
    %365 = math.tanh %364 : vector<2x32xf32>
    %366 = arith.subf %343, %365 : vector<2x32xf32>
    %367 = arith.mulf %358, %366 : vector<2x32xf32>
    %368 = arith.addf %365, %367 : vector<2x32xf32>
    %369 = vector.extract_strided_slice %218 {offsets = [12, 0], sizes = [2, 96], strides = [1, 1]} : vector<16x96xf32> to vector<2x96xf32>
    %370 = arith.truncf %368 : vector<2x32xf32> to vector<2x32xbf16>
    %cst_69 = arith.constant dense<0.000000e+00> : vector<2x96xf32>
    %371 = tpu.matmul %370, %212, %cst_69 {dimension_numbers = #tpu.dot_dimension_numbers<[1], [0], [0], [1], [0, 0, 1, 1], [], []>} : vector<2x32xbf16>, vector<32x96xbf16>, vector<2x96xf32> -> vector<2x96xf32>
    %372 = vector.extract_strided_slice %369 {offsets = [0, 0], sizes = [2, 64], strides = [1, 1]} : vector<2x96xf32> to vector<2x64xf32>
    %373 = vector.extract_strided_slice %371 {offsets = [0, 0], sizes = [2, 64], strides = [1, 1]} : vector<2x96xf32> to vector<2x64xf32>
    %374 = arith.addf %372, %373 : vector<2x64xf32>
    %cst_70 = arith.constant 5.000000e-01 : f32
    %375 = vector.broadcast %cst_70 : f32 to vector<2x64xf32>
    %376 = arith.mulf %375, %374 : vector<2x64xf32>
    %377 = math.tanh %376 : vector<2x64xf32>
    %cst_71 = arith.constant 1.000000e+00 : f32
    %378 = vector.broadcast %cst_71 : f32 to vector<2x64xf32>
    %379 = arith.addf %377, %378 : vector<2x64xf32>
    %cst_72 = arith.constant 5.000000e-01 : f32
    %380 = vector.broadcast %cst_72 : f32 to vector<2x64xf32>
    %381 = arith.mulf %380, %379 : vector<2x64xf32>
    %382 = vector.extract_strided_slice %381 {offsets = [0, 0], sizes = [2, 32], strides = [1, 1]} : vector<2x64xf32> to vector<2x32xf32>
    %383 = vector.extract_strided_slice %381 {offsets = [0, 32], sizes = [2, 32], strides = [1, 1]} : vector<2x64xf32> to vector<2x32xf32>
    %384 = vector.extract_strided_slice %369 {offsets = [0, 64], sizes = [2, 32], strides = [1, 1]} : vector<2x96xf32> to vector<2x32xf32>
    %385 = vector.extract_strided_slice %371 {offsets = [0, 64], sizes = [2, 32], strides = [1, 1]} : vector<2x96xf32> to vector<2x32xf32>
    %386 = vector.broadcast %214 : vector<1x32xf32> to vector<2x32xf32>
    %387 = arith.addf %385, %386 : vector<2x32xf32>
    %388 = arith.mulf %382, %387 : vector<2x32xf32>
    %389 = arith.addf %384, %388 : vector<2x32xf32>
    %390 = math.tanh %389 : vector<2x32xf32>
    %391 = arith.subf %368, %390 : vector<2x32xf32>
    %392 = arith.mulf %383, %391 : vector<2x32xf32>
    %393 = arith.addf %390, %392 : vector<2x32xf32>
    %394 = vector.extract_strided_slice %218 {offsets = [14, 0], sizes = [2, 96], strides = [1, 1]} : vector<16x96xf32> to vector<2x96xf32>
    %395 = arith.truncf %393 : vector<2x32xf32> to vector<2x32xbf16>
    %cst_73 = arith.constant dense<0.000000e+00> : vector<2x96xf32>
    %396 = tpu.matmul %395, %212, %cst_73 {dimension_numbers = #tpu.dot_dimension_numbers<[1], [0], [0], [1], [0, 0, 1, 1], [], []>} : vector<2x32xbf16>, vector<32x96xbf16>, vector<2x96xf32> -> vector<2x96xf32>
    %397 = vector.extract_strided_slice %394 {offsets = [0, 0], sizes = [2, 64], strides = [1, 1]} : vector<2x96xf32> to vector<2x64xf32>
    %398 = vector.extract_strided_slice %396 {offsets = [0, 0], sizes = [2, 64], strides = [1, 1]} : vector<2x96xf32> to vector<2x64xf32>
    %399 = arith.addf %397, %398 : vector<2x64xf32>
    %cst_74 = arith.constant 5.000000e-01 : f32
    %400 = vector.broadcast %cst_74 : f32 to vector<2x64xf32>
    %401 = arith.mulf %400, %399 : vector<2x64xf32>
    %402 = math.tanh %401 : vector<2x64xf32>
    %cst_75 = arith.constant 1.000000e+00 : f32
    %403 = vector.broadcast %cst_75 : f32 to vector<2x64xf32>
    %404 = arith.addf %402, %403 : vector<2x64xf32>
    %cst_76 = arith.constant 5.000000e-01 : f32
    %405 = vector.broadcast %cst_76 : f32 to vector<2x64xf32>
    %406 = arith.mulf %405, %404 : vector<2x64xf32>
    %407 = vector.extract_strided_slice %406 {offsets = [0, 0], sizes = [2, 32], strides = [1, 1]} : vector<2x64xf32> to vector<2x32xf32>
    %408 = vector.extract_strided_slice %406 {offsets = [0, 32], sizes = [2, 32], strides = [1, 1]} : vector<2x64xf32> to vector<2x32xf32>
    %409 = vector.extract_strided_slice %394 {offsets = [0, 64], sizes = [2, 32], strides = [1, 1]} : vector<2x96xf32> to vector<2x32xf32>
    %410 = vector.extract_strided_slice %396 {offsets = [0, 64], sizes = [2, 32], strides = [1, 1]} : vector<2x96xf32> to vector<2x32xf32>
    %411 = vector.broadcast %214 : vector<1x32xf32> to vector<2x32xf32>
    %412 = arith.addf %410, %411 : vector<2x32xf32>
    %413 = arith.mulf %407, %412 : vector<2x32xf32>
    %414 = arith.addf %409, %413 : vector<2x32xf32>
    %415 = math.tanh %414 : vector<2x32xf32>
    %416 = arith.subf %393, %415 : vector<2x32xf32>
    %417 = arith.mulf %408, %416 : vector<2x32xf32>
    %418 = arith.addf %415, %417 : vector<2x32xf32>
    %c128 = arith.constant 128 : index
    %c0_77 = arith.constant 0 : index
    %419 = vector.load %arg1[%c128, %c0_77] : memref<256x96xbf16, #tpu.memory_space<vmem>>, vector<32x96xbf16>
    %c160 = arith.constant 160 : index
    %c0_78 = arith.constant 0 : index
    %420 = vector.load %arg1[%c160, %c0_78] : memref<256x96xbf16, #tpu.memory_space<vmem>>, vector<32x96xbf16>
    %c4 = arith.constant 4 : index
    %c0_79 = arith.constant 0 : index
    %421 = vector.load %arg2[%c4, %c0_79] : memref<8x96xf32, #tpu.memory_space<vmem>>, vector<1x96xf32>
    %c5 = arith.constant 5 : index
    %c64_80 = arith.constant 64 : index
    %422 = vector.load %arg2[%c5, %c64_80] : memref<8x96xf32, #tpu.memory_space<vmem>>, vector<1x32xf32>
    %423 = arith.truncf %418 : vector<2x32xf32> to vector<2x32xbf16>
    %cst_81 = arith.constant dense<0.000000e+00> : vector<2x96xf32>
    %424 = tpu.matmul %423, %419, %cst_81 {dimension_numbers = #tpu.dot_dimension_numbers<[1], [0], [0], [1], [0, 0, 1, 1], [], []>} : vector<2x32xbf16>, vector<32x96xbf16>, vector<2x96xf32> -> vector<2x96xf32>
    %425 = vector.broadcast %421 : vector<1x96xf32> to vector<2x96xf32>
    %426 = arith.addf %424, %425 : vector<2x96xf32>
    %427 = arith.truncf %209 : vector<2x32xf32> to vector<2x32xbf16>
    %cst_82 = arith.constant dense<0.000000e+00> : vector<2x96xf32>
    %428 = tpu.matmul %427, %420, %cst_82 {dimension_numbers = #tpu.dot_dimension_numbers<[1], [0], [0], [1], [0, 0, 1, 1], [], []>} : vector<2x32xbf16>, vector<32x96xbf16>, vector<2x96xf32> -> vector<2x96xf32>
    %429 = vector.extract_strided_slice %426 {offsets = [0, 0], sizes = [2, 64], strides = [1, 1]} : vector<2x96xf32> to vector<2x64xf32>
    %430 = vector.extract_strided_slice %428 {offsets = [0, 0], sizes = [2, 64], strides = [1, 1]} : vector<2x96xf32> to vector<2x64xf32>
    %431 = arith.addf %429, %430 : vector<2x64xf32>
    %cst_83 = arith.constant 5.000000e-01 : f32
    %432 = vector.broadcast %cst_83 : f32 to vector<2x64xf32>
    %433 = arith.mulf %432, %431 : vector<2x64xf32>
    %434 = math.tanh %433 : vector<2x64xf32>
    %cst_84 = arith.constant 1.000000e+00 : f32
    %435 = vector.broadcast %cst_84 : f32 to vector<2x64xf32>
    %436 = arith.addf %434, %435 : vector<2x64xf32>
    %cst_85 = arith.constant 5.000000e-01 : f32
    %437 = vector.broadcast %cst_85 : f32 to vector<2x64xf32>
    %438 = arith.mulf %437, %436 : vector<2x64xf32>
    %439 = vector.extract_strided_slice %438 {offsets = [0, 0], sizes = [2, 32], strides = [1, 1]} : vector<2x64xf32> to vector<2x32xf32>
    %440 = vector.extract_strided_slice %438 {offsets = [0, 32], sizes = [2, 32], strides = [1, 1]} : vector<2x64xf32> to vector<2x32xf32>
    %441 = vector.extract_strided_slice %426 {offsets = [0, 64], sizes = [2, 32], strides = [1, 1]} : vector<2x96xf32> to vector<2x32xf32>
    %442 = vector.extract_strided_slice %428 {offsets = [0, 64], sizes = [2, 32], strides = [1, 1]} : vector<2x96xf32> to vector<2x32xf32>
    %443 = vector.broadcast %422 : vector<1x32xf32> to vector<2x32xf32>
    %444 = arith.addf %442, %443 : vector<2x32xf32>
    %445 = arith.mulf %439, %444 : vector<2x32xf32>
    %446 = arith.addf %441, %445 : vector<2x32xf32>
    %447 = math.tanh %446 : vector<2x32xf32>
    %448 = arith.subf %209, %447 : vector<2x32xf32>
    %449 = arith.mulf %440, %448 : vector<2x32xf32>
    %450 = arith.addf %447, %449 : vector<2x32xf32>
    %451 = arith.truncf %450 : vector<2x32xf32> to vector<2x32xbf16>
    %cst_86 = arith.constant dense<0.000000e+00> : vector<2x96xf32>
    %452 = tpu.matmul %451, %420, %cst_86 {dimension_numbers = #tpu.dot_dimension_numbers<[1], [0], [0], [1], [0, 0, 1, 1], [], []>} : vector<2x32xbf16>, vector<32x96xbf16>, vector<2x96xf32> -> vector<2x96xf32>
    %453 = vector.extract_strided_slice %426 {offsets = [0, 0], sizes = [2, 64], strides = [1, 1]} : vector<2x96xf32> to vector<2x64xf32>
    %454 = vector.extract_strided_slice %452 {offsets = [0, 0], sizes = [2, 64], strides = [1, 1]} : vector<2x96xf32> to vector<2x64xf32>
    %455 = arith.addf %453, %454 : vector<2x64xf32>
    %cst_87 = arith.constant 5.000000e-01 : f32
    %456 = vector.broadcast %cst_87 : f32 to vector<2x64xf32>
    %457 = arith.mulf %456, %455 : vector<2x64xf32>
    %458 = math.tanh %457 : vector<2x64xf32>
    %cst_88 = arith.constant 1.000000e+00 : f32
    %459 = vector.broadcast %cst_88 : f32 to vector<2x64xf32>
    %460 = arith.addf %458, %459 : vector<2x64xf32>
    %cst_89 = arith.constant 5.000000e-01 : f32
    %461 = vector.broadcast %cst_89 : f32 to vector<2x64xf32>
    %462 = arith.mulf %461, %460 : vector<2x64xf32>
    %463 = vector.extract_strided_slice %462 {offsets = [0, 0], sizes = [2, 32], strides = [1, 1]} : vector<2x64xf32> to vector<2x32xf32>
    %464 = vector.extract_strided_slice %462 {offsets = [0, 32], sizes = [2, 32], strides = [1, 1]} : vector<2x64xf32> to vector<2x32xf32>
    %465 = vector.extract_strided_slice %426 {offsets = [0, 64], sizes = [2, 32], strides = [1, 1]} : vector<2x96xf32> to vector<2x32xf32>
    %466 = vector.extract_strided_slice %452 {offsets = [0, 64], sizes = [2, 32], strides = [1, 1]} : vector<2x96xf32> to vector<2x32xf32>
    %467 = vector.broadcast %422 : vector<1x32xf32> to vector<2x32xf32>
    %468 = arith.addf %466, %467 : vector<2x32xf32>
    %469 = arith.mulf %463, %468 : vector<2x32xf32>
    %470 = arith.addf %465, %469 : vector<2x32xf32>
    %471 = math.tanh %470 : vector<2x32xf32>
    %472 = arith.subf %450, %471 : vector<2x32xf32>
    %473 = arith.mulf %464, %472 : vector<2x32xf32>
    %474 = arith.addf %471, %473 : vector<2x32xf32>
    %475 = arith.truncf %474 : vector<2x32xf32> to vector<2x32xbf16>
    %cst_90 = arith.constant dense<0.000000e+00> : vector<2x96xf32>
    %476 = tpu.matmul %475, %420, %cst_90 {dimension_numbers = #tpu.dot_dimension_numbers<[1], [0], [0], [1], [0, 0, 1, 1], [], []>} : vector<2x32xbf16>, vector<32x96xbf16>, vector<2x96xf32> -> vector<2x96xf32>
    %477 = vector.extract_strided_slice %426 {offsets = [0, 0], sizes = [2, 64], strides = [1, 1]} : vector<2x96xf32> to vector<2x64xf32>
    %478 = vector.extract_strided_slice %476 {offsets = [0, 0], sizes = [2, 64], strides = [1, 1]} : vector<2x96xf32> to vector<2x64xf32>
    %479 = arith.addf %477, %478 : vector<2x64xf32>
    %cst_91 = arith.constant 5.000000e-01 : f32
    %480 = vector.broadcast %cst_91 : f32 to vector<2x64xf32>
    %481 = arith.mulf %480, %479 : vector<2x64xf32>
    %482 = math.tanh %481 : vector<2x64xf32>
    %cst_92 = arith.constant 1.000000e+00 : f32
    %483 = vector.broadcast %cst_92 : f32 to vector<2x64xf32>
    %484 = arith.addf %482, %483 : vector<2x64xf32>
    %cst_93 = arith.constant 5.000000e-01 : f32
    %485 = vector.broadcast %cst_93 : f32 to vector<2x64xf32>
    %486 = arith.mulf %485, %484 : vector<2x64xf32>
    %487 = vector.extract_strided_slice %486 {offsets = [0, 0], sizes = [2, 32], strides = [1, 1]} : vector<2x64xf32> to vector<2x32xf32>
    %488 = vector.extract_strided_slice %486 {offsets = [0, 32], sizes = [2, 32], strides = [1, 1]} : vector<2x64xf32> to vector<2x32xf32>
    %489 = vector.extract_strided_slice %426 {offsets = [0, 64], sizes = [2, 32], strides = [1, 1]} : vector<2x96xf32> to vector<2x32xf32>
    %490 = vector.extract_strided_slice %476 {offsets = [0, 64], sizes = [2, 32], strides = [1, 1]} : vector<2x96xf32> to vector<2x32xf32>
    %491 = vector.broadcast %422 : vector<1x32xf32> to vector<2x32xf32>
    %492 = arith.addf %490, %491 : vector<2x32xf32>
    %493 = arith.mulf %487, %492 : vector<2x32xf32>
    %494 = arith.addf %489, %493 : vector<2x32xf32>
    %495 = math.tanh %494 : vector<2x32xf32>
    %496 = arith.subf %474, %495 : vector<2x32xf32>
    %497 = arith.mulf %488, %496 : vector<2x32xf32>
    %498 = arith.addf %495, %497 : vector<2x32xf32>
    %499 = arith.truncf %498 : vector<2x32xf32> to vector<2x32xbf16>
    %cst_94 = arith.constant dense<0.000000e+00> : vector<2x96xf32>
    %500 = tpu.matmul %499, %420, %cst_94 {dimension_numbers = #tpu.dot_dimension_numbers<[1], [0], [0], [1], [0, 0, 1, 1], [], []>} : vector<2x32xbf16>, vector<32x96xbf16>, vector<2x96xf32> -> vector<2x96xf32>
    %501 = vector.extract_strided_slice %426 {offsets = [0, 0], sizes = [2, 64], strides = [1, 1]} : vector<2x96xf32> to vector<2x64xf32>
    %502 = vector.extract_strided_slice %500 {offsets = [0, 0], sizes = [2, 64], strides = [1, 1]} : vector<2x96xf32> to vector<2x64xf32>
    %503 = arith.addf %501, %502 : vector<2x64xf32>
    %cst_95 = arith.constant 5.000000e-01 : f32
    %504 = vector.broadcast %cst_95 : f32 to vector<2x64xf32>
    %505 = arith.mulf %504, %503 : vector<2x64xf32>
    %506 = math.tanh %505 : vector<2x64xf32>
    %cst_96 = arith.constant 1.000000e+00 : f32
    %507 = vector.broadcast %cst_96 : f32 to vector<2x64xf32>
    %508 = arith.addf %506, %507 : vector<2x64xf32>
    %cst_97 = arith.constant 5.000000e-01 : f32
    %509 = vector.broadcast %cst_97 : f32 to vector<2x64xf32>
    %510 = arith.mulf %509, %508 : vector<2x64xf32>
    %511 = vector.extract_strided_slice %510 {offsets = [0, 0], sizes = [2, 32], strides = [1, 1]} : vector<2x64xf32> to vector<2x32xf32>
    %512 = vector.extract_strided_slice %510 {offsets = [0, 32], sizes = [2, 32], strides = [1, 1]} : vector<2x64xf32> to vector<2x32xf32>
    %513 = vector.extract_strided_slice %426 {offsets = [0, 64], sizes = [2, 32], strides = [1, 1]} : vector<2x96xf32> to vector<2x32xf32>
    %514 = vector.extract_strided_slice %500 {offsets = [0, 64], sizes = [2, 32], strides = [1, 1]} : vector<2x96xf32> to vector<2x32xf32>
    %515 = vector.broadcast %422 : vector<1x32xf32> to vector<2x32xf32>
    %516 = arith.addf %514, %515 : vector<2x32xf32>
    %517 = arith.mulf %511, %516 : vector<2x32xf32>
    %518 = arith.addf %513, %517 : vector<2x32xf32>
    %519 = math.tanh %518 : vector<2x32xf32>
    %520 = arith.subf %498, %519 : vector<2x32xf32>
    %521 = arith.mulf %512, %520 : vector<2x32xf32>
    %522 = arith.addf %519, %521 : vector<2x32xf32>
    %523 = arith.truncf %522 : vector<2x32xf32> to vector<2x32xbf16>
    %cst_98 = arith.constant dense<0.000000e+00> : vector<2x96xf32>
    %524 = tpu.matmul %523, %420, %cst_98 {dimension_numbers = #tpu.dot_dimension_numbers<[1], [0], [0], [1], [0, 0, 1, 1], [], []>} : vector<2x32xbf16>, vector<32x96xbf16>, vector<2x96xf32> -> vector<2x96xf32>
    %525 = vector.extract_strided_slice %426 {offsets = [0, 0], sizes = [2, 64], strides = [1, 1]} : vector<2x96xf32> to vector<2x64xf32>
    %526 = vector.extract_strided_slice %524 {offsets = [0, 0], sizes = [2, 64], strides = [1, 1]} : vector<2x96xf32> to vector<2x64xf32>
    %527 = arith.addf %525, %526 : vector<2x64xf32>
    %cst_99 = arith.constant 5.000000e-01 : f32
    %528 = vector.broadcast %cst_99 : f32 to vector<2x64xf32>
    %529 = arith.mulf %528, %527 : vector<2x64xf32>
    %530 = math.tanh %529 : vector<2x64xf32>
    %cst_100 = arith.constant 1.000000e+00 : f32
    %531 = vector.broadcast %cst_100 : f32 to vector<2x64xf32>
    %532 = arith.addf %530, %531 : vector<2x64xf32>
    %cst_101 = arith.constant 5.000000e-01 : f32
    %533 = vector.broadcast %cst_101 : f32 to vector<2x64xf32>
    %534 = arith.mulf %533, %532 : vector<2x64xf32>
    %535 = vector.extract_strided_slice %534 {offsets = [0, 0], sizes = [2, 32], strides = [1, 1]} : vector<2x64xf32> to vector<2x32xf32>
    %536 = vector.extract_strided_slice %534 {offsets = [0, 32], sizes = [2, 32], strides = [1, 1]} : vector<2x64xf32> to vector<2x32xf32>
    %537 = vector.extract_strided_slice %426 {offsets = [0, 64], sizes = [2, 32], strides = [1, 1]} : vector<2x96xf32> to vector<2x32xf32>
    %538 = vector.extract_strided_slice %524 {offsets = [0, 64], sizes = [2, 32], strides = [1, 1]} : vector<2x96xf32> to vector<2x32xf32>
    %539 = vector.broadcast %422 : vector<1x32xf32> to vector<2x32xf32>
    %540 = arith.addf %538, %539 : vector<2x32xf32>
    %541 = arith.mulf %535, %540 : vector<2x32xf32>
    %542 = arith.addf %537, %541 : vector<2x32xf32>
    %543 = math.tanh %542 : vector<2x32xf32>
    %544 = arith.subf %522, %543 : vector<2x32xf32>
    %545 = arith.mulf %536, %544 : vector<2x32xf32>
    %546 = arith.addf %543, %545 : vector<2x32xf32>
    %547 = arith.truncf %546 : vector<2x32xf32> to vector<2x32xbf16>
    %cst_102 = arith.constant dense<0.000000e+00> : vector<2x96xf32>
    %548 = tpu.matmul %547, %420, %cst_102 {dimension_numbers = #tpu.dot_dimension_numbers<[1], [0], [0], [1], [0, 0, 1, 1], [], []>} : vector<2x32xbf16>, vector<32x96xbf16>, vector<2x96xf32> -> vector<2x96xf32>
    %549 = vector.extract_strided_slice %426 {offsets = [0, 0], sizes = [2, 64], strides = [1, 1]} : vector<2x96xf32> to vector<2x64xf32>
    %550 = vector.extract_strided_slice %548 {offsets = [0, 0], sizes = [2, 64], strides = [1, 1]} : vector<2x96xf32> to vector<2x64xf32>
    %551 = arith.addf %549, %550 : vector<2x64xf32>
    %cst_103 = arith.constant 5.000000e-01 : f32
    %552 = vector.broadcast %cst_103 : f32 to vector<2x64xf32>
    %553 = arith.mulf %552, %551 : vector<2x64xf32>
    %554 = math.tanh %553 : vector<2x64xf32>
    %cst_104 = arith.constant 1.000000e+00 : f32
    %555 = vector.broadcast %cst_104 : f32 to vector<2x64xf32>
    %556 = arith.addf %554, %555 : vector<2x64xf32>
    %cst_105 = arith.constant 5.000000e-01 : f32
    %557 = vector.broadcast %cst_105 : f32 to vector<2x64xf32>
    %558 = arith.mulf %557, %556 : vector<2x64xf32>
    %559 = vector.extract_strided_slice %558 {offsets = [0, 0], sizes = [2, 32], strides = [1, 1]} : vector<2x64xf32> to vector<2x32xf32>
    %560 = vector.extract_strided_slice %558 {offsets = [0, 32], sizes = [2, 32], strides = [1, 1]} : vector<2x64xf32> to vector<2x32xf32>
    %561 = vector.extract_strided_slice %426 {offsets = [0, 64], sizes = [2, 32], strides = [1, 1]} : vector<2x96xf32> to vector<2x32xf32>
    %562 = vector.extract_strided_slice %548 {offsets = [0, 64], sizes = [2, 32], strides = [1, 1]} : vector<2x96xf32> to vector<2x32xf32>
    %563 = vector.broadcast %422 : vector<1x32xf32> to vector<2x32xf32>
    %564 = arith.addf %562, %563 : vector<2x32xf32>
    %565 = arith.mulf %559, %564 : vector<2x32xf32>
    %566 = arith.addf %561, %565 : vector<2x32xf32>
    %567 = math.tanh %566 : vector<2x32xf32>
    %568 = arith.subf %546, %567 : vector<2x32xf32>
    %569 = arith.mulf %560, %568 : vector<2x32xf32>
    %570 = arith.addf %567, %569 : vector<2x32xf32>
    %571 = arith.truncf %570 : vector<2x32xf32> to vector<2x32xbf16>
    %cst_106 = arith.constant dense<0.000000e+00> : vector<2x96xf32>
    %572 = tpu.matmul %571, %420, %cst_106 {dimension_numbers = #tpu.dot_dimension_numbers<[1], [0], [0], [1], [0, 0, 1, 1], [], []>} : vector<2x32xbf16>, vector<32x96xbf16>, vector<2x96xf32> -> vector<2x96xf32>
    %573 = vector.extract_strided_slice %426 {offsets = [0, 0], sizes = [2, 64], strides = [1, 1]} : vector<2x96xf32> to vector<2x64xf32>
    %574 = vector.extract_strided_slice %572 {offsets = [0, 0], sizes = [2, 64], strides = [1, 1]} : vector<2x96xf32> to vector<2x64xf32>
    %575 = arith.addf %573, %574 : vector<2x64xf32>
    %cst_107 = arith.constant 5.000000e-01 : f32
    %576 = vector.broadcast %cst_107 : f32 to vector<2x64xf32>
    %577 = arith.mulf %576, %575 : vector<2x64xf32>
    %578 = math.tanh %577 : vector<2x64xf32>
    %cst_108 = arith.constant 1.000000e+00 : f32
    %579 = vector.broadcast %cst_108 : f32 to vector<2x64xf32>
    %580 = arith.addf %578, %579 : vector<2x64xf32>
    %cst_109 = arith.constant 5.000000e-01 : f32
    %581 = vector.broadcast %cst_109 : f32 to vector<2x64xf32>
    %582 = arith.mulf %581, %580 : vector<2x64xf32>
    %583 = vector.extract_strided_slice %582 {offsets = [0, 0], sizes = [2, 32], strides = [1, 1]} : vector<2x64xf32> to vector<2x32xf32>
    %584 = vector.extract_strided_slice %582 {offsets = [0, 32], sizes = [2, 32], strides = [1, 1]} : vector<2x64xf32> to vector<2x32xf32>
    %585 = vector.extract_strided_slice %426 {offsets = [0, 64], sizes = [2, 32], strides = [1, 1]} : vector<2x96xf32> to vector<2x32xf32>
    %586 = vector.extract_strided_slice %572 {offsets = [0, 64], sizes = [2, 32], strides = [1, 1]} : vector<2x96xf32> to vector<2x32xf32>
    %587 = vector.broadcast %422 : vector<1x32xf32> to vector<2x32xf32>
    %588 = arith.addf %586, %587 : vector<2x32xf32>
    %589 = arith.mulf %583, %588 : vector<2x32xf32>
    %590 = arith.addf %585, %589 : vector<2x32xf32>
    %591 = math.tanh %590 : vector<2x32xf32>
    %592 = arith.subf %570, %591 : vector<2x32xf32>
    %593 = arith.mulf %584, %592 : vector<2x32xf32>
    %594 = arith.addf %591, %593 : vector<2x32xf32>
    %595 = arith.truncf %594 : vector<2x32xf32> to vector<2x32xbf16>
    %cst_110 = arith.constant dense<0.000000e+00> : vector<2x96xf32>
    %596 = tpu.matmul %595, %420, %cst_110 {dimension_numbers = #tpu.dot_dimension_numbers<[1], [0], [0], [1], [0, 0, 1, 1], [], []>} : vector<2x32xbf16>, vector<32x96xbf16>, vector<2x96xf32> -> vector<2x96xf32>
    %597 = vector.extract_strided_slice %426 {offsets = [0, 0], sizes = [2, 64], strides = [1, 1]} : vector<2x96xf32> to vector<2x64xf32>
    %598 = vector.extract_strided_slice %596 {offsets = [0, 0], sizes = [2, 64], strides = [1, 1]} : vector<2x96xf32> to vector<2x64xf32>
    %599 = arith.addf %597, %598 : vector<2x64xf32>
    %cst_111 = arith.constant 5.000000e-01 : f32
    %600 = vector.broadcast %cst_111 : f32 to vector<2x64xf32>
    %601 = arith.mulf %600, %599 : vector<2x64xf32>
    %602 = math.tanh %601 : vector<2x64xf32>
    %cst_112 = arith.constant 1.000000e+00 : f32
    %603 = vector.broadcast %cst_112 : f32 to vector<2x64xf32>
    %604 = arith.addf %602, %603 : vector<2x64xf32>
    %cst_113 = arith.constant 5.000000e-01 : f32
    %605 = vector.broadcast %cst_113 : f32 to vector<2x64xf32>
    %606 = arith.mulf %605, %604 : vector<2x64xf32>
    %607 = vector.extract_strided_slice %606 {offsets = [0, 0], sizes = [2, 32], strides = [1, 1]} : vector<2x64xf32> to vector<2x32xf32>
    %608 = vector.extract_strided_slice %606 {offsets = [0, 32], sizes = [2, 32], strides = [1, 1]} : vector<2x64xf32> to vector<2x32xf32>
    %609 = vector.extract_strided_slice %426 {offsets = [0, 64], sizes = [2, 32], strides = [1, 1]} : vector<2x96xf32> to vector<2x32xf32>
    %610 = vector.extract_strided_slice %596 {offsets = [0, 64], sizes = [2, 32], strides = [1, 1]} : vector<2x96xf32> to vector<2x32xf32>
    %611 = vector.broadcast %422 : vector<1x32xf32> to vector<2x32xf32>
    %612 = arith.addf %610, %611 : vector<2x32xf32>
    %613 = arith.mulf %607, %612 : vector<2x32xf32>
    %614 = arith.addf %609, %613 : vector<2x32xf32>
    %615 = math.tanh %614 : vector<2x32xf32>
    %616 = arith.subf %594, %615 : vector<2x32xf32>
    %617 = arith.mulf %608, %616 : vector<2x32xf32>
    %618 = arith.addf %615, %617 : vector<2x32xf32>
    %619 = tpu.concatenate %450, %474, %498, %522, %546, %570, %594, %618 in 0 : vector<2x32xf32>, vector<2x32xf32>, vector<2x32xf32>, vector<2x32xf32>, vector<2x32xf32>, vector<2x32xf32>, vector<2x32xf32>, vector<2x32xf32> -> vector<16x32xf32>
    %c192 = arith.constant 192 : index
    %c0_114 = arith.constant 0 : index
    %620 = vector.load %arg1[%c192, %c0_114] : memref<256x96xbf16, #tpu.memory_space<vmem>>, vector<32x96xbf16>
    %c224 = arith.constant 224 : index
    %c0_115 = arith.constant 0 : index
    %621 = vector.load %arg1[%c224, %c0_115] : memref<256x96xbf16, #tpu.memory_space<vmem>>, vector<32x96xbf16>
    %c6 = arith.constant 6 : index
    %c0_116 = arith.constant 0 : index
    %622 = vector.load %arg2[%c6, %c0_116] : memref<8x96xf32, #tpu.memory_space<vmem>>, vector<1x96xf32>
    %c7 = arith.constant 7 : index
    %c64_117 = arith.constant 64 : index
    %623 = vector.load %arg2[%c7, %c64_117] : memref<8x96xf32, #tpu.memory_space<vmem>>, vector<1x32xf32>
    %624 = arith.truncf %619 : vector<16x32xf32> to vector<16x32xbf16>
    %cst_118 = arith.constant dense<0.000000e+00> : vector<16x96xf32>
    %625 = tpu.matmul %624, %620, %cst_118 {dimension_numbers = #tpu.dot_dimension_numbers<[1], [0], [0], [1], [0, 0, 1, 1], [], []>} : vector<16x32xbf16>, vector<32x96xbf16>, vector<16x96xf32> -> vector<16x96xf32>
    %626 = vector.broadcast %622 : vector<1x96xf32> to vector<16x96xf32>
    %627 = arith.addf %625, %626 : vector<16x96xf32>
    %628 = vector.extract_strided_slice %627 {offsets = [0, 0], sizes = [2, 96], strides = [1, 1]} : vector<16x96xf32> to vector<2x96xf32>
    %629 = arith.truncf %418 : vector<2x32xf32> to vector<2x32xbf16>
    %cst_119 = arith.constant dense<0.000000e+00> : vector<2x96xf32>
    %630 = tpu.matmul %629, %621, %cst_119 {dimension_numbers = #tpu.dot_dimension_numbers<[1], [0], [0], [1], [0, 0, 1, 1], [], []>} : vector<2x32xbf16>, vector<32x96xbf16>, vector<2x96xf32> -> vector<2x96xf32>
    %631 = vector.extract_strided_slice %628 {offsets = [0, 0], sizes = [2, 64], strides = [1, 1]} : vector<2x96xf32> to vector<2x64xf32>
    %632 = vector.extract_strided_slice %630 {offsets = [0, 0], sizes = [2, 64], strides = [1, 1]} : vector<2x96xf32> to vector<2x64xf32>
    %633 = arith.addf %631, %632 : vector<2x64xf32>
    %cst_120 = arith.constant 5.000000e-01 : f32
    %634 = vector.broadcast %cst_120 : f32 to vector<2x64xf32>
    %635 = arith.mulf %634, %633 : vector<2x64xf32>
    %636 = math.tanh %635 : vector<2x64xf32>
    %cst_121 = arith.constant 1.000000e+00 : f32
    %637 = vector.broadcast %cst_121 : f32 to vector<2x64xf32>
    %638 = arith.addf %636, %637 : vector<2x64xf32>
    %cst_122 = arith.constant 5.000000e-01 : f32
    %639 = vector.broadcast %cst_122 : f32 to vector<2x64xf32>
    %640 = arith.mulf %639, %638 : vector<2x64xf32>
    %641 = vector.extract_strided_slice %640 {offsets = [0, 0], sizes = [2, 32], strides = [1, 1]} : vector<2x64xf32> to vector<2x32xf32>
    %642 = vector.extract_strided_slice %640 {offsets = [0, 32], sizes = [2, 32], strides = [1, 1]} : vector<2x64xf32> to vector<2x32xf32>
    %643 = vector.extract_strided_slice %628 {offsets = [0, 64], sizes = [2, 32], strides = [1, 1]} : vector<2x96xf32> to vector<2x32xf32>
    %644 = vector.extract_strided_slice %630 {offsets = [0, 64], sizes = [2, 32], strides = [1, 1]} : vector<2x96xf32> to vector<2x32xf32>
    %645 = vector.broadcast %623 : vector<1x32xf32> to vector<2x32xf32>
    %646 = arith.addf %644, %645 : vector<2x32xf32>
    %647 = arith.mulf %641, %646 : vector<2x32xf32>
    %648 = arith.addf %643, %647 : vector<2x32xf32>
    %649 = math.tanh %648 : vector<2x32xf32>
    %650 = arith.subf %418, %649 : vector<2x32xf32>
    %651 = arith.mulf %642, %650 : vector<2x32xf32>
    %652 = arith.addf %649, %651 : vector<2x32xf32>
    %653 = vector.extract_strided_slice %627 {offsets = [2, 0], sizes = [2, 96], strides = [1, 1]} : vector<16x96xf32> to vector<2x96xf32>
    %654 = arith.truncf %652 : vector<2x32xf32> to vector<2x32xbf16>
    %cst_123 = arith.constant dense<0.000000e+00> : vector<2x96xf32>
    %655 = tpu.matmul %654, %621, %cst_123 {dimension_numbers = #tpu.dot_dimension_numbers<[1], [0], [0], [1], [0, 0, 1, 1], [], []>} : vector<2x32xbf16>, vector<32x96xbf16>, vector<2x96xf32> -> vector<2x96xf32>
    %656 = vector.extract_strided_slice %653 {offsets = [0, 0], sizes = [2, 64], strides = [1, 1]} : vector<2x96xf32> to vector<2x64xf32>
    %657 = vector.extract_strided_slice %655 {offsets = [0, 0], sizes = [2, 64], strides = [1, 1]} : vector<2x96xf32> to vector<2x64xf32>
    %658 = arith.addf %656, %657 : vector<2x64xf32>
    %cst_124 = arith.constant 5.000000e-01 : f32
    %659 = vector.broadcast %cst_124 : f32 to vector<2x64xf32>
    %660 = arith.mulf %659, %658 : vector<2x64xf32>
    %661 = math.tanh %660 : vector<2x64xf32>
    %cst_125 = arith.constant 1.000000e+00 : f32
    %662 = vector.broadcast %cst_125 : f32 to vector<2x64xf32>
    %663 = arith.addf %661, %662 : vector<2x64xf32>
    %cst_126 = arith.constant 5.000000e-01 : f32
    %664 = vector.broadcast %cst_126 : f32 to vector<2x64xf32>
    %665 = arith.mulf %664, %663 : vector<2x64xf32>
    %666 = vector.extract_strided_slice %665 {offsets = [0, 0], sizes = [2, 32], strides = [1, 1]} : vector<2x64xf32> to vector<2x32xf32>
    %667 = vector.extract_strided_slice %665 {offsets = [0, 32], sizes = [2, 32], strides = [1, 1]} : vector<2x64xf32> to vector<2x32xf32>
    %668 = vector.extract_strided_slice %653 {offsets = [0, 64], sizes = [2, 32], strides = [1, 1]} : vector<2x96xf32> to vector<2x32xf32>
    %669 = vector.extract_strided_slice %655 {offsets = [0, 64], sizes = [2, 32], strides = [1, 1]} : vector<2x96xf32> to vector<2x32xf32>
    %670 = vector.broadcast %623 : vector<1x32xf32> to vector<2x32xf32>
    %671 = arith.addf %669, %670 : vector<2x32xf32>
    %672 = arith.mulf %666, %671 : vector<2x32xf32>
    %673 = arith.addf %668, %672 : vector<2x32xf32>
    %674 = math.tanh %673 : vector<2x32xf32>
    %675 = arith.subf %652, %674 : vector<2x32xf32>
    %676 = arith.mulf %667, %675 : vector<2x32xf32>
    %677 = arith.addf %674, %676 : vector<2x32xf32>
    %678 = vector.extract_strided_slice %627 {offsets = [4, 0], sizes = [2, 96], strides = [1, 1]} : vector<16x96xf32> to vector<2x96xf32>
    %679 = arith.truncf %677 : vector<2x32xf32> to vector<2x32xbf16>
    %cst_127 = arith.constant dense<0.000000e+00> : vector<2x96xf32>
    %680 = tpu.matmul %679, %621, %cst_127 {dimension_numbers = #tpu.dot_dimension_numbers<[1], [0], [0], [1], [0, 0, 1, 1], [], []>} : vector<2x32xbf16>, vector<32x96xbf16>, vector<2x96xf32> -> vector<2x96xf32>
    %681 = vector.extract_strided_slice %678 {offsets = [0, 0], sizes = [2, 64], strides = [1, 1]} : vector<2x96xf32> to vector<2x64xf32>
    %682 = vector.extract_strided_slice %680 {offsets = [0, 0], sizes = [2, 64], strides = [1, 1]} : vector<2x96xf32> to vector<2x64xf32>
    %683 = arith.addf %681, %682 : vector<2x64xf32>
    %cst_128 = arith.constant 5.000000e-01 : f32
    %684 = vector.broadcast %cst_128 : f32 to vector<2x64xf32>
    %685 = arith.mulf %684, %683 : vector<2x64xf32>
    %686 = math.tanh %685 : vector<2x64xf32>
    %cst_129 = arith.constant 1.000000e+00 : f32
    %687 = vector.broadcast %cst_129 : f32 to vector<2x64xf32>
    %688 = arith.addf %686, %687 : vector<2x64xf32>
    %cst_130 = arith.constant 5.000000e-01 : f32
    %689 = vector.broadcast %cst_130 : f32 to vector<2x64xf32>
    %690 = arith.mulf %689, %688 : vector<2x64xf32>
    %691 = vector.extract_strided_slice %690 {offsets = [0, 0], sizes = [2, 32], strides = [1, 1]} : vector<2x64xf32> to vector<2x32xf32>
    %692 = vector.extract_strided_slice %690 {offsets = [0, 32], sizes = [2, 32], strides = [1, 1]} : vector<2x64xf32> to vector<2x32xf32>
    %693 = vector.extract_strided_slice %678 {offsets = [0, 64], sizes = [2, 32], strides = [1, 1]} : vector<2x96xf32> to vector<2x32xf32>
    %694 = vector.extract_strided_slice %680 {offsets = [0, 64], sizes = [2, 32], strides = [1, 1]} : vector<2x96xf32> to vector<2x32xf32>
    %695 = vector.broadcast %623 : vector<1x32xf32> to vector<2x32xf32>
    %696 = arith.addf %694, %695 : vector<2x32xf32>
    %697 = arith.mulf %691, %696 : vector<2x32xf32>
    %698 = arith.addf %693, %697 : vector<2x32xf32>
    %699 = math.tanh %698 : vector<2x32xf32>
    %700 = arith.subf %677, %699 : vector<2x32xf32>
    %701 = arith.mulf %692, %700 : vector<2x32xf32>
    %702 = arith.addf %699, %701 : vector<2x32xf32>
    %703 = vector.extract_strided_slice %627 {offsets = [6, 0], sizes = [2, 96], strides = [1, 1]} : vector<16x96xf32> to vector<2x96xf32>
    %704 = arith.truncf %702 : vector<2x32xf32> to vector<2x32xbf16>
    %cst_131 = arith.constant dense<0.000000e+00> : vector<2x96xf32>
    %705 = tpu.matmul %704, %621, %cst_131 {dimension_numbers = #tpu.dot_dimension_numbers<[1], [0], [0], [1], [0, 0, 1, 1], [], []>} : vector<2x32xbf16>, vector<32x96xbf16>, vector<2x96xf32> -> vector<2x96xf32>
    %706 = vector.extract_strided_slice %703 {offsets = [0, 0], sizes = [2, 64], strides = [1, 1]} : vector<2x96xf32> to vector<2x64xf32>
    %707 = vector.extract_strided_slice %705 {offsets = [0, 0], sizes = [2, 64], strides = [1, 1]} : vector<2x96xf32> to vector<2x64xf32>
    %708 = arith.addf %706, %707 : vector<2x64xf32>
    %cst_132 = arith.constant 5.000000e-01 : f32
    %709 = vector.broadcast %cst_132 : f32 to vector<2x64xf32>
    %710 = arith.mulf %709, %708 : vector<2x64xf32>
    %711 = math.tanh %710 : vector<2x64xf32>
    %cst_133 = arith.constant 1.000000e+00 : f32
    %712 = vector.broadcast %cst_133 : f32 to vector<2x64xf32>
    %713 = arith.addf %711, %712 : vector<2x64xf32>
    %cst_134 = arith.constant 5.000000e-01 : f32
    %714 = vector.broadcast %cst_134 : f32 to vector<2x64xf32>
    %715 = arith.mulf %714, %713 : vector<2x64xf32>
    %716 = vector.extract_strided_slice %715 {offsets = [0, 0], sizes = [2, 32], strides = [1, 1]} : vector<2x64xf32> to vector<2x32xf32>
    %717 = vector.extract_strided_slice %715 {offsets = [0, 32], sizes = [2, 32], strides = [1, 1]} : vector<2x64xf32> to vector<2x32xf32>
    %718 = vector.extract_strided_slice %703 {offsets = [0, 64], sizes = [2, 32], strides = [1, 1]} : vector<2x96xf32> to vector<2x32xf32>
    %719 = vector.extract_strided_slice %705 {offsets = [0, 64], sizes = [2, 32], strides = [1, 1]} : vector<2x96xf32> to vector<2x32xf32>
    %720 = vector.broadcast %623 : vector<1x32xf32> to vector<2x32xf32>
    %721 = arith.addf %719, %720 : vector<2x32xf32>
    %722 = arith.mulf %716, %721 : vector<2x32xf32>
    %723 = arith.addf %718, %722 : vector<2x32xf32>
    %724 = math.tanh %723 : vector<2x32xf32>
    %725 = arith.subf %702, %724 : vector<2x32xf32>
    %726 = arith.mulf %717, %725 : vector<2x32xf32>
    %727 = arith.addf %724, %726 : vector<2x32xf32>
    %728 = vector.extract_strided_slice %627 {offsets = [8, 0], sizes = [2, 96], strides = [1, 1]} : vector<16x96xf32> to vector<2x96xf32>
    %729 = arith.truncf %727 : vector<2x32xf32> to vector<2x32xbf16>
    %cst_135 = arith.constant dense<0.000000e+00> : vector<2x96xf32>
    %730 = tpu.matmul %729, %621, %cst_135 {dimension_numbers = #tpu.dot_dimension_numbers<[1], [0], [0], [1], [0, 0, 1, 1], [], []>} : vector<2x32xbf16>, vector<32x96xbf16>, vector<2x96xf32> -> vector<2x96xf32>
    %731 = vector.extract_strided_slice %728 {offsets = [0, 0], sizes = [2, 64], strides = [1, 1]} : vector<2x96xf32> to vector<2x64xf32>
    %732 = vector.extract_strided_slice %730 {offsets = [0, 0], sizes = [2, 64], strides = [1, 1]} : vector<2x96xf32> to vector<2x64xf32>
    %733 = arith.addf %731, %732 : vector<2x64xf32>
    %cst_136 = arith.constant 5.000000e-01 : f32
    %734 = vector.broadcast %cst_136 : f32 to vector<2x64xf32>
    %735 = arith.mulf %734, %733 : vector<2x64xf32>
    %736 = math.tanh %735 : vector<2x64xf32>
    %cst_137 = arith.constant 1.000000e+00 : f32
    %737 = vector.broadcast %cst_137 : f32 to vector<2x64xf32>
    %738 = arith.addf %736, %737 : vector<2x64xf32>
    %cst_138 = arith.constant 5.000000e-01 : f32
    %739 = vector.broadcast %cst_138 : f32 to vector<2x64xf32>
    %740 = arith.mulf %739, %738 : vector<2x64xf32>
    %741 = vector.extract_strided_slice %740 {offsets = [0, 0], sizes = [2, 32], strides = [1, 1]} : vector<2x64xf32> to vector<2x32xf32>
    %742 = vector.extract_strided_slice %740 {offsets = [0, 32], sizes = [2, 32], strides = [1, 1]} : vector<2x64xf32> to vector<2x32xf32>
    %743 = vector.extract_strided_slice %728 {offsets = [0, 64], sizes = [2, 32], strides = [1, 1]} : vector<2x96xf32> to vector<2x32xf32>
    %744 = vector.extract_strided_slice %730 {offsets = [0, 64], sizes = [2, 32], strides = [1, 1]} : vector<2x96xf32> to vector<2x32xf32>
    %745 = vector.broadcast %623 : vector<1x32xf32> to vector<2x32xf32>
    %746 = arith.addf %744, %745 : vector<2x32xf32>
    %747 = arith.mulf %741, %746 : vector<2x32xf32>
    %748 = arith.addf %743, %747 : vector<2x32xf32>
    %749 = math.tanh %748 : vector<2x32xf32>
    %750 = arith.subf %727, %749 : vector<2x32xf32>
    %751 = arith.mulf %742, %750 : vector<2x32xf32>
    %752 = arith.addf %749, %751 : vector<2x32xf32>
    %753 = vector.extract_strided_slice %627 {offsets = [10, 0], sizes = [2, 96], strides = [1, 1]} : vector<16x96xf32> to vector<2x96xf32>
    %754 = arith.truncf %752 : vector<2x32xf32> to vector<2x32xbf16>
    %cst_139 = arith.constant dense<0.000000e+00> : vector<2x96xf32>
    %755 = tpu.matmul %754, %621, %cst_139 {dimension_numbers = #tpu.dot_dimension_numbers<[1], [0], [0], [1], [0, 0, 1, 1], [], []>} : vector<2x32xbf16>, vector<32x96xbf16>, vector<2x96xf32> -> vector<2x96xf32>
    %756 = vector.extract_strided_slice %753 {offsets = [0, 0], sizes = [2, 64], strides = [1, 1]} : vector<2x96xf32> to vector<2x64xf32>
    %757 = vector.extract_strided_slice %755 {offsets = [0, 0], sizes = [2, 64], strides = [1, 1]} : vector<2x96xf32> to vector<2x64xf32>
    %758 = arith.addf %756, %757 : vector<2x64xf32>
    %cst_140 = arith.constant 5.000000e-01 : f32
    %759 = vector.broadcast %cst_140 : f32 to vector<2x64xf32>
    %760 = arith.mulf %759, %758 : vector<2x64xf32>
    %761 = math.tanh %760 : vector<2x64xf32>
    %cst_141 = arith.constant 1.000000e+00 : f32
    %762 = vector.broadcast %cst_141 : f32 to vector<2x64xf32>
    %763 = arith.addf %761, %762 : vector<2x64xf32>
    %cst_142 = arith.constant 5.000000e-01 : f32
    %764 = vector.broadcast %cst_142 : f32 to vector<2x64xf32>
    %765 = arith.mulf %764, %763 : vector<2x64xf32>
    %766 = vector.extract_strided_slice %765 {offsets = [0, 0], sizes = [2, 32], strides = [1, 1]} : vector<2x64xf32> to vector<2x32xf32>
    %767 = vector.extract_strided_slice %765 {offsets = [0, 32], sizes = [2, 32], strides = [1, 1]} : vector<2x64xf32> to vector<2x32xf32>
    %768 = vector.extract_strided_slice %753 {offsets = [0, 64], sizes = [2, 32], strides = [1, 1]} : vector<2x96xf32> to vector<2x32xf32>
    %769 = vector.extract_strided_slice %755 {offsets = [0, 64], sizes = [2, 32], strides = [1, 1]} : vector<2x96xf32> to vector<2x32xf32>
    %770 = vector.broadcast %623 : vector<1x32xf32> to vector<2x32xf32>
    %771 = arith.addf %769, %770 : vector<2x32xf32>
    %772 = arith.mulf %766, %771 : vector<2x32xf32>
    %773 = arith.addf %768, %772 : vector<2x32xf32>
    %774 = math.tanh %773 : vector<2x32xf32>
    %775 = arith.subf %752, %774 : vector<2x32xf32>
    %776 = arith.mulf %767, %775 : vector<2x32xf32>
    %777 = arith.addf %774, %776 : vector<2x32xf32>
    %778 = vector.extract_strided_slice %627 {offsets = [12, 0], sizes = [2, 96], strides = [1, 1]} : vector<16x96xf32> to vector<2x96xf32>
    %779 = arith.truncf %777 : vector<2x32xf32> to vector<2x32xbf16>
    %cst_143 = arith.constant dense<0.000000e+00> : vector<2x96xf32>
    %780 = tpu.matmul %779, %621, %cst_143 {dimension_numbers = #tpu.dot_dimension_numbers<[1], [0], [0], [1], [0, 0, 1, 1], [], []>} : vector<2x32xbf16>, vector<32x96xbf16>, vector<2x96xf32> -> vector<2x96xf32>
    %781 = vector.extract_strided_slice %778 {offsets = [0, 0], sizes = [2, 64], strides = [1, 1]} : vector<2x96xf32> to vector<2x64xf32>
    %782 = vector.extract_strided_slice %780 {offsets = [0, 0], sizes = [2, 64], strides = [1, 1]} : vector<2x96xf32> to vector<2x64xf32>
    %783 = arith.addf %781, %782 : vector<2x64xf32>
    %cst_144 = arith.constant 5.000000e-01 : f32
    %784 = vector.broadcast %cst_144 : f32 to vector<2x64xf32>
    %785 = arith.mulf %784, %783 : vector<2x64xf32>
    %786 = math.tanh %785 : vector<2x64xf32>
    %cst_145 = arith.constant 1.000000e+00 : f32
    %787 = vector.broadcast %cst_145 : f32 to vector<2x64xf32>
    %788 = arith.addf %786, %787 : vector<2x64xf32>
    %cst_146 = arith.constant 5.000000e-01 : f32
    %789 = vector.broadcast %cst_146 : f32 to vector<2x64xf32>
    %790 = arith.mulf %789, %788 : vector<2x64xf32>
    %791 = vector.extract_strided_slice %790 {offsets = [0, 0], sizes = [2, 32], strides = [1, 1]} : vector<2x64xf32> to vector<2x32xf32>
    %792 = vector.extract_strided_slice %790 {offsets = [0, 32], sizes = [2, 32], strides = [1, 1]} : vector<2x64xf32> to vector<2x32xf32>
    %793 = vector.extract_strided_slice %778 {offsets = [0, 64], sizes = [2, 32], strides = [1, 1]} : vector<2x96xf32> to vector<2x32xf32>
    %794 = vector.extract_strided_slice %780 {offsets = [0, 64], sizes = [2, 32], strides = [1, 1]} : vector<2x96xf32> to vector<2x32xf32>
    %795 = vector.broadcast %623 : vector<1x32xf32> to vector<2x32xf32>
    %796 = arith.addf %794, %795 : vector<2x32xf32>
    %797 = arith.mulf %791, %796 : vector<2x32xf32>
    %798 = arith.addf %793, %797 : vector<2x32xf32>
    %799 = math.tanh %798 : vector<2x32xf32>
    %800 = arith.subf %777, %799 : vector<2x32xf32>
    %801 = arith.mulf %792, %800 : vector<2x32xf32>
    %802 = arith.addf %799, %801 : vector<2x32xf32>
    %803 = vector.extract_strided_slice %627 {offsets = [14, 0], sizes = [2, 96], strides = [1, 1]} : vector<16x96xf32> to vector<2x96xf32>
    %804 = arith.truncf %802 : vector<2x32xf32> to vector<2x32xbf16>
    %cst_147 = arith.constant dense<0.000000e+00> : vector<2x96xf32>
    %805 = tpu.matmul %804, %621, %cst_147 {dimension_numbers = #tpu.dot_dimension_numbers<[1], [0], [0], [1], [0, 0, 1, 1], [], []>} : vector<2x32xbf16>, vector<32x96xbf16>, vector<2x96xf32> -> vector<2x96xf32>
    %806 = vector.extract_strided_slice %803 {offsets = [0, 0], sizes = [2, 64], strides = [1, 1]} : vector<2x96xf32> to vector<2x64xf32>
    %807 = vector.extract_strided_slice %805 {offsets = [0, 0], sizes = [2, 64], strides = [1, 1]} : vector<2x96xf32> to vector<2x64xf32>
    %808 = arith.addf %806, %807 : vector<2x64xf32>
    %cst_148 = arith.constant 5.000000e-01 : f32
    %809 = vector.broadcast %cst_148 : f32 to vector<2x64xf32>
    %810 = arith.mulf %809, %808 : vector<2x64xf32>
    %811 = math.tanh %810 : vector<2x64xf32>
    %cst_149 = arith.constant 1.000000e+00 : f32
    %812 = vector.broadcast %cst_149 : f32 to vector<2x64xf32>
    %813 = arith.addf %811, %812 : vector<2x64xf32>
    %cst_150 = arith.constant 5.000000e-01 : f32
    %814 = vector.broadcast %cst_150 : f32 to vector<2x64xf32>
    %815 = arith.mulf %814, %813 : vector<2x64xf32>
    %816 = vector.extract_strided_slice %815 {offsets = [0, 0], sizes = [2, 32], strides = [1, 1]} : vector<2x64xf32> to vector<2x32xf32>
    %817 = vector.extract_strided_slice %815 {offsets = [0, 32], sizes = [2, 32], strides = [1, 1]} : vector<2x64xf32> to vector<2x32xf32>
    %818 = vector.extract_strided_slice %803 {offsets = [0, 64], sizes = [2, 32], strides = [1, 1]} : vector<2x96xf32> to vector<2x32xf32>
    %819 = vector.extract_strided_slice %805 {offsets = [0, 64], sizes = [2, 32], strides = [1, 1]} : vector<2x96xf32> to vector<2x32xf32>
    %820 = vector.broadcast %623 : vector<1x32xf32> to vector<2x32xf32>
    %821 = arith.addf %819, %820 : vector<2x32xf32>
    %822 = arith.mulf %816, %821 : vector<2x32xf32>
    %823 = arith.addf %818, %822 : vector<2x32xf32>
    %824 = math.tanh %823 : vector<2x32xf32>
    %825 = arith.subf %802, %824 : vector<2x32xf32>
    %826 = arith.mulf %817, %825 : vector<2x32xf32>
    %827 = arith.addf %824, %826 : vector<2x32xf32>
    %828 = tpu.concatenate %652, %677, %702, %727, %752, %777, %802, %827 in 0 : vector<2x32xf32>, vector<2x32xf32>, vector<2x32xf32>, vector<2x32xf32>, vector<2x32xf32>, vector<2x32xf32>, vector<2x32xf32>, vector<2x32xf32> -> vector<16x32xf32>
    %829 = arith.truncf %828 : vector<16x32xf32> to vector<16x32xbf16>
    %c0_151 = arith.constant 0 : index
    %c0_152 = arith.constant 0 : index
    %830 = vector.load %arg3[%c0_151, %c0_152] : memref<32x128xbf16, #tpu.memory_space<vmem>>, vector<32x128xbf16>
    %cst_153 = arith.constant dense<0.000000e+00> : vector<16x128xf32>
    %831 = tpu.matmul %829, %830, %cst_153 {dimension_numbers = #tpu.dot_dimension_numbers<[1], [0], [0], [1], [0, 0, 1, 1], [], []>} : vector<16x32xbf16>, vector<32x128xbf16>, vector<16x128xf32> -> vector<16x128xf32>
    %c0_154 = arith.constant 0 : index
    %c0_155 = arith.constant 0 : index
    %832 = vector.load %arg4[%c0_154, %c0_155] : memref<1x128xf32, #tpu.memory_space<vmem>>, vector<1x128xf32>
    %833 = vector.broadcast %832 : vector<1x128xf32> to vector<16x128xf32>
    %834 = arith.addf %831, %833 : vector<16x128xf32>
    %c0_156 = arith.constant 0 : index
    %c0_157 = arith.constant 0 : index
    %835 = vector.load %arg5[%c0_156, %c0_157] : memref<16x128xf32, #tpu.memory_space<vmem>>, vector<16x128xf32>
    tpu.vector_store %arg5[%c0_156, %c0_157], %834 {strides = array<i32>} : memref<16x128xf32, #tpu.memory_space<vmem>>, vector<16x128xf32>,
    return
  }
}

</mosaic_0001>

<llo_original>
// kernel: gru_autoencoder_forward.1
$region0: #{gru_autoencoder_forward.1}
  #allocation0 [shape = 'u32[]', space=smem, size = 0x4, offset = 0x4, fixed_abs, tag = 'smem constant byte address 0x4 - core index']
  #allocation1 [shape = 'u32[144,128]{1,0:T(1,128)}', space=vmem, size = 0x12000, scoped, tag = 'internal scratch']
  %s0 = inlined_call_operand.vmem [shape: f32[16,32], index: 0, kind: input, shape index: {}]
  %s1 = inlined_call_operand.vmem [shape: bf16[256,96], index: 1, kind: input, shape index: {}]
  %s2 = inlined_call_operand.vmem [shape: f32[8,96], index: 2, kind: input, shape index: {}]
  %s3 = inlined_call_operand.vmem [shape: bf16[32,128], index: 3, kind: input, shape index: {}]
  %s4 = inlined_call_operand.vmem [shape: f32[1,128], index: 4, kind: input, shape index: {}]
  %s5 = inlined_call_operand.vmem [shape: f32[16,128], index: 5, kind: output, shape index: {}]
  %s6 = sld [smem:[#allocation0]]
  $region30: #{gru_autoencoder_forward.1} parent=0
    _
  %s8 = ssub.s32 1, %s6
  %s9 = scalar_select 0, %s8, %s6
  // Predicated region
  $region2: #{gru_autoencoder_forward.1} parent=0 // pred_check
    _
  $region3: #{gru_autoencoder_forward.1} parent=0 // pred_check_branch
    %11 = sbr.rel (0) target = $region5
  $region4: #{gru_autoencoder_forward.1} parent=0 // pred_region
    _
  $region5: #{gru_autoencoder_forward.1} parent=0 // pred_fallthru
    _
  // Predicated region
  $region6: #{gru_autoencoder_forward.1} parent=0 // pred_check
    _
  $region7: #{gru_autoencoder_forward.1} parent=0 // pred_check_branch
    %13 = sbr.rel (0) target = $region9
  $region8: #{gru_autoencoder_forward.1} parent=0 // pred_region
    _
  $region9: #{gru_autoencoder_forward.1} parent=0 // pred_fallthru
    _
  // Predicated region
  $region10: #{gru_autoencoder_forward.1} parent=0 // pred_check
    _
  $region11: #{gru_autoencoder_forward.1} parent=0 // pred_check_branch
    %15 = sbr.rel (0) target = $region13
  $region12: #{gru_autoencoder_forward.1} parent=0 // pred_region
    _
  $region13: #{gru_autoencoder_forward.1} parent=0 // pred_fallthru
    _
  // Predicated region
  $region14: #{gru_autoencoder_forward.1} parent=0 // pred_check
    _
  $region15: #{gru_autoencoder_forward.1} parent=0 // pred_check_branch
    %17 = sbr.rel (0) target = $region17
  $region16: #{gru_autoencoder_forward.1} parent=0 // pred_region
    _
  $region17: #{gru_autoencoder_forward.1} parent=0 // pred_fallthru
    _
  // Predicated region
  $region18: #{gru_autoencoder_forward.1} parent=0 // pred_check
    _
  $region19: #{gru_autoencoder_forward.1} parent=0 // pred_check_branch
    %19 = sbr.rel (0) target = $region21
  $region20: #{gru_autoencoder_forward.1} parent=0 // pred_region
    _
  $region21: #{gru_autoencoder_forward.1} parent=0 // pred_fallthru
    _
  %v21 = vld [vmem:[%s0] sm:$0xff]
  %v22 = vld [vmem:[%s0 + $0x8] sm:$0xff]
  %v23 = vld [vmem:[%s1] sm:$0xf]
  %v24 = vld [vmem:[%s1 + $0x4] sm:$0xf]
  %v25 = vld [vmem:[%s1 + $0x8] sm:$0xf]
  %v26 = vld [vmem:[%s1 + $0xc] sm:$0xf]
  %v27 = vld [vmem:[%s1 + $0x10] sm:$0xf]
  %v28 = vld [vmem:[%s1 + $0x14] sm:$0xf]
  %v29 = vld [vmem:[%s1 + $0x18] sm:$0xf]
  %v30 = vld [vmem:[%s1 + $0x1c] sm:$0xf]
  %v31 = vld [vmem:[%s2] sm:$0x1]
  %v32 = vld [vmem:[%s2 + $0x1] sm:$0x1]
  %v33 = vpack.c.bf16 %v22, %v21
  %v34 = vlaneseq
  %v35 = vshrl.u32 %v34, 7
  %v36 = vsub.s32 0, %v35
  %v37 = vrot.slane %v31, %v36
  %v42 = vunpack.c.l.b16 %v23
  %v43 = vunpack.c.l.b16 %v24
  %v44 = vunpack.c.l.b16 %v25
  %v45 = vunpack.c.l.b16 %v26
  %v46 = vpack.c.b16 %v43, %v42
  %v47 = vpack.c.b16 %v45, %v44
  %vm50 = vcmask 261120
  %v52 = vsel %vm50, %v33, 0
  %54 = vmatprep.subr.bf16.mxu0 0
  %55 = vmatpush1.bf16.msra.mxu0 %v46
  %56 = vmatprep.subr.bf16.mxu0 0
  %57 = vmatpush1.bf16.msra.mxu0 %v47
  %58 = vmatprep.subr.bf16.mxu0 0
  %59 = vmatpush1.bf16.msra.mxu0 0
  %60 = vmatprep.subr.bf16.mxu0 0
  %61 = vmatpush1.bf16.msra.mxu0 0
  %62 = vmatprep.subr.bf16.mxu0 0
  %63 = vmatpush1.bf16.msra.mxu0 0
  %64 = vmatprep.subr.bf16.mxu0 0
  %65 = vmatpush1.bf16.msra.mxu0 0
  %66 = vmatprep.subr.bf16.mxu0 0
  %67 = vmatpush1.bf16.msra.mxu0 0
  %68 = vmatprep.subr.bf16.mxu0 0
  %69 = vmatpush1.bf16.msra.mxu0 0
  %70 = vmatprep.subr.bf16.mxu0 0
  %71 = vmatpush1.bf16.msra.mxu0 0
  %72 = vmatprep.subr.bf16.mxu0 0
  %73 = vmatpush1.bf16.msra.mxu0 0
  %74 = vmatprep.subr.bf16.mxu0 0
  %75 = vmatpush1.bf16.msra.mxu0 0
  %76 = vmatprep.subr.bf16.mxu0 0
  %77 = vmatpush1.bf16.msra.mxu0 0
  %78 = vmatprep.subr.bf16.mxu0 0
  %79 = vmatpush1.bf16.msra.mxu0 0
  %80 = vmatprep.subr.bf16.mxu0 0
  %81 = vmatpush1.bf16.msra.mxu0 0
  %82 = vmatprep.subr.bf16.mxu0 0
  %83 = vmatpush1.bf16.msra.mxu0 0
  %84 = vmatprep.subr.bf16.mxu0 0
  %85 = vmatpush1.bf16.msra.mxu0 0
  %86 = vmatprep.mubr.bf16.mxu0 0
  %87 = vmatmul.mubr.bf16.gmra.mrb[0].mxu0 %v52
  %v88 = vpop.f32.mrb[0].mxu0
  %v89 = vadd.f32 %v37, %v88
  %v90 = vpop.f32.mrb[0].mxu0
  %v91 = vpop.f32.mrb[0].mxu0
  %v92 = vadd.f32 %v37, %v91
  %v93 = vpop.f32.mrb[0].mxu0
  %94 = vdwg.mxu0
  %v99 = vunpack.c.l.b16 %v27
  %v100 = vunpack.c.l.b16 %v28
  %v101 = vunpack.c.l.b16 %v29
  %v102 = vunpack.c.l.b16 %v30
  %v103 = vpack.c.b16 %v100, %v99
  %v104 = vpack.c.b16 %v102, %v101
  %v108 = vsel %vm50, 0, 0
  %110 = vmatprep.subr.bf16.mxu0 0
  %111 = vmatpush1.bf16.msra.mxu0 %v103
  %112 = vmatprep.subr.bf16.mxu0 0
  %113 = vmatpush1.bf16.msra.mxu0 %v104
  %114 = vmatprep.subr.bf16.mxu0 0
  %115 = vmatpush1.bf16.msra.mxu0 0
  %116 = vmatprep.subr.bf16.mxu0 0
  %117 = vmatpush1.bf16.msra.mxu0 0
  %118 = vmatprep.subr.bf16.mxu0 0
  %119 = vmatpush1.bf16.msra.mxu0 0
  %120 = vmatprep.subr.bf16.mxu0 0
  %121 = vmatpush1.bf16.msra.mxu0 0
  %122 = vmatprep.subr.bf16.mxu0 0
  %123 = vmatpush1.bf16.msra.mxu0 0
  %124 = vmatprep.subr.bf16.mxu0 0
  %125 = vmatpush1.bf16.msra.mxu0 0
  %126 = vmatprep.subr.bf16.mxu0 0
  %127 = vmatpush1.bf16.msra.mxu0 0
  %128 = vmatprep.subr.bf16.mxu0 0
  %129 = vmatpush1.bf16.msra.mxu0 0
  %130 = vmatprep.subr.bf16.mxu0 0
  %131 = vmatpush1.bf16.msra.mxu0 0
  %132 = vmatprep.subr.bf16.mxu0 0
  %133 = vmatpush1.bf16.msra.mxu0 0
  %134 = vmatprep.subr.bf16.mxu0 0
  %135 = vmatpush1.bf16.msra.mxu0 0
  %136 = vmatprep.subr.bf16.mxu0 0
  %137 = vmatpush1.bf16.msra.mxu0 0
  %138 = vmatprep.subr.bf16.mxu0 0
  %139 = vmatpush1.bf16.msra.mxu0 0
  %140 = vmatprep.subr.bf16.mxu0 0
  %141 = vmatpush1.bf16.msra.mxu0 0
  %142 = vmatprep.mubr.bf16.mxu0 0
  %143 = vmatmul.mubr.bf16.gmra.mrb[0].mxu0 %v108
  %v144 = vpop.f32.mrb[0].mxu0
  %v145 = vadd.f32 0.0, %v144
  %v146 = vpop.f32.mrb[0].mxu0
  %v147 = vpop.f32.mrb[0].mxu0
  %v148 = vpop.f32.mrb[0].mxu0
  %149 = vdwg.mxu0
  %v150 = vadd.f32 %v89, %v145
  %v151 = vmul.f32 %v150, 0.5
  %v152 = vtanh.pop %v151
  %v153 = vadd.f32 %v152, 1.0
  %v154 = vmul.f32 %v153, 0.5
  %v155 = vlaneseq
  %v156 = vshrl.u32 %v155, 7
  %v157 = vsub.s32 0, %v156
  %v158 = vrot.slane %v32, %v157
  %v159 = vadd.f32 %v145, %v158
  %161 = vrot.lane.b32.xlu0 %v159, 64
  %v162 = vpop.permute.xlu0 %161
  %v164 = vmul.f32 %v154, %v162
  %166 = vrot.lane.b32.xlu0 %v164, 64
  %v167 = vpop.permute.xlu0 %166
  %v169 = vadd.f32 %v89, %v167
  %v170 = vtanh.pop %v169
  %v171 = vsub.f32 0.0, %v170
  %173 = vrot.lane.b32.xlu0 %v171, 96
  %v174 = vpop.permute.xlu0 %173
  %v176 = vmul.f32 %v154, %v174
  %178 = vrot.lane.b32.xlu0 %v176, 32
  %v179 = vpop.permute.xlu0 %178
  %v181 = vadd.f32 %v170, %v179
  %v182 = vpack.c.bf16 %v181, %v181
  %184 = vrot.lane.b32.xlu0 %v182, 64
  %v185 = vpop.permute.xlu0 %184
  %v187 = vsel %vm50, %v185, 0
  %189 = vmatprep.subr.bf16.mxu0 0
  %190 = vmatpush1.bf16.msra.mxu0 %v103
  %191 = vmatprep.subr.bf16.mxu0 0
  %192 = vmatpush1.bf16.msra.mxu0 %v104
  %193 = vmatprep.subr.bf16.mxu0 0
  %194 = vmatpush1.bf16.msra.mxu0 0
  %195 = vmatprep.subr.bf16.mxu0 0
  %196 = vmatpush1.bf16.msra.mxu0 0
  %197 = vmatprep.subr.bf16.mxu0 0
  %198 = vmatpush1.bf16.msra.mxu0 0
  %199 = vmatprep.subr.bf16.mxu0 0
  %200 = vmatpush1.bf16.msra.mxu0 0
  %201 = vmatprep.subr.bf16.mxu0 0
  %202 = vmatpush1.bf16.msra.mxu0 0
  %203 = vmatprep.subr.bf16.mxu0 0
  %204 = vmatpush1.bf16.msra.mxu0 0
  %205 = vmatprep.subr.bf16.mxu0 0
  %206 = vmatpush1.bf16.msra.mxu0 0
  %207 = vmatprep.subr.bf16.mxu0 0
  %208 = vmatpush1.bf16.msra.mxu0 0
  %209 = vmatprep.subr.bf16.mxu0 0
  %210 = vmatpush1.bf16.msra.mxu0 0
  %211 = vmatprep.subr.bf16.mxu0 0
  %212 = vmatpush1.bf16.msra.mxu0 0
  %213 = vmatprep.subr.bf16.mxu0 0
  %214 = vmatpush1.bf16.msra.mxu0 0
  %215 = vmatprep.subr.bf16.mxu0 0
  %216 = vmatpush1.bf16.msra.mxu0 0
  %217 = vmatprep.subr.bf16.mxu0 0
  %218 = vmatpush1.bf16.msra.mxu0 0
  %219 = vmatprep.subr.bf16.mxu0 0
  %220 = vmatpush1.bf16.msra.mxu0 0
  %221 = vmatprep.mubr.bf16.mxu0 0
  %222 = vmatmul.mubr.bf16.gmra.mrb[0].mxu0 %v187
  %v223 = vpop.f32.mrb[0].mxu0
  %v224 = vadd.f32 0.0, %v223
  %v225 = vpop.f32.mrb[0].mxu0
  %v226 = vpop.f32.mrb[0].mxu0
  %v227 = vpop.f32.mrb[0].mxu0
  %228 = vdwg.mxu0
  %v230 = vrot.slane %v224, 6
  %v232 = vadd.f32 %v89, %v230
  %v233 = vmul.f32 %v232, 0.5
  %v234 = vtanh.pop %v233
  %v235 = vadd.f32 %v234, 1.0
  %v236 = vmul.f32 %v235, 0.5
  %v237 = vadd.f32 %v224, %v158
  %v239 = vrot.slane %v237, 6
  %240 = vrot.lane.b32.xlu0 %v239, 64
  %v241 = vpop.permute.xlu0 %240
  %v243 = vmul.f32 %v236, %v241
  %245 = vrot.lane.b32.xlu0 %v243, 64
  %v246 = vpop.permute.xlu0 %245
  %v248 = vadd.f32 %v89, %v246
  %v249 = vtanh.pop %v248
  %v251 = vrot.slane %v249, 2
  %v253 = vsub.f32 %v181, %v251
  %v255 = vrot.slane %v253, 6
  %256 = vrot.lane.b32.xlu0 %v255, 96
  %v257 = vpop.permute.xlu0 %256
  %v259 = vmul.f32 %v236, %v257
  %261 = vrot.lane.b32.xlu0 %v259, 32
  %v262 = vpop.permute.xlu0 %261
  %v264 = vadd.f32 %v249, %v262
  %v265 = vpack.c.bf16 %v264, %v264
  %v267 = vrot.slane %v265, 1
  %268 = vrot.lane.b32.xlu0 %v267, 64
  %v269 = vpop.permute.xlu0 %268
  %v271 = vsel %vm50, %v269, 0
  %273 = vmatprep.subr.bf16.mxu0 0
  %274 = vmatpush1.bf16.msra.mxu0 %v103
  %275 = vmatprep.subr.bf16.mxu0 0
  %276 = vmatpush1.bf16.msra.mxu0 %v104
  %277 = vmatprep.subr.bf16.mxu0 0
  %278 = vmatpush1.bf16.msra.mxu0 0
  %279 = vmatprep.subr.bf16.mxu0 0
  %280 = vmatpush1.bf16.msra.mxu0 0
  %281 = vmatprep.subr.bf16.mxu0 0
  %282 = vmatpush1.bf16.msra.mxu0 0
  %283 = vmatprep.subr.bf16.mxu0 0
  %284 = vmatpush1.bf16.msra.mxu0 0
  %285 = vmatprep.subr.bf16.mxu0 0
  %286 = vmatpush1.bf16.msra.mxu0 0
  %287 = vmatprep.subr.bf16.mxu0 0
  %288 = vmatpush1.bf16.msra.mxu0 0
  %289 = vmatprep.subr.bf16.mxu0 0
  %290 = vmatpush1.bf16.msra.mxu0 0
  %291 = vmatprep.subr.bf16.mxu0 0
  %292 = vmatpush1.bf16.msra.mxu0 0
  %293 = vmatprep.subr.bf16.mxu0 0
  %294 = vmatpush1.bf16.msra.mxu0 0
  %295 = vmatprep.subr.bf16.mxu0 0
  %296 = vmatpush1.bf16.msra.mxu0 0
  %297 = vmatprep.subr.bf16.mxu0 0
  %298 = vmatpush1.bf16.msra.mxu0 0
  %299 = vmatprep.subr.bf16.mxu0 0
  %300 = vmatpush1.bf16.msra.mxu0 0
  %301 = vmatprep.subr.bf16.mxu0 0
  %302 = vmatpush1.bf16.msra.mxu0 0
  %303 = vmatprep.subr.bf16.mxu0 0
  %304 = vmatpush1.bf16.msra.mxu0 0
  %305 = vmatprep.mubr.bf16.mxu0 0
  %306 = vmatmul.mubr.bf16.gmra.mrb[0].mxu0 %v271
  %v307 = vpop.f32.mrb[0].mxu0
  %v308 = vadd.f32 0.0, %v307
  %v309 = vpop.f32.mrb[0].mxu0
  %v310 = vpop.f32.mrb[0].mxu0
  %v311 = vpop.f32.mrb[0].mxu0
  %312 = vdwg.mxu0
  %v314 = vrot.slane %v308, 4
  %v316 = vadd.f32 %v89, %v314
  %v317 = vmul.f32 %v316, 0.5
  %v318 = vtanh.pop %v317
  %v319 = vadd.f32 %v318, 1.0
  %v320 = vmul.f32 %v319, 0.5
  %v321 = vadd.f32 %v308, %v158
  %v323 = vrot.slane %v321, 4
  %324 = vrot.lane.b32.xlu0 %v323, 64
  %v325 = vpop.permute.xlu0 %324
  %v327 = vmul.f32 %v320, %v325
  %329 = vrot.lane.b32.xlu0 %v327, 64
  %v330 = vpop.permute.xlu0 %329
  %v332 = vadd.f32 %v89, %v330
  %v333 = vtanh.pop %v332
  %v335 = vrot.slane %v333, 2
  %v337 = vsub.f32 %v264, %v335
  %v339 = vrot.slane %v337, 6
  %340 = vrot.lane.b32.xlu0 %v339, 96
  %v341 = vpop.permute.xlu0 %340
  %v343 = vmul.f32 %v320, %v341
  %345 = vrot.lane.b32.xlu0 %v343, 32
  %v346 = vpop.permute.xlu0 %345
  %v348 = vadd.f32 %v333, %v346
  %v349 = vpack.c.bf16 %v348, %v348
  %v351 = vrot.slane %v349, 2
  %352 = vrot.lane.b32.xlu0 %v351, 64
  %v353 = vpop.permute.xlu0 %352
  %v355 = vsel %vm50, %v353, 0
  %357 = vmatprep.subr.bf16.mxu0 0
  %358 = vmatpush1.bf16.msra.mxu0 %v103
  %359 = vmatprep.subr.bf16.mxu0 0
  %360 = vmatpush1.bf16.msra.mxu0 %v104
  %361 = vmatprep.subr.bf16.mxu0 0
  %362 = vmatpush1.bf16.msra.mxu0 0
  %363 = vmatprep.subr.bf16.mxu0 0
  %364 = vmatpush1.bf16.msra.mxu0 0
  %365 = vmatprep.subr.bf16.mxu0 0
  %366 = vmatpush1.bf16.msra.mxu0 0
  %367 = vmatprep.subr.bf16.mxu0 0
  %368 = vmatpush1.bf16.msra.mxu0 0
  %369 = vmatprep.subr.bf16.mxu0 0
  %370 = vmatpush1.bf16.msra.mxu0 0
  %371 = vmatprep.subr.bf16.mxu0 0
  %372 = vmatpush1.bf16.msra.mxu0 0
  %373 = vmatprep.subr.bf16.mxu0 0
  %374 = vmatpush1.bf16.msra.mxu0 0
  %375 = vmatprep.subr.bf16.mxu0 0
  %376 = vmatpush1.bf16.msra.mxu0 0
  %377 = vmatprep.subr.bf16.mxu0 0
  %378 = vmatpush1.bf16.msra.mxu0 0
  %379 = vmatprep.subr.bf16.mxu0 0
  %380 = vmatpush1.bf16.msra.mxu0 0
  %381 = vmatprep.subr.bf16.mxu0 0
  %382 = vmatpush1.bf16.msra.mxu0 0
  %383 = vmatprep.subr.bf16.mxu0 0
  %384 = vmatpush1.bf16.msra.mxu0 0
  %385 = vmatprep.subr.bf16.mxu0 0
  %386 = vmatpush1.bf16.msra.mxu0 0
  %387 = vmatprep.subr.bf16.mxu0 0
  %388 = vmatpush1.bf16.msra.mxu0 0
  %389 = vmatprep.mubr.bf16.mxu0 0
  %390 = vmatmul.mubr.bf16.gmra.mrb[0].mxu0 %v355
  %v391 = vpop.f32.mrb[0].mxu0
  %v392 = vadd.f32 0.0, %v391
  %v393 = vpop.f32.mrb[0].mxu0
  %v394 = vpop.f32.mrb[0].mxu0
  %v395 = vpop.f32.mrb[0].mxu0
  %396 = vdwg.mxu0
  %v398 = vrot.slane %v392, 2
  %v400 = vadd.f32 %v89, %v398
  %v401 = vmul.f32 %v400, 0.5
  %v402 = vtanh.pop %v401
  %v403 = vadd.f32 %v402, 1.0
  %v404 = vmul.f32 %v403, 0.5
  %v405 = vadd.f32 %v392, %v158
  %v407 = vrot.slane %v405, 2
  %408 = vrot.lane.b32.xlu0 %v407, 64
  %v409 = vpop.permute.xlu0 %408
  %v411 = vmul.f32 %v404, %v409
  %413 = vrot.lane.b32.xlu0 %v411, 64
  %v414 = vpop.permute.xlu0 %413
  %v416 = vadd.f32 %v89, %v414
  %v417 = vtanh.pop %v416
  %v419 = vrot.slane %v417, 2
  %v421 = vsub.f32 %v348, %v419
  %v423 = vrot.slane %v421, 6
  %424 = vrot.lane.b32.xlu0 %v423, 96
  %v425 = vpop.permute.xlu0 %424
  %v427 = vmul.f32 %v404, %v425
  %429 = vrot.lane.b32.xlu0 %v427, 32
  %v430 = vpop.permute.xlu0 %429
  %v432 = vadd.f32 %v417, %v430
  %v433 = vpack.c.bf16 %v432, %v432
  %v435 = vrot.slane %v433, 3
  %436 = vrot.lane.b32.xlu0 %v435, 64
  %v437 = vpop.permute.xlu0 %436
  %v439 = vsel %vm50, %v437, 0
  %441 = vmatprep.subr.bf16.mxu0 0
  %442 = vmatpush1.bf16.msra.mxu0 %v103
  %443 = vmatprep.subr.bf16.mxu0 0
  %444 = vmatpush1.bf16.msra.mxu0 %v104
  %445 = vmatprep.subr.bf16.mxu0 0
  %446 = vmatpush1.bf16.msra.mxu0 0
  %447 = vmatprep.subr.bf16.mxu0 0
  %448 = vmatpush1.bf16.msra.mxu0 0
  %449 = vmatprep.subr.bf16.mxu0 0
  %450 = vmatpush1.bf16.msra.mxu0 0
  %451 = vmatprep.subr.bf16.mxu0 0
  %452 = vmatpush1.bf16.msra.mxu0 0
  %453 = vmatprep.subr.bf16.mxu0 0
  %454 = vmatpush1.bf16.msra.mxu0 0
  %455 = vmatprep.subr.bf16.mxu0 0
  %456 = vmatpush1.bf16.msra.mxu0 0
  %457 = vmatprep.subr.bf16.mxu0 0
  %458 = vmatpush1.bf16.msra.mxu0 0
  %459 = vmatprep.subr.bf16.mxu0 0
  %460 = vmatpush1.bf16.msra.mxu0 0
  %461 = vmatprep.subr.bf16.mxu0 0
  %462 = vmatpush1.bf16.msra.mxu0 0
  %463 = vmatprep.subr.bf16.mxu0 0
  %464 = vmatpush1.bf16.msra.mxu0 0
  %465 = vmatprep.subr.bf16.mxu0 0
  %466 = vmatpush1.bf16.msra.mxu0 0
  %467 = vmatprep.subr.bf16.mxu0 0
  %468 = vmatpush1.bf16.msra.mxu0 0
  %469 = vmatprep.subr.bf16.mxu0 0
  %470 = vmatpush1.bf16.msra.mxu0 0
  %471 = vmatprep.subr.bf16.mxu0 0
  %472 = vmatpush1.bf16.msra.mxu0 0
  %473 = vmatprep.mubr.bf16.mxu0 0
  %474 = vmatmul.mubr.bf16.gmra.mrb[0].mxu0 %v439
  %v475 = vpop.f32.mrb[0].mxu0
  %v476 = vadd.f32 0.0, %v475
  %v477 = vpop.f32.mrb[0].mxu0
  %v478 = vpop.f32.mrb[0].mxu0
  %v479 = vpop.f32.mrb[0].mxu0
  %480 = vdwg.mxu0
  %v481 = vadd.f32 %v92, %v476
  %v482 = vmul.f32 %v481, 0.5
  %v483 = vtanh.pop %v482
  %v484 = vadd.f32 %v483, 1.0
  %v485 = vmul.f32 %v484, 0.5
  %v486 = vadd.f32 %v476, %v158
  %488 = vrot.lane.b32.xlu0 %v486, 64
  %v489 = vpop.permute.xlu0 %488
  %v491 = vmul.f32 %v485, %v489
  %493 = vrot.lane.b32.xlu0 %v491, 64
  %v494 = vpop.permute.xlu0 %493
  %v496 = vadd.f32 %v92, %v494
  %v497 = vtanh.pop %v496
  %v499 = vrot.slane %v497, 2
  %v501 = vsub.f32 %v432, %v499
  %v503 = vrot.slane %v501, 6
  %504 = vrot.lane.b32.xlu0 %v503, 96
  %v505 = vpop.permute.xlu0 %504
  %v507 = vmul.f32 %v485, %v505
  %509 = vrot.lane.b32.xlu0 %v507, 32
  %v510 = vpop.permute.xlu0 %509
  %v512 = vadd.f32 %v497, %v510
  %v513 = vpack.c.bf16 %v512, %v512
  %515 = vrot.lane.b32.xlu0 %v513, 64
  %v516 = vpop.permute.xlu0 %515
  %v518 = vsel %vm50, %v516, 0
  %520 = vmatprep.subr.bf16.mxu0 0
  %521 = vmatpush1.bf16.msra.mxu0 %v103
  %522 = vmatprep.subr.bf16.mxu0 0
  %523 = vmatpush1.bf16.msra.mxu0 %v104
  %524 = vmatprep.subr.bf16.mxu0 0
  %525 = vmatpush1.bf16.msra.mxu0 0
  %526 = vmatprep.subr.bf16.mxu0 0
  %527 = vmatpush1.bf16.msra.mxu0 0
  %528 = vmatprep.subr.bf16.mxu0 0
  %529 = vmatpush1.bf16.msra.mxu0 0
  %530 = vmatprep.subr.bf16.mxu0 0
  %531 = vmatpush1.bf16.msra.mxu0 0
  %532 = vmatprep.subr.bf16.mxu0 0
  %533 = vmatpush1.bf16.msra.mxu0 0
  %534 = vmatprep.subr.bf16.mxu0 0
  %535 = vmatpush1.bf16.msra.mxu0 0
  %536 = vmatprep.subr.bf16.mxu0 0
  %537 = vmatpush1.bf16.msra.mxu0 0
  %538 = vmatprep.subr.bf16.mxu0 0
  %539 = vmatpush1.bf16.msra.mxu0 0
  %540 = vmatprep.subr.bf16.mxu0 0
  %541 = vmatpush1.bf16.msra.mxu0 0
  %542 = vmatprep.subr.bf16.mxu0 0
  %543 = vmatpush1.bf16.msra.mxu0 0
  %544 = vmatprep.subr.bf16.mxu0 0
  %545 = vmatpush1.bf16.msra.mxu0 0
  %546 = vmatprep.subr.bf16.mxu0 0
  %547 = vmatpush1.bf16.msra.mxu0 0
  %548 = vmatprep.subr.bf16.mxu0 0
  %549 = vmatpush1.bf16.msra.mxu0 0
  %550 = vmatprep.subr.bf16.mxu0 0
  %551 = vmatpush1.bf16.msra.mxu0 0
  %552 = vmatprep.mubr.bf16.mxu0 0
  %553 = vmatmul.mubr.bf16.gmra.mrb[0].mxu0 %v518
  %v554 = vpop.f32.mrb[0].mxu0
  %v555 = vadd.f32 0.0, %v554
  %v556 = vpop.f32.mrb[0].mxu0
  %v557 = vpop.f32.mrb[0].mxu0
  %v558 = vpop.f32.mrb[0].mxu0
  %559 = vdwg.mxu0
  %v561 = vrot.slane %v555, 6
  %v563 = vadd.f32 %v92, %v561
  %v564 = vmul.f32 %v563, 0.5
  %v565 = vtanh.pop %v564
  %v566 = vadd.f32 %v565, 1.0
  %v567 = vmul.f32 %v566, 0.5
  %v568 = vadd.f32 %v555, %v158
  %v570 = vrot.slane %v568, 6
  %571 = vrot.lane.b32.xlu0 %v570, 64
  %v572 = vpop.permute.xlu0 %571
  %v574 = vmul.f32 %v567, %v572
  %576 = vrot.lane.b32.xlu0 %v574, 64
  %v577 = vpop.permute.xlu0 %576
  %v579 = vadd.f32 %v92, %v577
  %v580 = vtanh.pop %v579
  %v582 = vrot.slane %v580, 2
  %v584 = vsub.f32 %v512, %v582
  %v586 = vrot.slane %v584, 6
  %587 = vrot.lane.b32.xlu0 %v586, 96
  %v588 = vpop.permute.xlu0 %587
  %v590 = vmul.f32 %v567, %v588
  %592 = vrot.lane.b32.xlu0 %v590, 32
  %v593 = vpop.permute.xlu0 %592
  %v595 = vadd.f32 %v580, %v593
  %v596 = vpack.c.bf16 %v595, %v595
  %v598 = vrot.slane %v596, 1
  %599 = vrot.lane.b32.xlu0 %v598, 64
  %v600 = vpop.permute.xlu0 %599
  %v602 = vsel %vm50, %v600, 0
  %604 = vmatprep.subr.bf16.mxu0 0
  %605 = vmatpush1.bf16.msra.mxu0 %v103
  %606 = vmatprep.subr.bf16.mxu0 0
  %607 = vmatpush1.bf16.msra.mxu0 %v104
  %608 = vmatprep.subr.bf16.mxu0 0
  %609 = vmatpush1.bf16.msra.mxu0 0
  %610 = vmatprep.subr.bf16.mxu0 0
  %611 = vmatpush1.bf16.msra.mxu0 0
  %612 = vmatprep.subr.bf16.mxu0 0
  %613 = vmatpush1.bf16.msra.mxu0 0
  %614 = vmatprep.subr.bf16.mxu0 0
  %615 = vmatpush1.bf16.msra.mxu0 0
  %616 = vmatprep.subr.bf16.mxu0 0
  %617 = vmatpush1.bf16.msra.mxu0 0
  %618 = vmatprep.subr.bf16.mxu0 0
  %619 = vmatpush1.bf16.msra.mxu0 0
  %620 = vmatprep.subr.bf16.mxu0 0
  %621 = vmatpush1.bf16.msra.mxu0 0
  %622 = vmatprep.subr.bf16.mxu0 0
  %623 = vmatpush1.bf16.msra.mxu0 0
  %624 = vmatprep.subr.bf16.mxu0 0
  %625 = vmatpush1.bf16.msra.mxu0 0
  %626 = vmatprep.subr.bf16.mxu0 0
  %627 = vmatpush1.bf16.msra.mxu0 0
  %628 = vmatprep.subr.bf16.mxu0 0
  %629 = vmatpush1.bf16.msra.mxu0 0
  %630 = vmatprep.subr.bf16.mxu0 0
  %631 = vmatpush1.bf16.msra.mxu0 0
  %632 = vmatprep.subr.bf16.mxu0 0
  %633 = vmatpush1.bf16.msra.mxu0 0
  %634 = vmatprep.subr.bf16.mxu0 0
  %635 = vmatpush1.bf16.msra.mxu0 0
  %636 = vmatprep.mubr.bf16.mxu0 0
  %637 = vmatmul.mubr.bf16.gmra.mrb[0].mxu0 %v602
  %v638 = vpop.f32.mrb[0].mxu0
  %v639 = vadd.f32 0.0, %v638
  %v640 = vpop.f32.mrb[0].mxu0
  %v641 = vpop.f32.mrb[0].mxu0
  %v642 = vpop.f32.mrb[0].mxu0
  %643 = vdwg.mxu0
  %v645 = vrot.slane %v639, 4
  %v647 = vadd.f32 %v92, %v645
  %v648 = vmul.f32 %v647, 0.5
  %v649 = vtanh.pop %v648
  %v650 = vadd.f32 %v649, 1.0
  %v651 = vmul.f32 %v650, 0.5
  %v652 = vadd.f32 %v639, %v158
  %v654 = vrot.slane %v652, 4
  %655 = vrot.lane.b32.xlu0 %v654, 64
  %v656 = vpop.permute.xlu0 %655
  %v658 = vmul.f32 %v651, %v656
  %660 = vrot.lane.b32.xlu0 %v658, 64
  %v661 = vpop.permute.xlu0 %660
  %v663 = vadd.f32 %v92, %v661
  %v664 = vtanh.pop %v663
  %v666 = vrot.slane %v664, 2
  %v668 = vsub.f32 %v595, %v666
  %v670 = vrot.slane %v668, 6
  %671 = vrot.lane.b32.xlu0 %v670, 96
  %v672 = vpop.permute.xlu0 %671
  %v674 = vmul.f32 %v651, %v672
  %676 = vrot.lane.b32.xlu0 %v674, 32
  %v677 = vpop.permute.xlu0 %676
  %v679 = vadd.f32 %v664, %v677
  %v680 = vpack.c.bf16 %v679, %v679
  %v682 = vrot.slane %v680, 2
  %683 = vrot.lane.b32.xlu0 %v682, 64
  %v684 = vpop.permute.xlu0 %683
  %v686 = vsel %vm50, %v684, 0
  %688 = vmatprep.subr.bf16.mxu0 0
  %689 = vmatpush1.bf16.msra.mxu0 %v103
  %690 = vmatprep.subr.bf16.mxu0 0
  %691 = vmatpush1.bf16.msra.mxu0 %v104
  %692 = vmatprep.subr.bf16.mxu0 0
  %693 = vmatpush1.bf16.msra.mxu0 0
  %694 = vmatprep.subr.bf16.mxu0 0
  %695 = vmatpush1.bf16.msra.mxu0 0
  %696 = vmatprep.subr.bf16.mxu0 0
  %697 = vmatpush1.bf16.msra.mxu0 0
  %698 = vmatprep.subr.bf16.mxu0 0
  %699 = vmatpush1.bf16.msra.mxu0 0
  %700 = vmatprep.subr.bf16.mxu0 0
  %701 = vmatpush1.bf16.msra.mxu0 0
  %702 = vmatprep.subr.bf16.mxu0 0
  %703 = vmatpush1.bf16.msra.mxu0 0
  %704 = vmatprep.subr.bf16.mxu0 0
  %705 = vmatpush1.bf16.msra.mxu0 0
  %706 = vmatprep.subr.bf16.mxu0 0
  %707 = vmatpush1.bf16.msra.mxu0 0
  %708 = vmatprep.subr.bf16.mxu0 0
  %709 = vmatpush1.bf16.msra.mxu0 0
  %710 = vmatprep.subr.bf16.mxu0 0
  %711 = vmatpush1.bf16.msra.mxu0 0
  %712 = vmatprep.subr.bf16.mxu0 0
  %713 = vmatpush1.bf16.msra.mxu0 0
  %714 = vmatprep.subr.bf16.mxu0 0
  %715 = vmatpush1.bf16.msra.mxu0 0
  %716 = vmatprep.subr.bf16.mxu0 0
  %717 = vmatpush1.bf16.msra.mxu0 0
  %718 = vmatprep.subr.bf16.mxu0 0
  %719 = vmatpush1.bf16.msra.mxu0 0
  %720 = vmatprep.mubr.bf16.mxu0 0
  %721 = vmatmul.mubr.bf16.gmra.mrb[0].mxu0 %v686
  %v722 = vpop.f32.mrb[0].mxu0
  %v723 = vadd.f32 0.0, %v722
  %v724 = vpop.f32.mrb[0].mxu0
  %v725 = vpop.f32.mrb[0].mxu0
  %v726 = vpop.f32.mrb[0].mxu0
  %727 = vdwg.mxu0
  %v729 = vrot.slane %v723, 2
  %v731 = vadd.f32 %v92, %v729
  %v732 = vmul.f32 %v731, 0.5
  %v733 = vtanh.pop %v732
  %v734 = vadd.f32 %v733, 1.0
  %v735 = vmul.f32 %v734, 0.5
  %v736 = vadd.f32 %v723, %v158
  %v738 = vrot.slane %v736, 2
  %739 = vrot.lane.b32.xlu0 %v738, 64
  %v740 = vpop.permute.xlu0 %739
  %v742 = vmul.f32 %v735, %v740
  %744 = vrot.lane.b32.xlu0 %v742, 64
  %v745 = vpop.permute.xlu0 %744
  %v747 = vadd.f32 %v92, %v745
  %v748 = vtanh.pop %v747
  %v750 = vrot.slane %v748, 2
  %v752 = vsub.f32 %v679, %v750
  %v754 = vrot.slane %v752, 6
  %755 = vrot.lane.b32.xlu0 %v754, 96
  %v756 = vpop.permute.xlu0 %755
  %v758 = vmul.f32 %v735, %v756
  %760 = vrot.lane.b32.xlu0 %v758, 32
  %v761 = vpop.permute.xlu0 %760
  %v763 = vadd.f32 %v748, %v761
  %vm764 = vcmask 1041408
  %v765 = vsel %vm764, %v181, %v264
  %vm766 = vcmask 1043456
  %v767 = vsel %vm766, %v765, %v348
  %vm768 = vcmask 1045504
  %v769 = vsel %vm768, %v767, %v432
  %v770 = vsel %vm764, %v512, %v595
  %v771 = vsel %vm766, %v770, %v679
  %v772 = vsel %vm768, %v771, %v763
  %v773 = vld [vmem:[%s1 + $0x20] sm:$0xf]
  %v774 = vld [vmem:[%s1 + $0x24] sm:$0xf]
  %v775 = vld [vmem:[%s1 + $0x28] sm:$0xf]
  %v776 = vld [vmem:[%s1 + $0x2c] sm:$0xf]
  %v777 = vld [vmem:[%s1 + $0x30] sm:$0xf]
  %v778 = vld [vmem:[%s1 + $0x34] sm:$0xf]
  %v779 = vld [vmem:[%s1 + $0x38] sm:$0xf]
  %v780 = vld [vmem:[%s1 + $0x3c] sm:$0xf]
  %v781 = vld [vmem:[%s2 + $0x2] sm:$0x1]
  %v782 = vld [vmem:[%s2 + $0x3] sm:$0x1]
  %v783 = vpack.c.bf16 %v772, %v769
  %v784 = vlaneseq
  %v785 = vshrl.u32 %v784, 7
  %v786 = vsub.s32 0, %v785
  %v787 = vrot.slane %v781, %v786
  %789 = vrot.lane.b32.xlu0 %v783, 64
  %v790 = vpop.permute.xlu0 %789
  %v795 = vunpack.c.l.b16 %v773
  %v796 = vunpack.c.l.b16 %v774
  %v797 = vunpack.c.l.b16 %v775
  %v798 = vunpack.c.l.b16 %v776
  %v799 = vpack.c.b16 %v796, %v795
  %v800 = vpack.c.b16 %v798, %v797
  %v804 = vsel %vm50, %v790, 0
  %806 = vmatprep.subr.bf16.mxu0 0
  %807 = vmatpush1.bf16.msra.mxu0 %v799
  %808 = vmatprep.subr.bf16.mxu0 0
  %809 = vmatpush1.bf16.msra.mxu0 %v800
  %810 = vmatprep.subr.bf16.mxu0 0
  %811 = vmatpush1.bf16.msra.mxu0 0
  %812 = vmatprep.subr.bf16.mxu0 0
  %813 = vmatpush1.bf16.msra.mxu0 0
  %814 = vmatprep.subr.bf16.mxu0 0
  %815 = vmatpush1.bf16.msra.mxu0 0
  %816 = vmatprep.subr.bf16.mxu0 0
  %817 = vmatpush1.bf16.msra.mxu0 0
  %818 = vmatprep.subr.bf16.mxu0 0
  %819 = vmatpush1.bf16.msra.mxu0 0
  %820 = vmatprep.subr.bf16.mxu0 0
  %821 = vmatpush1.bf16.msra.mxu0 0
  %822 = vmatprep.subr.bf16.mxu0 0
  %823 = vmatpush1.bf16.msra.mxu0 0
  %824 = vmatprep.subr.bf16.mxu0 0
  %825 = vmatpush1.bf16.msra.mxu0 0
  %826 = vmatprep.subr.bf16.mxu0 0
  %827 = vmatpush1.bf16.msra.mxu0 0
  %828 = vmatprep.subr.bf16.mxu0 0
  %829 = vmatpush1.bf16.msra.mxu0 0
  %830 = vmatprep.subr.bf16.mxu0 0
  %831 = vmatpush1.bf16.msra.mxu0 0
  %832 = vmatprep.subr.bf16.mxu0 0
  %833 = vmatpush1.bf16.msra.mxu0 0
  %834 = vmatprep.subr.bf16.mxu0 0
  %835 = vmatpush1.bf16.msra.mxu0 0
  %836 = vmatprep.subr.bf16.mxu0 0
  %837 = vmatpush1.bf16.msra.mxu0 0
  %838 = vmatprep.mubr.bf16.mxu0 0
  %839 = vmatmul.mubr.bf16.gmra.mrb[0].mxu0 %v804
  %v840 = vpop.f32.mrb[0].mxu0
  %v841 = vadd.f32 %v787, %v840
  %v842 = vpop.f32.mrb[0].mxu0
  %v843 = vpop.f32.mrb[0].mxu0
  %v844 = vadd.f32 %v787, %v843
  %v845 = vpop.f32.mrb[0].mxu0
  %846 = vdwg.mxu0
  %v851 = vunpack.c.l.b16 %v777
  %v852 = vunpack.c.l.b16 %v778
  %v853 = vunpack.c.l.b16 %v779
  %v854 = vunpack.c.l.b16 %v780
  %v855 = vpack.c.b16 %v852, %v851
  %v856 = vpack.c.b16 %v854, %v853
  %859 = vmatprep.subr.bf16.mxu0 0
  %860 = vmatpush1.bf16.msra.mxu0 %v855
  %861 = vmatprep.subr.bf16.mxu0 0
  %862 = vmatpush1.bf16.msra.mxu0 %v856
  %863 = vmatprep.subr.bf16.mxu0 0
  %864 = vmatpush1.bf16.msra.mxu0 0
  %865 = vmatprep.subr.bf16.mxu0 0
  %866 = vmatpush1.bf16.msra.mxu0 0
  %867 = vmatprep.subr.bf16.mxu0 0
  %868 = vmatpush1.bf16.msra.mxu0 0
  %869 = vmatprep.subr.bf16.mxu0 0
  %870 = vmatpush1.bf16.msra.mxu0 0
  %871 = vmatprep.subr.bf16.mxu0 0
  %872 = vmatpush1.bf16.msra.mxu0 0
  %873 = vmatprep.subr.bf16.mxu0 0
  %874 = vmatpush1.bf16.msra.mxu0 0
  %875 = vmatprep.subr.bf16.mxu0 0
  %876 = vmatpush1.bf16.msra.mxu0 0
  %877 = vmatprep.subr.bf16.mxu0 0
  %878 = vmatpush1.bf16.msra.mxu0 0
  %879 = vmatprep.subr.bf16.mxu0 0
  %880 = vmatpush1.bf16.msra.mxu0 0
  %881 = vmatprep.subr.bf16.mxu0 0
  %882 = vmatpush1.bf16.msra.mxu0 0
  %883 = vmatprep.subr.bf16.mxu0 0
  %884 = vmatpush1.bf16.msra.mxu0 0
  %885 = vmatprep.subr.bf16.mxu0 0
  %886 = vmatpush1.bf16.msra.mxu0 0
  %887 = vmatprep.subr.bf16.mxu0 0
  %888 = vmatpush1.bf16.msra.mxu0 0
  %889 = vmatprep.subr.bf16.mxu0 0
  %890 = vmatpush1.bf16.msra.mxu0 0
  %891 = vmatprep.mubr.bf16.mxu0 0
  %892 = vmatmul.mubr.bf16.gmra.mrb[0].mxu0 %v108
  %v893 = vpop.f32.mrb[0].mxu0
  %v894 = vadd.f32 0.0, %v893
  %v895 = vpop.f32.mrb[0].mxu0
  %v896 = vpop.f32.mrb[0].mxu0
  %v897 = vpop.f32.mrb[0].mxu0
  %898 = vdwg.mxu0
  %v899 = vadd.f32 %v841, %v894
  %v900 = vmul.f32 %v899, 0.5
  %v901 = vtanh.pop %v900
  %v902 = vadd.f32 %v901, 1.0
  %v903 = vmul.f32 %v902, 0.5
  %v904 = vlaneseq
  %v905 = vshrl.u32 %v904, 7
  %v906 = vsub.s32 0, %v905
  %v907 = vrot.slane %v782, %v906
  %v908 = vadd.f32 %v894, %v907
  %910 = vrot.lane.b32.xlu0 %v908, 64
  %v911 = vpop.permute.xlu0 %910
  %v913 = vmul.f32 %v903, %v911
  %915 = vrot.lane.b32.xlu0 %v913, 64
  %v916 = vpop.permute.xlu0 %915
  %v918 = vadd.f32 %v841, %v916
  %v919 = vtanh.pop %v918
  %v920 = vsub.f32 0.0, %v919
  %922 = vrot.lane.b32.xlu0 %v920, 96
  %v923 = vpop.permute.xlu0 %922
  %v925 = vmul.f32 %v903, %v923
  %927 = vrot.lane.b32.xlu0 %v925, 32
  %v928 = vpop.permute.xlu0 %927
  %v930 = vadd.f32 %v919, %v928
  %v931 = vpack.c.bf16 %v930, %v930
  %933 = vrot.lane.b32.xlu0 %v931, 64
  %v934 = vpop.permute.xlu0 %933
  %v936 = vsel %vm50, %v934, 0
  %938 = vmatprep.subr.bf16.mxu0 0
  %939 = vmatpush1.bf16.msra.mxu0 %v855
  %940 = vmatprep.subr.bf16.mxu0 0
  %941 = vmatpush1.bf16.msra.mxu0 %v856
  %942 = vmatprep.subr.bf16.mxu0 0
  %943 = vmatpush1.bf16.msra.mxu0 0
  %944 = vmatprep.subr.bf16.mxu0 0
  %945 = vmatpush1.bf16.msra.mxu0 0
  %946 = vmatprep.subr.bf16.mxu0 0
  %947 = vmatpush1.bf16.msra.mxu0 0
  %948 = vmatprep.subr.bf16.mxu0 0
  %949 = vmatpush1.bf16.msra.mxu0 0
  %950 = vmatprep.subr.bf16.mxu0 0
  %951 = vmatpush1.bf16.msra.mxu0 0
  %952 = vmatprep.subr.bf16.mxu0 0
  %953 = vmatpush1.bf16.msra.mxu0 0
  %954 = vmatprep.subr.bf16.mxu0 0
  %955 = vmatpush1.bf16.msra.mxu0 0
  %956 = vmatprep.subr.bf16.mxu0 0
  %957 = vmatpush1.bf16.msra.mxu0 0
  %958 = vmatprep.subr.bf16.mxu0 0
  %959 = vmatpush1.bf16.msra.mxu0 0
  %960 = vmatprep.subr.bf16.mxu0 0
  %961 = vmatpush1.bf16.msra.mxu0 0
  %962 = vmatprep.subr.bf16.mxu0 0
  %963 = vmatpush1.bf16.msra.mxu0 0
  %964 = vmatprep.subr.bf16.mxu0 0
  %965 = vmatpush1.bf16.msra.mxu0 0
  %966 = vmatprep.subr.bf16.mxu0 0
  %967 = vmatpush1.bf16.msra.mxu0 0
  %968 = vmatprep.subr.bf16.mxu0 0
  %969 = vmatpush1.bf16.msra.mxu0 0
  %970 = vmatprep.mubr.bf16.mxu0 0
  %971 = vmatmul.mubr.bf16.gmra.mrb[0].mxu0 %v936
  %v972 = vpop.f32.mrb[0].mxu0
  %v973 = vadd.f32 0.0, %v972
  %v974 = vpop.f32.mrb[0].mxu0
  %v975 = vpop.f32.mrb[0].mxu0
  %v976 = vpop.f32.mrb[0].mxu0
  %977 = vdwg.mxu0
  %v979 = vrot.slane %v973, 6
  %v981 = vadd.f32 %v841, %v979
  %v982 = vmul.f32 %v981, 0.5
  %v983 = vtanh.pop %v982
  %v984 = vadd.f32 %v983, 1.0
  %v985 = vmul.f32 %v984, 0.5
  %v986 = vadd.f32 %v973, %v907
  %v988 = vrot.slane %v986, 6
  %989 = vrot.lane.b32.xlu0 %v988, 64
  %v990 = vpop.permute.xlu0 %989
  %v992 = vmul.f32 %v985, %v990
  %994 = vrot.lane.b32.xlu0 %v992, 64
  %v995 = vpop.permute.xlu0 %994
  %v997 = vadd.f32 %v841, %v995
  %v998 = vtanh.pop %v997
  %v1000 = vrot.slane %v998, 2
  %v1002 = vsub.f32 %v930, %v1000
  %v1004 = vrot.slane %v1002, 6
  %1005 = vrot.lane.b32.xlu0 %v1004, 96
  %v1006 = vpop.permute.xlu0 %1005
  %v1008 = vmul.f32 %v985, %v1006
  %1010 = vrot.lane.b32.xlu0 %v1008, 32
  %v1011 = vpop.permute.xlu0 %1010
  %v1013 = vadd.f32 %v998, %v1011
  %v1014 = vpack.c.bf16 %v1013, %v1013
  %v1016 = vrot.slane %v1014, 1
  %1017 = vrot.lane.b32.xlu0 %v1016, 64
  %v1018 = vpop.permute.xlu0 %1017
  %v1020 = vsel %vm50, %v1018, 0
  %1022 = vmatprep.subr.bf16.mxu0 0
  %1023 = vmatpush1.bf16.msra.mxu0 %v855
  %1024 = vmatprep.subr.bf16.mxu0 0
  %1025 = vmatpush1.bf16.msra.mxu0 %v856
  %1026 = vmatprep.subr.bf16.mxu0 0
  %1027 = vmatpush1.bf16.msra.mxu0 0
  %1028 = vmatprep.subr.bf16.mxu0 0
  %1029 = vmatpush1.bf16.msra.mxu0 0
  %1030 = vmatprep.subr.bf16.mxu0 0
  %1031 = vmatpush1.bf16.msra.mxu0 0
  %1032 = vmatprep.subr.bf16.mxu0 0
  %1033 = vmatpush1.bf16.msra.mxu0 0
  %1034 = vmatprep.subr.bf16.mxu0 0
  %1035 = vmatpush1.bf16.msra.mxu0 0
  %1036 = vmatprep.subr.bf16.mxu0 0
  %1037 = vmatpush1.bf16.msra.mxu0 0
  %1038 = vmatprep.subr.bf16.mxu0 0
  %1039 = vmatpush1.bf16.msra.mxu0 0
  %1040 = vmatprep.subr.bf16.mxu0 0
  %1041 = vmatpush1.bf16.msra.mxu0 0
  %1042 = vmatprep.subr.bf16.mxu0 0
  %1043 = vmatpush1.bf16.msra.mxu0 0
  %1044 = vmatprep.subr.bf16.mxu0 0
  %1045 = vmatpush1.bf16.msra.mxu0 0
  %1046 = vmatprep.subr.bf16.mxu0 0
  %1047 = vmatpush1.bf16.msra.mxu0 0
  %1048 = vmatprep.subr.bf16.mxu0 0
  %1049 = vmatpush1.bf16.msra.mxu0 0
  %1050 = vmatprep.subr.bf16.mxu0 0
  %1051 = vmatpush1.bf16.msra.mxu0 0
  %1052 = vmatprep.subr.bf16.mxu0 0
  %1053 = vmatpush1.bf16.msra.mxu0 0
  %1054 = vmatprep.mubr.bf16.mxu0 0
  %1055 = vmatmul.mubr.bf16.gmra.mrb[0].mxu0 %v1020
  %v1056 = vpop.f32.mrb[0].mxu0
  %v1057 = vadd.f32 0.0, %v1056
  %v1058 = vpop.f32.mrb[0].mxu0
  %v1059 = vpop.f32.mrb[0].mxu0
  %v1060 = vpop.f32.mrb[0].mxu0
  %1061 = vdwg.mxu0
  %v1063 = vrot.slane %v1057, 4
  %v1065 = vadd.f32 %v841, %v1063
  %v1066 = vmul.f32 %v1065, 0.5
  %v1067 = vtanh.pop %v1066
  %v1068 = vadd.f32 %v1067, 1.0
  %v1069 = vmul.f32 %v1068, 0.5
  %v1070 = vadd.f32 %v1057, %v907
  %v1072 = vrot.slane %v1070, 4
  %1073 = vrot.lane.b32.xlu0 %v1072, 64
  %v1074 = vpop.permute.xlu0 %1073
  %v1076 = vmul.f32 %v1069, %v1074
  %1078 = vrot.lane.b32.xlu0 %v1076, 64
  %v1079 = vpop.permute.xlu0 %1078
  %v1081 = vadd.f32 %v841, %v1079
  %v1082 = vtanh.pop %v1081
  %v1084 = vrot.slane %v1082, 2
  %v1086 = vsub.f32 %v1013, %v1084
  %v1088 = vrot.slane %v1086, 6
  %1089 = vrot.lane.b32.xlu0 %v1088, 96
  %v1090 = vpop.permute.xlu0 %1089
  %v1092 = vmul.f32 %v1069, %v1090
  %1094 = vrot.lane.b32.xlu0 %v1092, 32
  %v1095 = vpop.permute.xlu0 %1094
  %v1097 = vadd.f32 %v1082, %v1095
  %v1098 = vpack.c.bf16 %v1097, %v1097
  %v1100 = vrot.slane %v1098, 2
  %1101 = vrot.lane.b32.xlu0 %v1100, 64
  %v1102 = vpop.permute.xlu0 %1101
  %v1104 = vsel %vm50, %v1102, 0
  %1106 = vmatprep.subr.bf16.mxu0 0
  %1107 = vmatpush1.bf16.msra.mxu0 %v855
  %1108 = vmatprep.subr.bf16.mxu0 0
  %1109 = vmatpush1.bf16.msra.mxu0 %v856
  %1110 = vmatprep.subr.bf16.mxu0 0
  %1111 = vmatpush1.bf16.msra.mxu0 0
  %1112 = vmatprep.subr.bf16.mxu0 0
  %1113 = vmatpush1.bf16.msra.mxu0 0
  %1114 = vmatprep.subr.bf16.mxu0 0
  %1115 = vmatpush1.bf16.msra.mxu0 0
  %1116 = vmatprep.subr.bf16.mxu0 0
  %1117 = vmatpush1.bf16.msra.mxu0 0
  %1118 = vmatprep.subr.bf16.mxu0 0
  %1119 = vmatpush1.bf16.msra.mxu0 0
  %1120 = vmatprep.subr.bf16.mxu0 0
  %1121 = vmatpush1.bf16.msra.mxu0 0
  %1122 = vmatprep.subr.bf16.mxu0 0
  %1123 = vmatpush1.bf16.msra.mxu0 0
  %1124 = vmatprep.subr.bf16.mxu0 0
  %1125 = vmatpush1.bf16.msra.mxu0 0
  %1126 = vmatprep.subr.bf16.mxu0 0
  %1127 = vmatpush1.bf16.msra.mxu0 0
  %1128 = vmatprep.subr.bf16.mxu0 0
  %1129 = vmatpush1.bf16.msra.mxu0 0
  %1130 = vmatprep.subr.bf16.mxu0 0
  %1131 = vmatpush1.bf16.msra.mxu0 0
  %1132 = vmatprep.subr.bf16.mxu0 0
  %1133 = vmatpush1.bf16.msra.mxu0 0
  %1134 = vmatprep.subr.bf16.mxu0 0
  %1135 = vmatpush1.bf16.msra.mxu0 0
  %1136 = vmatprep.subr.bf16.mxu0 0
  %1137 = vmatpush1.bf16.msra.mxu0 0
  %1138 = vmatprep.mubr.bf16.mxu0 0
  %1139 = vmatmul.mubr.bf16.gmra.mrb[0].mxu0 %v1104
  %v1140 = vpop.f32.mrb[0].mxu0
  %v1141 = vadd.f32 0.0, %v1140
  %v1142 = vpop.f32.mrb[0].mxu0
  %v1143 = vpop.f32.mrb[0].mxu0
  %v1144 = vpop.f32.mrb[0].mxu0
  %1145 = vdwg.mxu0
  %v1147 = vrot.slane %v1141, 2
  %v1149 = vadd.f32 %v841, %v1147
  %v1150 = vmul.f32 %v1149, 0.5
  %v1151 = vtanh.pop %v1150
  %v1152 = vadd.f32 %v1151, 1.0
  %v1153 = vmul.f32 %v1152, 0.5
  %v1154 = vadd.f32 %v1141, %v907
  %v1156 = vrot.slane %v1154, 2
  %1157 = vrot.lane.b32.xlu0 %v1156, 64
  %v1158 = vpop.permute.xlu0 %1157
  %v1160 = vmul.f32 %v1153, %v1158
  %1162 = vrot.lane.b32.xlu0 %v1160, 64
  %v1163 = vpop.permute.xlu0 %1162
  %v1165 = vadd.f32 %v841, %v1163
  %v1166 = vtanh.pop %v1165
  %v1168 = vrot.slane %v1166, 2
  %v1170 = vsub.f32 %v1097, %v1168
  %v1172 = vrot.slane %v1170, 6
  %1173 = vrot.lane.b32.xlu0 %v1172, 96
  %v1174 = vpop.permute.xlu0 %1173
  %v1176 = vmul.f32 %v1153, %v1174
  %1178 = vrot.lane.b32.xlu0 %v1176, 32
  %v1179 = vpop.permute.xlu0 %1178
  %v1181 = vadd.f32 %v1166, %v1179
  %v1182 = vpack.c.bf16 %v1181, %v1181
  %v1184 = vrot.slane %v1182, 3
  %1185 = vrot.lane.b32.xlu0 %v1184, 64
  %v1186 = vpop.permute.xlu0 %1185
  %v1188 = vsel %vm50, %v1186, 0
  %1190 = vmatprep.subr.bf16.mxu0 0
  %1191 = vmatpush1.bf16.msra.mxu0 %v855
  %1192 = vmatprep.subr.bf16.mxu0 0
  %1193 = vmatpush1.bf16.msra.mxu0 %v856
  %1194 = vmatprep.subr.bf16.mxu0 0
  %1195 = vmatpush1.bf16.msra.mxu0 0
  %1196 = vmatprep.subr.bf16.mxu0 0
  %1197 = vmatpush1.bf16.msra.mxu0 0
  %1198 = vmatprep.subr.bf16.mxu0 0
  %1199 = vmatpush1.bf16.msra.mxu0 0
  %1200 = vmatprep.subr.bf16.mxu0 0
  %1201 = vmatpush1.bf16.msra.mxu0 0
  %1202 = vmatprep.subr.bf16.mxu0 0
  %1203 = vmatpush1.bf16.msra.mxu0 0
  %1204 = vmatprep.subr.bf16.mxu0 0
  %1205 = vmatpush1.bf16.msra.mxu0 0
  %1206 = vmatprep.subr.bf16.mxu0 0
  %1207 = vmatpush1.bf16.msra.mxu0 0
  %1208 = vmatprep.subr.bf16.mxu0 0
  %1209 = vmatpush1.bf16.msra.mxu0 0
  %1210 = vmatprep.subr.bf16.mxu0 0
  %1211 = vmatpush1.bf16.msra.mxu0 0
  %1212 = vmatprep.subr.bf16.mxu0 0
  %1213 = vmatpush1.bf16.msra.mxu0 0
  %1214 = vmatprep.subr.bf16.mxu0 0
  %1215 = vmatpush1.bf16.msra.mxu0 0
  %1216 = vmatprep.subr.bf16.mxu0 0
  %1217 = vmatpush1.bf16.msra.mxu0 0
  %1218 = vmatprep.subr.bf16.mxu0 0
  %1219 = vmatpush1.bf16.msra.mxu0 0
  %1220 = vmatprep.subr.bf16.mxu0 0
  %1221 = vmatpush1.bf16.msra.mxu0 0
  %1222 = vmatprep.mubr.bf16.mxu0 0
  %1223 = vmatmul.mubr.bf16.gmra.mrb[0].mxu0 %v1188
  %v1224 = vpop.f32.mrb[0].mxu0
  %v1225 = vadd.f32 0.0, %v1224
  %v1226 = vpop.f32.mrb[0].mxu0
  %v1227 = vpop.f32.mrb[0].mxu0
  %v1228 = vpop.f32.mrb[0].mxu0
  %1229 = vdwg.mxu0
  %v1230 = vadd.f32 %v844, %v1225
  %v1231 = vmul.f32 %v1230, 0.5
  %v1232 = vtanh.pop %v1231
  %v1233 = vadd.f32 %v1232, 1.0
  %v1234 = vmul.f32 %v1233, 0.5
  %v1235 = vadd.f32 %v1225, %v907
  %1237 = vrot.lane.b32.xlu0 %v1235, 64
  %v1238 = vpop.permute.xlu0 %1237
  %v1240 = vmul.f32 %v1234, %v1238
  %1242 = vrot.lane.b32.xlu0 %v1240, 64
  %v1243 = vpop.permute.xlu0 %1242
  %v1245 = vadd.f32 %v844, %v1243
  %v1246 = vtanh.pop %v1245
  %v1248 = vrot.slane %v1246, 2
  %v1250 = vsub.f32 %v1181, %v1248
  %v1252 = vrot.slane %v1250, 6
  %1253 = vrot.lane.b32.xlu0 %v1252, 96
  %v1254 = vpop.permute.xlu0 %1253
  %v1256 = vmul.f32 %v1234, %v1254
  %1258 = vrot.lane.b32.xlu0 %v1256, 32
  %v1259 = vpop.permute.xlu0 %1258
  %v1261 = vadd.f32 %v1246, %v1259
  %v1262 = vpack.c.bf16 %v1261, %v1261
  %1264 = vrot.lane.b32.xlu0 %v1262, 64
  %v1265 = vpop.permute.xlu0 %1264
  %v1267 = vsel %vm50, %v1265, 0
  %1269 = vmatprep.subr.bf16.mxu0 0
  %1270 = vmatpush1.bf16.msra.mxu0 %v855
  %1271 = vmatprep.subr.bf16.mxu0 0
  %1272 = vmatpush1.bf16.msra.mxu0 %v856
  %1273 = vmatprep.subr.bf16.mxu0 0
  %1274 = vmatpush1.bf16.msra.mxu0 0
  %1275 = vmatprep.subr.bf16.mxu0 0
  %1276 = vmatpush1.bf16.msra.mxu0 0
  %1277 = vmatprep.subr.bf16.mxu0 0
  %1278 = vmatpush1.bf16.msra.mxu0 0
  %1279 = vmatprep.subr.bf16.mxu0 0
  %1280 = vmatpush1.bf16.msra.mxu0 0
  %1281 = vmatprep.subr.bf16.mxu0 0
  %1282 = vmatpush1.bf16.msra.mxu0 0
  %1283 = vmatprep.subr.bf16.mxu0 0
  %1284 = vmatpush1.bf16.msra.mxu0 0
  %1285 = vmatprep.subr.bf16.mxu0 0
  %1286 = vmatpush1.bf16.msra.mxu0 0
  %1287 = vmatprep.subr.bf16.mxu0 0
  %1288 = vmatpush1.bf16.msra.mxu0 0
  %1289 = vmatprep.subr.bf16.mxu0 0
  %1290 = vmatpush1.bf16.msra.mxu0 0
  %1291 = vmatprep.subr.bf16.mxu0 0
  %1292 = vmatpush1.bf16.msra.mxu0 0
  %1293 = vmatprep.subr.bf16.mxu0 0
  %1294 = vmatpush1.bf16.msra.mxu0 0
  %1295 = vmatprep.subr.bf16.mxu0 0
  %1296 = vmatpush1.bf16.msra.mxu0 0
  %1297 = vmatprep.subr.bf16.mxu0 0
  %1298 = vmatpush1.bf16.msra.mxu0 0
  %1299 = vmatprep.subr.bf16.mxu0 0
  %1300 = vmatpush1.bf16.msra.mxu0 0
  %1301 = vmatprep.mubr.bf16.mxu0 0
  %1302 = vmatmul.mubr.bf16.gmra.mrb[0].mxu0 %v1267
  %v1303 = vpop.f32.mrb[0].mxu0
  %v1304 = vadd.f32 0.0, %v1303
  %v1305 = vpop.f32.mrb[0].mxu0
  %v1306 = vpop.f32.mrb[0].mxu0
  %v1307 = vpop.f32.mrb[0].mxu0
  %1308 = vdwg.mxu0
  %v1310 = vrot.slane %v1304, 6
  %v1312 = vadd.f32 %v844, %v1310
  %v1313 = vmul.f32 %v1312, 0.5
  %v1314 = vtanh.pop %v1313
  %v1315 = vadd.f32 %v1314, 1.0
  %v1316 = vmul.f32 %v1315, 0.5
  %v1317 = vadd.f32 %v1304, %v907
  %v1319 = vrot.slane %v1317, 6
  %1320 = vrot.lane.b32.xlu0 %v1319, 64
  %v1321 = vpop.permute.xlu0 %1320
  %v1323 = vmul.f32 %v1316, %v1321
  %1325 = vrot.lane.b32.xlu0 %v1323, 64
  %v1326 = vpop.permute.xlu0 %1325
  %v1328 = vadd.f32 %v844, %v1326
  %v1329 = vtanh.pop %v1328
  %v1331 = vrot.slane %v1329, 2
  %v1333 = vsub.f32 %v1261, %v1331
  %v1335 = vrot.slane %v1333, 6
  %1336 = vrot.lane.b32.xlu0 %v1335, 96
  %v1337 = vpop.permute.xlu0 %1336
  %v1339 = vmul.f32 %v1316, %v1337
  %1341 = vrot.lane.b32.xlu0 %v1339, 32
  %v1342 = vpop.permute.xlu0 %1341
  %v1344 = vadd.f32 %v1329, %v1342
  %v1345 = vpack.c.bf16 %v1344, %v1344
  %v1347 = vrot.slane %v1345, 1
  %1348 = vrot.lane.b32.xlu0 %v1347, 64
  %v1349 = vpop.permute.xlu0 %1348
  %v1351 = vsel %vm50, %v1349, 0
  %1353 = vmatprep.subr.bf16.mxu0 0
  %1354 = vmatpush1.bf16.msra.mxu0 %v855
  %1355 = vmatprep.subr.bf16.mxu0 0
  %1356 = vmatpush1.bf16.msra.mxu0 %v856
  %1357 = vmatprep.subr.bf16.mxu0 0
  %1358 = vmatpush1.bf16.msra.mxu0 0
  %1359 = vmatprep.subr.bf16.mxu0 0
  %1360 = vmatpush1.bf16.msra.mxu0 0
  %1361 = vmatprep.subr.bf16.mxu0 0
  %1362 = vmatpush1.bf16.msra.mxu0 0
  %1363 = vmatprep.subr.bf16.mxu0 0
  %1364 = vmatpush1.bf16.msra.mxu0 0
  %1365 = vmatprep.subr.bf16.mxu0 0
  %1366 = vmatpush1.bf16.msra.mxu0 0
  %1367 = vmatprep.subr.bf16.mxu0 0
  %1368 = vmatpush1.bf16.msra.mxu0 0
  %1369 = vmatprep.subr.bf16.mxu0 0
  %1370 = vmatpush1.bf16.msra.mxu0 0
  %1371 = vmatprep.subr.bf16.mxu0 0
  %1372 = vmatpush1.bf16.msra.mxu0 0
  %1373 = vmatprep.subr.bf16.mxu0 0
  %1374 = vmatpush1.bf16.msra.mxu0 0
  %1375 = vmatprep.subr.bf16.mxu0 0
  %1376 = vmatpush1.bf16.msra.mxu0 0
  %1377 = vmatprep.subr.bf16.mxu0 0
  %1378 = vmatpush1.bf16.msra.mxu0 0
  %1379 = vmatprep.subr.bf16.mxu0 0
  %1380 = vmatpush1.bf16.msra.mxu0 0
  %1381 = vmatprep.subr.bf16.mxu0 0
  %1382 = vmatpush1.bf16.msra.mxu0 0
  %1383 = vmatprep.subr.bf16.mxu0 0
  %1384 = vmatpush1.bf16.msra.mxu0 0
  %1385 = vmatprep.mubr.bf16.mxu0 0
  %1386 = vmatmul.mubr.bf16.gmra.mrb[0].mxu0 %v1351
  %v1387 = vpop.f32.mrb[0].mxu0
  %v1388 = vadd.f32 0.0, %v1387
  %v1389 = vpop.f32.mrb[0].mxu0
  %v1390 = vpop.f32.mrb[0].mxu0
  %v1391 = vpop.f32.mrb[0].mxu0
  %1392 = vdwg.mxu0
  %v1394 = vrot.slane %v1388, 4
  %v1396 = vadd.f32 %v844, %v1394
  %v1397 = vmul.f32 %v1396, 0.5
  %v1398 = vtanh.pop %v1397
  %v1399 = vadd.f32 %v1398, 1.0
  %v1400 = vmul.f32 %v1399, 0.5
  %v1401 = vadd.f32 %v1388, %v907
  %v1403 = vrot.slane %v1401, 4
  %1404 = vrot.lane.b32.xlu0 %v1403, 64
  %v1405 = vpop.permute.xlu0 %1404
  %v1407 = vmul.f32 %v1400, %v1405
  %1409 = vrot.lane.b32.xlu0 %v1407, 64
  %v1410 = vpop.permute.xlu0 %1409
  %v1412 = vadd.f32 %v844, %v1410
  %v1413 = vtanh.pop %v1412
  %v1415 = vrot.slane %v1413, 2
  %v1417 = vsub.f32 %v1344, %v1415
  %v1419 = vrot.slane %v1417, 6
  %1420 = vrot.lane.b32.xlu0 %v1419, 96
  %v1421 = vpop.permute.xlu0 %1420
  %v1423 = vmul.f32 %v1400, %v1421
  %1425 = vrot.lane.b32.xlu0 %v1423, 32
  %v1426 = vpop.permute.xlu0 %1425
  %v1428 = vadd.f32 %v1413, %v1426
  %v1429 = vpack.c.bf16 %v1428, %v1428
  %v1431 = vrot.slane %v1429, 2
  %1432 = vrot.lane.b32.xlu0 %v1431, 64
  %v1433 = vpop.permute.xlu0 %1432
  %v1435 = vsel %vm50, %v1433, 0
  %1437 = vmatprep.subr.bf16.mxu0 0
  %1438 = vmatpush1.bf16.msra.mxu0 %v855
  %1439 = vmatprep.subr.bf16.mxu0 0
  %1440 = vmatpush1.bf16.msra.mxu0 %v856
  %1441 = vmatprep.subr.bf16.mxu0 0
  %1442 = vmatpush1.bf16.msra.mxu0 0
  %1443 = vmatprep.subr.bf16.mxu0 0
  %1444 = vmatpush1.bf16.msra.mxu0 0
  %1445 = vmatprep.subr.bf16.mxu0 0
  %1446 = vmatpush1.bf16.msra.mxu0 0
  %1447 = vmatprep.subr.bf16.mxu0 0
  %1448 = vmatpush1.bf16.msra.mxu0 0
  %1449 = vmatprep.subr.bf16.mxu0 0
  %1450 = vmatpush1.bf16.msra.mxu0 0
  %1451 = vmatprep.subr.bf16.mxu0 0
  %1452 = vmatpush1.bf16.msra.mxu0 0
  %1453 = vmatprep.subr.bf16.mxu0 0
  %1454 = vmatpush1.bf16.msra.mxu0 0
  %1455 = vmatprep.subr.bf16.mxu0 0
  %1456 = vmatpush1.bf16.msra.mxu0 0
  %1457 = vmatprep.subr.bf16.mxu0 0
  %1458 = vmatpush1.bf16.msra.mxu0 0
  %1459 = vmatprep.subr.bf16.mxu0 0
  %1460 = vmatpush1.bf16.msra.mxu0 0
  %1461 = vmatprep.subr.bf16.mxu0 0
  %1462 = vmatpush1.bf16.msra.mxu0 0
  %1463 = vmatprep.subr.bf16.mxu0 0
  %1464 = vmatpush1.bf16.msra.mxu0 0
  %1465 = vmatprep.subr.bf16.mxu0 0
  %1466 = vmatpush1.bf16.msra.mxu0 0
  %1467 = vmatprep.subr.bf16.mxu0 0
  %1468 = vmatpush1.bf16.msra.mxu0 0
  %1469 = vmatprep.mubr.bf16.mxu0 0
  %1470 = vmatmul.mubr.bf16.gmra.mrb[0].mxu0 %v1435
  %v1471 = vpop.f32.mrb[0].mxu0
  %v1472 = vadd.f32 0.0, %v1471
  %v1473 = vpop.f32.mrb[0].mxu0
  %v1474 = vpop.f32.mrb[0].mxu0
  %v1475 = vpop.f32.mrb[0].mxu0
  %1476 = vdwg.mxu0
  %v1478 = vrot.slane %v1472, 2
  %v1480 = vadd.f32 %v844, %v1478
  %v1481 = vmul.f32 %v1480, 0.5
  %v1482 = vtanh.pop %v1481
  %v1483 = vadd.f32 %v1482, 1.0
  %v1484 = vmul.f32 %v1483, 0.5
  %v1485 = vadd.f32 %v1472, %v907
  %v1487 = vrot.slane %v1485, 2
  %1488 = vrot.lane.b32.xlu0 %v1487, 64
  %v1489 = vpop.permute.xlu0 %1488
  %v1491 = vmul.f32 %v1484, %v1489
  %1493 = vrot.lane.b32.xlu0 %v1491, 64
  %v1494 = vpop.permute.xlu0 %1493
  %v1496 = vadd.f32 %v844, %v1494
  %v1497 = vtanh.pop %v1496
  %v1499 = vrot.slane %v1497, 2
  %v1501 = vsub.f32 %v1428, %v1499
  %v1503 = vrot.slane %v1501, 6
  %1504 = vrot.lane.b32.xlu0 %v1503, 96
  %v1505 = vpop.permute.xlu0 %1504
  %v1507 = vmul.f32 %v1484, %v1505
  %1509 = vrot.lane.b32.xlu0 %v1507, 32
  %v1510 = vpop.permute.xlu0 %1509
  %v1512 = vadd.f32 %v1497, %v1510
  %v1513 = vld [vmem:[%s1 + $0x40] sm:$0xf]
  %v1514 = vld [vmem:[%s1 + $0x44] sm:$0xf]
  %v1515 = vld [vmem:[%s1 + $0x48] sm:$0xf]
  %v1516 = vld [vmem:[%s1 + $0x4c] sm:$0xf]
  %v1517 = vld [vmem:[%s1 + $0x50] sm:$0xf]
  %v1518 = vld [vmem:[%s1 + $0x54] sm:$0xf]
  %v1519 = vld [vmem:[%s1 + $0x58] sm:$0xf]
  %v1520 = vld [vmem:[%s1 + $0x5c] sm:$0xf]
  %v1521 = vld [vmem:[%s2 + $0x4] sm:$0x1]
  %v1522 = vld [vmem:[%s2 + $0x5] sm:$0x1]
  %v1523 = vpack.c.bf16 %v1512, %v1512
  %v1524 = vlaneseq
  %v1525 = vshrl.u32 %v1524, 7
  %v1526 = vsub.s32 0, %v1525
  %v1527 = vrot.slane %v1521, %v1526
  %v1529 = vrot.slane %v1523, 3
  %1530 = vrot.lane.b32.xlu0 %v1529, 64
  %v1531 = vpop.permute.xlu0 %1530
  %v1536 = vunpack.c.l.b16 %v1513
  %v1537 = vunpack.c.l.b16 %v1514
  %v1538 = vunpack.c.l.b16 %v1515
  %v1539 = vunpack.c.l.b16 %v1516
  %v1540 = vpack.c.b16 %v1537, %v1536
  %v1541 = vpack.c.b16 %v1539, %v1538
  %v1545 = vsel %vm50, %v1531, 0
  %1547 = vmatprep.subr.bf16.mxu0 0
  %1548 = vmatpush1.bf16.msra.mxu0 %v1540
  %1549 = vmatprep.subr.bf16.mxu0 0
  %1550 = vmatpush1.bf16.msra.mxu0 %v1541
  %1551 = vmatprep.subr.bf16.mxu0 0
  %1552 = vmatpush1.bf16.msra.mxu0 0
  %1553 = vmatprep.subr.bf16.mxu0 0
  %1554 = vmatpush1.bf16.msra.mxu0 0
  %1555 = vmatprep.subr.bf16.mxu0 0
  %1556 = vmatpush1.bf16.msra.mxu0 0
  %1557 = vmatprep.subr.bf16.mxu0 0
  %1558 = vmatpush1.bf16.msra.mxu0 0
  %1559 = vmatprep.subr.bf16.mxu0 0
  %1560 = vmatpush1.bf16.msra.mxu0 0
  %1561 = vmatprep.subr.bf16.mxu0 0
  %1562 = vmatpush1.bf16.msra.mxu0 0
  %1563 = vmatprep.subr.bf16.mxu0 0
  %1564 = vmatpush1.bf16.msra.mxu0 0
  %1565 = vmatprep.subr.bf16.mxu0 0
  %1566 = vmatpush1.bf16.msra.mxu0 0
  %1567 = vmatprep.subr.bf16.mxu0 0
  %1568 = vmatpush1.bf16.msra.mxu0 0
  %1569 = vmatprep.subr.bf16.mxu0 0
  %1570 = vmatpush1.bf16.msra.mxu0 0
  %1571 = vmatprep.subr.bf16.mxu0 0
  %1572 = vmatpush1.bf16.msra.mxu0 0
  %1573 = vmatprep.subr.bf16.mxu0 0
  %1574 = vmatpush1.bf16.msra.mxu0 0
  %1575 = vmatprep.subr.bf16.mxu0 0
  %1576 = vmatpush1.bf16.msra.mxu0 0
  %1577 = vmatprep.subr.bf16.mxu0 0
  %1578 = vmatpush1.bf16.msra.mxu0 0
  %1579 = vmatprep.mubr.bf16.mxu0 0
  %1580 = vmatmul.mubr.bf16.gmra.mrb[0].mxu0 %v1545
  %v1581 = vpop.f32.mrb[0].mxu0
  %v1582 = vadd.f32 %v1527, %v1581
  %v1583 = vpop.f32.mrb[0].mxu0
  %v1584 = vpop.f32.mrb[0].mxu0
  %v1585 = vpop.f32.mrb[0].mxu0
  %1586 = vdwg.mxu0
  %v1587 = vpack.c.bf16 %v763, %v763
  %v1589 = vrot.slane %v1587, 3
  %1590 = vrot.lane.b32.xlu0 %v1589, 64
  %v1591 = vpop.permute.xlu0 %1590
  %v1596 = vunpack.c.l.b16 %v1517
  %v1597 = vunpack.c.l.b16 %v1518
  %v1598 = vunpack.c.l.b16 %v1519
  %v1599 = vunpack.c.l.b16 %v1520
  %v1600 = vpack.c.b16 %v1597, %v1596
  %v1601 = vpack.c.b16 %v1599, %v1598
  %v1605 = vsel %vm50, %v1591, 0
  %1607 = vmatprep.subr.bf16.mxu0 0
  %1608 = vmatpush1.bf16.msra.mxu0 %v1600
  %1609 = vmatprep.subr.bf16.mxu0 0
  %1610 = vmatpush1.bf16.msra.mxu0 %v1601
  %1611 = vmatprep.subr.bf16.mxu0 0
  %1612 = vmatpush1.bf16.msra.mxu0 0
  %1613 = vmatprep.subr.bf16.mxu0 0
  %1614 = vmatpush1.bf16.msra.mxu0 0
  %1615 = vmatprep.subr.bf16.mxu0 0
  %1616 = vmatpush1.bf16.msra.mxu0 0
  %1617 = vmatprep.subr.bf16.mxu0 0
  %1618 = vmatpush1.bf16.msra.mxu0 0
  %1619 = vmatprep.subr.bf16.mxu0 0
  %1620 = vmatpush1.bf16.msra.mxu0 0
  %1621 = vmatprep.subr.bf16.mxu0 0
  %1622 = vmatpush1.bf16.msra.mxu0 0
  %1623 = vmatprep.subr.bf16.mxu0 0
  %1624 = vmatpush1.bf16.msra.mxu0 0
  %1625 = vmatprep.subr.bf16.mxu0 0
  %1626 = vmatpush1.bf16.msra.mxu0 0
  %1627 = vmatprep.subr.bf16.mxu0 0
  %1628 = vmatpush1.bf16.msra.mxu0 0
  %1629 = vmatprep.subr.bf16.mxu0 0
  %1630 = vmatpush1.bf16.msra.mxu0 0
  %1631 = vmatprep.subr.bf16.mxu0 0
  %1632 = vmatpush1.bf16.msra.mxu0 0
  %1633 = vmatprep.subr.bf16.mxu0 0
  %1634 = vmatpush1.bf16.msra.mxu0 0
  %1635 = vmatprep.subr.bf16.mxu0 0
  %1636 = vmatpush1.bf16.msra.mxu0 0
  %1637 = vmatprep.subr.bf16.mxu0 0
  %1638 = vmatpush1.bf16.msra.mxu0 0
  %1639 = vmatprep.mubr.bf16.mxu0 0
  %1640 = vmatmul.mubr.bf16.gmra.mrb[0].mxu0 %v1605
  %v1641 = vpop.f32.mrb[0].mxu0
  %v1642 = vadd.f32 0.0, %v1641
  %v1643 = vpop.f32.mrb[0].mxu0
  %v1644 = vpop.f32.mrb[0].mxu0
  %v1645 = vpop.f32.mrb[0].mxu0
  %1646 = vdwg.mxu0
  %v1647 = vadd.f32 %v1582, %v1642
  %v1648 = vmul.f32 %v1647, 0.5
  %v1649 = vtanh.pop %v1648
  %v1650 = vadd.f32 %v1649, 1.0
  %v1651 = vmul.f32 %v1650, 0.5
  %v1652 = vlaneseq
  %v1653 = vshrl.u32 %v1652, 7
  %v1654 = vsub.s32 0, %v1653
  %v1655 = vrot.slane %v1522, %v1654
  %v1656 = vadd.f32 %v1642, %v1655
  %1658 = vrot.lane.b32.xlu0 %v1656, 64
  %v1659 = vpop.permute.xlu0 %1658
  %v1661 = vmul.f32 %v1651, %v1659
  %1663 = vrot.lane.b32.xlu0 %v1661, 64
  %v1664 = vpop.permute.xlu0 %1663
  %v1666 = vadd.f32 %v1582, %v1664
  %v1667 = vtanh.pop %v1666
  %v1669 = vrot.slane %v1667, 2
  %v1671 = vsub.f32 %v763, %v1669
  %v1673 = vrot.slane %v1671, 6
  %1674 = vrot.lane.b32.xlu0 %v1673, 96
  %v1675 = vpop.permute.xlu0 %1674
  %v1677 = vmul.f32 %v1651, %v1675
  %1679 = vrot.lane.b32.xlu0 %v1677, 32
  %v1680 = vpop.permute.xlu0 %1679
  %v1682 = vadd.f32 %v1667, %v1680
  %v1683 = vpack.c.bf16 %v1682, %v1682
  %1685 = vrot.lane.b32.xlu0 %v1683, 64
  %v1686 = vpop.permute.xlu0 %1685
  %v1688 = vsel %vm50, %v1686, 0
  %1690 = vmatprep.subr.bf16.mxu0 0
  %1691 = vmatpush1.bf16.msra.mxu0 %v1600
  %1692 = vmatprep.subr.bf16.mxu0 0
  %1693 = vmatpush1.bf16.msra.mxu0 %v1601
  %1694 = vmatprep.subr.bf16.mxu0 0
  %1695 = vmatpush1.bf16.msra.mxu0 0
  %1696 = vmatprep.subr.bf16.mxu0 0
  %1697 = vmatpush1.bf16.msra.mxu0 0
  %1698 = vmatprep.subr.bf16.mxu0 0
  %1699 = vmatpush1.bf16.msra.mxu0 0
  %1700 = vmatprep.subr.bf16.mxu0 0
  %1701 = vmatpush1.bf16.msra.mxu0 0
  %1702 = vmatprep.subr.bf16.mxu0 0
  %1703 = vmatpush1.bf16.msra.mxu0 0
  %1704 = vmatprep.subr.bf16.mxu0 0
  %1705 = vmatpush1.bf16.msra.mxu0 0
  %1706 = vmatprep.subr.bf16.mxu0 0
  %1707 = vmatpush1.bf16.msra.mxu0 0
  %1708 = vmatprep.subr.bf16.mxu0 0
  %1709 = vmatpush1.bf16.msra.mxu0 0
  %1710 = vmatprep.subr.bf16.mxu0 0
  %1711 = vmatpush1.bf16.msra.mxu0 0
  %1712 = vmatprep.subr.bf16.mxu0 0
  %1713 = vmatpush1.bf16.msra.mxu0 0
  %1714 = vmatprep.subr.bf16.mxu0 0
  %1715 = vmatpush1.bf16.msra.mxu0 0
  %1716 = vmatprep.subr.bf16.mxu0 0
  %1717 = vmatpush1.bf16.msra.mxu0 0
  %1718 = vmatprep.subr.bf16.mxu0 0
  %1719 = vmatpush1.bf16.msra.mxu0 0
  %1720 = vmatprep.subr.bf16.mxu0 0
  %1721 = vmatpush1.bf16.msra.mxu0 0
  %1722 = vmatprep.mubr.bf16.mxu0 0
  %1723 = vmatmul.mubr.bf16.gmra.mrb[0].mxu0 %v1688
  %v1724 = vpop.f32.mrb[0].mxu0
  %v1725 = vadd.f32 0.0, %v1724
  %v1726 = vpop.f32.mrb[0].mxu0
  %v1727 = vpop.f32.mrb[0].mxu0
  %v1728 = vpop.f32.mrb[0].mxu0
  %1729 = vdwg.mxu0
  %v1730 = vadd.f32 %v1582, %v1725
  %v1731 = vmul.f32 %v1730, 0.5
  %v1732 = vtanh.pop %v1731
  %v1733 = vadd.f32 %v1732, 1.0
  %v1734 = vmul.f32 %v1733, 0.5
  %v1735 = vadd.f32 %v1725, %v1655
  %1737 = vrot.lane.b32.xlu0 %v1735, 64
  %v1738 = vpop.permute.xlu0 %1737
  %v1740 = vmul.f32 %v1734, %v1738
  %1742 = vrot.lane.b32.xlu0 %v1740, 64
  %v1743 = vpop.permute.xlu0 %1742
  %v1745 = vadd.f32 %v1582, %v1743
  %v1746 = vtanh.pop %v1745
  %v1747 = vsub.f32 %v1682, %v1746
  %1749 = vrot.lane.b32.xlu0 %v1747, 96
  %v1750 = vpop.permute.xlu0 %1749
  %v1752 = vmul.f32 %v1734, %v1750
  %1754 = vrot.lane.b32.xlu0 %v1752, 32
  %v1755 = vpop.permute.xlu0 %1754
  %v1757 = vadd.f32 %v1746, %v1755
  %v1758 = vpack.c.bf16 %v1757, %v1757
  %1760 = vrot.lane.b32.xlu0 %v1758, 64
  %v1761 = vpop.permute.xlu0 %1760
  %v1763 = vsel %vm50, %v1761, 0
  %1765 = vmatprep.subr.bf16.mxu0 0
  %1766 = vmatpush1.bf16.msra.mxu0 %v1600
  %1767 = vmatprep.subr.bf16.mxu0 0
  %1768 = vmatpush1.bf16.msra.mxu0 %v1601
  %1769 = vmatprep.subr.bf16.mxu0 0
  %1770 = vmatpush1.bf16.msra.mxu0 0
  %1771 = vmatprep.subr.bf16.mxu0 0
  %1772 = vmatpush1.bf16.msra.mxu0 0
  %1773 = vmatprep.subr.bf16.mxu0 0
  %1774 = vmatpush1.bf16.msra.mxu0 0
  %1775 = vmatprep.subr.bf16.mxu0 0
  %1776 = vmatpush1.bf16.msra.mxu0 0
  %1777 = vmatprep.subr.bf16.mxu0 0
  %1778 = vmatpush1.bf16.msra.mxu0 0
  %1779 = vmatprep.subr.bf16.mxu0 0
  %1780 = vmatpush1.bf16.msra.mxu0 0
  %1781 = vmatprep.subr.bf16.mxu0 0
  %1782 = vmatpush1.bf16.msra.mxu0 0
  %1783 = vmatprep.subr.bf16.mxu0 0
  %1784 = vmatpush1.bf16.msra.mxu0 0
  %1785 = vmatprep.subr.bf16.mxu0 0
  %1786 = vmatpush1.bf16.msra.mxu0 0
  %1787 = vmatprep.subr.bf16.mxu0 0
  %1788 = vmatpush1.bf16.msra.mxu0 0
  %1789 = vmatprep.subr.bf16.mxu0 0
  %1790 = vmatpush1.bf16.msra.mxu0 0
  %1791 = vmatprep.subr.bf16.mxu0 0
  %1792 = vmatpush1.bf16.msra.mxu0 0
  %1793 = vmatprep.subr.bf16.mxu0 0
  %1794 = vmatpush1.bf16.msra.mxu0 0
  %1795 = vmatprep.subr.bf16.mxu0 0
  %1796 = vmatpush1.bf16.msra.mxu0 0
  %1797 = vmatprep.mubr.bf16.mxu0 0
  %1798 = vmatmul.mubr.bf16.gmra.mrb[0].mxu0 %v1763
  %v1799 = vpop.f32.mrb[0].mxu0
  %v1800 = vadd.f32 0.0, %v1799
  %v1801 = vpop.f32.mrb[0].mxu0
  %v1802 = vpop.f32.mrb[0].mxu0
  %v1803 = vpop.f32.mrb[0].mxu0
  %1804 = vdwg.mxu0
  %v1805 = vadd.f32 %v1582, %v1800
  %v1806 = vmul.f32 %v1805, 0.5
  %v1807 = vtanh.pop %v1806
  %v1808 = vadd.f32 %v1807, 1.0
  %v1809 = vmul.f32 %v1808, 0.5
  %v1810 = vadd.f32 %v1800, %v1655
  %1812 = vrot.lane.b32.xlu0 %v1810, 64
  %v1813 = vpop.permute.xlu0 %1812
  %v1815 = vmul.f32 %v1809, %v1813
  %1817 = vrot.lane.b32.xlu0 %v1815, 64
  %v1818 = vpop.permute.xlu0 %1817
  %v1820 = vadd.f32 %v1582, %v1818
  %v1821 = vtanh.pop %v1820
  %v1822 = vsub.f32 %v1757, %v1821
  %1824 = vrot.lane.b32.xlu0 %v1822, 96
  %v1825 = vpop.permute.xlu0 %1824
  %v1827 = vmul.f32 %v1809, %v1825
  %1829 = vrot.lane.b32.xlu0 %v1827, 32
  %v1830 = vpop.permute.xlu0 %1829
  %v1832 = vadd.f32 %v1821, %v1830
  %v1833 = vpack.c.bf16 %v1832, %v1832
  %1835 = vrot.lane.b32.xlu0 %v1833, 64
  %v1836 = vpop.permute.xlu0 %1835
  %v1838 = vsel %vm50, %v1836, 0
  %1840 = vmatprep.subr.bf16.mxu0 0
  %1841 = vmatpush1.bf16.msra.mxu0 %v1600
  %1842 = vmatprep.subr.bf16.mxu0 0
  %1843 = vmatpush1.bf16.msra.mxu0 %v1601
  %1844 = vmatprep.subr.bf16.mxu0 0
  %1845 = vmatpush1.bf16.msra.mxu0 0
  %1846 = vmatprep.subr.bf16.mxu0 0
  %1847 = vmatpush1.bf16.msra.mxu0 0
  %1848 = vmatprep.subr.bf16.mxu0 0
  %1849 = vmatpush1.bf16.msra.mxu0 0
  %1850 = vmatprep.subr.bf16.mxu0 0
  %1851 = vmatpush1.bf16.msra.mxu0 0
  %1852 = vmatprep.subr.bf16.mxu0 0
  %1853 = vmatpush1.bf16.msra.mxu0 0
  %1854 = vmatprep.subr.bf16.mxu0 0
  %1855 = vmatpush1.bf16.msra.mxu0 0
  %1856 = vmatprep.subr.bf16.mxu0 0
  %1857 = vmatpush1.bf16.msra.mxu0 0
  %1858 = vmatprep.subr.bf16.mxu0 0
  %1859 = vmatpush1.bf16.msra.mxu0 0
  %1860 = vmatprep.subr.bf16.mxu0 0
  %1861 = vmatpush1.bf16.msra.mxu0 0
  %1862 = vmatprep.subr.bf16.mxu0 0
  %1863 = vmatpush1.bf16.msra.mxu0 0
  %1864 = vmatprep.subr.bf16.mxu0 0
  %1865 = vmatpush1.bf16.msra.mxu0 0
  %1866 = vmatprep.subr.bf16.mxu0 0
  %1867 = vmatpush1.bf16.msra.mxu0 0
  %1868 = vmatprep.subr.bf16.mxu0 0
  %1869 = vmatpush1.bf16.msra.mxu0 0
  %1870 = vmatprep.subr.bf16.mxu0 0
  %1871 = vmatpush1.bf16.msra.mxu0 0
  %1872 = vmatprep.mubr.bf16.mxu0 0
  %1873 = vmatmul.mubr.bf16.gmra.mrb[0].mxu0 %v1838
  %v1874 = vpop.f32.mrb[0].mxu0
  %v1875 = vadd.f32 0.0, %v1874
  %v1876 = vpop.f32.mrb[0].mxu0
  %v1877 = vpop.f32.mrb[0].mxu0
  %v1878 = vpop.f32.mrb[0].mxu0
  %1879 = vdwg.mxu0
  %v1880 = vadd.f32 %v1582, %v1875
  %v1881 = vmul.f32 %v1880, 0.5
  %v1882 = vtanh.pop %v1881
  %v1883 = vadd.f32 %v1882, 1.0
  %v1884 = vmul.f32 %v1883, 0.5
  %v1885 = vadd.f32 %v1875, %v1655
  %1887 = vrot.lane.b32.xlu0 %v1885, 64
  %v1888 = vpop.permute.xlu0 %1887
  %v1890 = vmul.f32 %v1884, %v1888
  %1892 = vrot.lane.b32.xlu0 %v1890, 64
  %v1893 = vpop.permute.xlu0 %1892
  %v1895 = vadd.f32 %v1582, %v1893
  %v1896 = vtanh.pop %v1895
  %v1897 = vsub.f32 %v1832, %v1896
  %1899 = vrot.lane.b32.xlu0 %v1897, 96
  %v1900 = vpop.permute.xlu0 %1899
  %v1902 = vmul.f32 %v1884, %v1900
  %1904 = vrot.lane.b32.xlu0 %v1902, 32
  %v1905 = vpop.permute.xlu0 %1904
  %v1907 = vadd.f32 %v1896, %v1905
  %v1908 = vpack.c.bf16 %v1907, %v1907
  %1910 = vrot.lane.b32.xlu0 %v1908, 64
  %v1911 = vpop.permute.xlu0 %1910
  %v1913 = vsel %vm50, %v1911, 0
  %1915 = vmatprep.subr.bf16.mxu0 0
  %1916 = vmatpush1.bf16.msra.mxu0 %v1600
  %1917 = vmatprep.subr.bf16.mxu0 0
  %1918 = vmatpush1.bf16.msra.mxu0 %v1601
  %1919 = vmatprep.subr.bf16.mxu0 0
  %1920 = vmatpush1.bf16.msra.mxu0 0
  %1921 = vmatprep.subr.bf16.mxu0 0
  %1922 = vmatpush1.bf16.msra.mxu0 0
  %1923 = vmatprep.subr.bf16.mxu0 0
  %1924 = vmatpush1.bf16.msra.mxu0 0
  %1925 = vmatprep.subr.bf16.mxu0 0
  %1926 = vmatpush1.bf16.msra.mxu0 0
  %1927 = vmatprep.subr.bf16.mxu0 0
  %1928 = vmatpush1.bf16.msra.mxu0 0
  %1929 = vmatprep.subr.bf16.mxu0 0
  %1930 = vmatpush1.bf16.msra.mxu0 0
  %1931 = vmatprep.subr.bf16.mxu0 0
  %1932 = vmatpush1.bf16.msra.mxu0 0
  %1933 = vmatprep.subr.bf16.mxu0 0
  %1934 = vmatpush1.bf16.msra.mxu0 0
  %1935 = vmatprep.subr.bf16.mxu0 0
  %1936 = vmatpush1.bf16.msra.mxu0 0
  %1937 = vmatprep.subr.bf16.mxu0 0
  %1938 = vmatpush1.bf16.msra.mxu0 0
  %1939 = vmatprep.subr.bf16.mxu0 0
  %1940 = vmatpush1.bf16.msra.mxu0 0
  %1941 = vmatprep.subr.bf16.mxu0 0
  %1942 = vmatpush1.bf16.msra.mxu0 0
  %1943 = vmatprep.subr.bf16.mxu0 0
  %1944 = vmatpush1.bf16.msra.mxu0 0
  %1945 = vmatprep.subr.bf16.mxu0 0
  %1946 = vmatpush1.bf16.msra.mxu0 0
  %1947 = vmatprep.mubr.bf16.mxu0 0
  %1948 = vmatmul.mubr.bf16.gmra.mrb[0].mxu0 %v1913
  %v1949 = vpop.f32.mrb[0].mxu0
  %v1950 = vadd.f32 0.0, %v1949
  %v1951 = vpop.f32.mrb[0].mxu0
  %v1952 = vpop.f32.mrb[0].mxu0
  %v1953 = vpop.f32.mrb[0].mxu0
  %1954 = vdwg.mxu0
  %v1955 = vadd.f32 %v1582, %v1950
  %v1956 = vmul.f32 %v1955, 0.5
  %v1957 = vtanh.pop %v1956
  %v1958 = vadd.f32 %v1957, 1.0
  %v1959 = vmul.f32 %v1958, 0.5
  %v1960 = vadd.f32 %v1950, %v1655
  %1962 = vrot.lane.b32.xlu0 %v1960, 64
  %v1963 = vpop.permute.xlu0 %1962
  %v1965 = vmul.f32 %v1959, %v1963
  %1967 = vrot.lane.b32.xlu0 %v1965, 64
  %v1968 = vpop.permute.xlu0 %1967
  %v1970 = vadd.f32 %v1582, %v1968
  %v1971 = vtanh.pop %v1970
  %v1972 = vsub.f32 %v1907, %v1971
  %1974 = vrot.lane.b32.xlu0 %v1972, 96
  %v1975 = vpop.permute.xlu0 %1974
  %v1977 = vmul.f32 %v1959, %v1975
  %1979 = vrot.lane.b32.xlu0 %v1977, 32
  %v1980 = vpop.permute.xlu0 %1979
  %v1982 = vadd.f32 %v1971, %v1980
  %v1983 = vpack.c.bf16 %v1982, %v1982
  %1985 = vrot.lane.b32.xlu0 %v1983, 64
  %v1986 = vpop.permute.xlu0 %1985
  %v1988 = vsel %vm50, %v1986, 0
  %1990 = vmatprep.subr.bf16.mxu0 0
  %1991 = vmatpush1.bf16.msra.mxu0 %v1600
  %1992 = vmatprep.subr.bf16.mxu0 0
  %1993 = vmatpush1.bf16.msra.mxu0 %v1601
  %1994 = vmatprep.subr.bf16.mxu0 0
  %1995 = vmatpush1.bf16.msra.mxu0 0
  %1996 = vmatprep.subr.bf16.mxu0 0
  %1997 = vmatpush1.bf16.msra.mxu0 0
  %1998 = vmatprep.subr.bf16.mxu0 0
  %1999 = vmatpush1.bf16.msra.mxu0 0
  %2000 = vmatprep.subr.bf16.mxu0 0
  %2001 = vmatpush1.bf16.msra.mxu0 0
  %2002 = vmatprep.subr.bf16.mxu0 0
  %2003 = vmatpush1.bf16.msra.mxu0 0
  %2004 = vmatprep.subr.bf16.mxu0 0
  %2005 = vmatpush1.bf16.msra.mxu0 0
  %2006 = vmatprep.subr.bf16.mxu0 0
  %2007 = vmatpush1.bf16.msra.mxu0 0
  %2008 = vmatprep.subr.bf16.mxu0 0
  %2009 = vmatpush1.bf16.msra.mxu0 0
  %2010 = vmatprep.subr.bf16.mxu0 0
  %2011 = vmatpush1.bf16.msra.mxu0 0
  %2012 = vmatprep.subr.bf16.mxu0 0
  %2013 = vmatpush1.bf16.msra.mxu0 0
  %2014 = vmatprep.subr.bf16.mxu0 0
  %2015 = vmatpush1.bf16.msra.mxu0 0
  %2016 = vmatprep.subr.bf16.mxu0 0
  %2017 = vmatpush1.bf16.msra.mxu0 0
  %2018 = vmatprep.subr.bf16.mxu0 0
  %2019 = vmatpush1.bf16.msra.mxu0 0
  %2020 = vmatprep.subr.bf16.mxu0 0
  %2021 = vmatpush1.bf16.msra.mxu0 0
  %2022 = vmatprep.mubr.bf16.mxu0 0
  %2023 = vmatmul.mubr.bf16.gmra.mrb[0].mxu0 %v1988
  %v2024 = vpop.f32.mrb[0].mxu0
  %v2025 = vadd.f32 0.0, %v2024
  %v2026 = vpop.f32.mrb[0].mxu0
  %v2027 = vpop.f32.mrb[0].mxu0
  %v2028 = vpop.f32.mrb[0].mxu0
  %2029 = vdwg.mxu0
  %v2030 = vadd.f32 %v1582, %v2025
  %v2031 = vmul.f32 %v2030, 0.5
  %v2032 = vtanh.pop %v2031
  %v2033 = vadd.f32 %v2032, 1.0
  %v2034 = vmul.f32 %v2033, 0.5
  %v2035 = vadd.f32 %v2025, %v1655
  %2037 = vrot.lane.b32.xlu0 %v2035, 64
  %v2038 = vpop.permute.xlu0 %2037
  %v2040 = vmul.f32 %v2034, %v2038
  %2042 = vrot.lane.b32.xlu0 %v2040, 64
  %v2043 = vpop.permute.xlu0 %2042
  %v2045 = vadd.f32 %v1582, %v2043
  %v2046 = vtanh.pop %v2045
  %v2047 = vsub.f32 %v1982, %v2046
  %2049 = vrot.lane.b32.xlu0 %v2047, 96
  %v2050 = vpop.permute.xlu0 %2049
  %v2052 = vmul.f32 %v2034, %v2050
  %2054 = vrot.lane.b32.xlu0 %v2052, 32
  %v2055 = vpop.permute.xlu0 %2054
  %v2057 = vadd.f32 %v2046, %v2055
  %v2058 = vpack.c.bf16 %v2057, %v2057
  %2060 = vrot.lane.b32.xlu0 %v2058, 64
  %v2061 = vpop.permute.xlu0 %2060
  %v2063 = vsel %vm50, %v2061, 0
  %2065 = vmatprep.subr.bf16.mxu0 0
  %2066 = vmatpush1.bf16.msra.mxu0 %v1600
  %2067 = vmatprep.subr.bf16.mxu0 0
  %2068 = vmatpush1.bf16.msra.mxu0 %v1601
  %2069 = vmatprep.subr.bf16.mxu0 0
  %2070 = vmatpush1.bf16.msra.mxu0 0
  %2071 = vmatprep.subr.bf16.mxu0 0
  %2072 = vmatpush1.bf16.msra.mxu0 0
  %2073 = vmatprep.subr.bf16.mxu0 0
  %2074 = vmatpush1.bf16.msra.mxu0 0
  %2075 = vmatprep.subr.bf16.mxu0 0
  %2076 = vmatpush1.bf16.msra.mxu0 0
  %2077 = vmatprep.subr.bf16.mxu0 0
  %2078 = vmatpush1.bf16.msra.mxu0 0
  %2079 = vmatprep.subr.bf16.mxu0 0
  %2080 = vmatpush1.bf16.msra.mxu0 0
  %2081 = vmatprep.subr.bf16.mxu0 0
  %2082 = vmatpush1.bf16.msra.mxu0 0
  %2083 = vmatprep.subr.bf16.mxu0 0
  %2084 = vmatpush1.bf16.msra.mxu0 0
  %2085 = vmatprep.subr.bf16.mxu0 0
  %2086 = vmatpush1.bf16.msra.mxu0 0
  %2087 = vmatprep.subr.bf16.mxu0 0
  %2088 = vmatpush1.bf16.msra.mxu0 0
  %2089 = vmatprep.subr.bf16.mxu0 0
  %2090 = vmatpush1.bf16.msra.mxu0 0
  %2091 = vmatprep.subr.bf16.mxu0 0
  %2092 = vmatpush1.bf16.msra.mxu0 0
  %2093 = vmatprep.subr.bf16.mxu0 0
  %2094 = vmatpush1.bf16.msra.mxu0 0
  %2095 = vmatprep.subr.bf16.mxu0 0
  %2096 = vmatpush1.bf16.msra.mxu0 0
  %2097 = vmatprep.mubr.bf16.mxu0 0
  %2098 = vmatmul.mubr.bf16.gmra.mrb[0].mxu0 %v2063
  %v2099 = vpop.f32.mrb[0].mxu0
  %v2100 = vadd.f32 0.0, %v2099
  %v2101 = vpop.f32.mrb[0].mxu0
  %v2102 = vpop.f32.mrb[0].mxu0
  %v2103 = vpop.f32.mrb[0].mxu0
  %2104 = vdwg.mxu0
  %v2105 = vadd.f32 %v1582, %v2100
  %v2106 = vmul.f32 %v2105, 0.5
  %v2107 = vtanh.pop %v2106
  %v2108 = vadd.f32 %v2107, 1.0
  %v2109 = vmul.f32 %v2108, 0.5
  %v2110 = vadd.f32 %v2100, %v1655
  %2112 = vrot.lane.b32.xlu0 %v2110, 64
  %v2113 = vpop.permute.xlu0 %2112
  %v2115 = vmul.f32 %v2109, %v2113
  %2117 = vrot.lane.b32.xlu0 %v2115, 64
  %v2118 = vpop.permute.xlu0 %2117
  %v2120 = vadd.f32 %v1582, %v2118
  %v2121 = vtanh.pop %v2120
  %v2122 = vsub.f32 %v2057, %v2121
  %2124 = vrot.lane.b32.xlu0 %v2122, 96
  %v2125 = vpop.permute.xlu0 %2124
  %v2127 = vmul.f32 %v2109, %v2125
  %2129 = vrot.lane.b32.xlu0 %v2127, 32
  %v2130 = vpop.permute.xlu0 %2129
  %v2132 = vadd.f32 %v2121, %v2130
  %v2133 = vpack.c.bf16 %v2132, %v2132
  %2135 = vrot.lane.b32.xlu0 %v2133, 64
  %v2136 = vpop.permute.xlu0 %2135
  %v2138 = vsel %vm50, %v2136, 0
  %2140 = vmatprep.subr.bf16.mxu0 0
  %2141 = vmatpush1.bf16.msra.mxu0 %v1600
  %2142 = vmatprep.subr.bf16.mxu0 0
  %2143 = vmatpush1.bf16.msra.mxu0 %v1601
  %2144 = vmatprep.subr.bf16.mxu0 0
  %2145 = vmatpush1.bf16.msra.mxu0 0
  %2146 = vmatprep.subr.bf16.mxu0 0
  %2147 = vmatpush1.bf16.msra.mxu0 0
  %2148 = vmatprep.subr.bf16.mxu0 0
  %2149 = vmatpush1.bf16.msra.mxu0 0
  %2150 = vmatprep.subr.bf16.mxu0 0
  %2151 = vmatpush1.bf16.msra.mxu0 0
  %2152 = vmatprep.subr.bf16.mxu0 0
  %2153 = vmatpush1.bf16.msra.mxu0 0
  %2154 = vmatprep.subr.bf16.mxu0 0
  %2155 = vmatpush1.bf16.msra.mxu0 0
  %2156 = vmatprep.subr.bf16.mxu0 0
  %2157 = vmatpush1.bf16.msra.mxu0 0
  %2158 = vmatprep.subr.bf16.mxu0 0
  %2159 = vmatpush1.bf16.msra.mxu0 0
  %2160 = vmatprep.subr.bf16.mxu0 0
  %2161 = vmatpush1.bf16.msra.mxu0 0
  %2162 = vmatprep.subr.bf16.mxu0 0
  %2163 = vmatpush1.bf16.msra.mxu0 0
  %2164 = vmatprep.subr.bf16.mxu0 0
  %2165 = vmatpush1.bf16.msra.mxu0 0
  %2166 = vmatprep.subr.bf16.mxu0 0
  %2167 = vmatpush1.bf16.msra.mxu0 0
  %2168 = vmatprep.subr.bf16.mxu0 0
  %2169 = vmatpush1.bf16.msra.mxu0 0
  %2170 = vmatprep.subr.bf16.mxu0 0
  %2171 = vmatpush1.bf16.msra.mxu0 0
  %2172 = vmatprep.mubr.bf16.mxu0 0
  %2173 = vmatmul.mubr.bf16.gmra.mrb[0].mxu0 %v2138
  %v2174 = vpop.f32.mrb[0].mxu0
  %v2175 = vadd.f32 0.0, %v2174
  %v2176 = vpop.f32.mrb[0].mxu0
  %v2177 = vpop.f32.mrb[0].mxu0
  %v2178 = vpop.f32.mrb[0].mxu0
  %2179 = vdwg.mxu0
  %v2180 = vadd.f32 %v1582, %v2175
  %v2181 = vmul.f32 %v2180, 0.5
  %v2182 = vtanh.pop %v2181
  %v2183 = vadd.f32 %v2182, 1.0
  %v2184 = vmul.f32 %v2183, 0.5
  %v2185 = vadd.f32 %v2175, %v1655
  %2187 = vrot.lane.b32.xlu0 %v2185, 64
  %v2188 = vpop.permute.xlu0 %2187
  %v2190 = vmul.f32 %v2184, %v2188
  %2192 = vrot.lane.b32.xlu0 %v2190, 64
  %v2193 = vpop.permute.xlu0 %2192
  %v2195 = vadd.f32 %v1582, %v2193
  %v2196 = vtanh.pop %v2195
  %v2197 = vsub.f32 %v2132, %v2196
  %2199 = vrot.lane.b32.xlu0 %v2197, 96
  %v2200 = vpop.permute.xlu0 %2199
  %v2202 = vmul.f32 %v2184, %v2200
  %2204 = vrot.lane.b32.xlu0 %v2202, 32
  %v2205 = vpop.permute.xlu0 %2204
  %v2207 = vadd.f32 %v2196, %v2205
  %v2209 = vrot.slane %v1757, 6
  %v2212 = vrot.slane %v1832, 4
  %v2215 = vrot.slane %v1907, 2
  %v2218 = vrot.slane %v2057, 6
  %v2221 = vrot.slane %v2132, 4
  %v2224 = vrot.slane %v2207, 2
  %v2226 = vsel %vm764, %v1682, %v2209
  %v2227 = vsel %vm766, %v2226, %v2212
  %v2228 = vsel %vm768, %v2227, %v2215
  %v2229 = vsel %vm764, %v1982, %v2218
  %v2230 = vsel %vm766, %v2229, %v2221
  %v2231 = vsel %vm768, %v2230, %v2224
  %v2232 = vld [vmem:[%s1 + $0x60] sm:$0xf]
  %v2233 = vld [vmem:[%s1 + $0x64] sm:$0xf]
  %v2234 = vld [vmem:[%s1 + $0x68] sm:$0xf]
  %v2235 = vld [vmem:[%s1 + $0x6c] sm:$0xf]
  %v2236 = vld [vmem:[%s1 + $0x70] sm:$0xf]
  %v2237 = vld [vmem:[%s1 + $0x74] sm:$0xf]
  %v2238 = vld [vmem:[%s1 + $0x78] sm:$0xf]
  %v2239 = vld [vmem:[%s1 + $0x7c] sm:$0xf]
  %v2240 = vld [vmem:[%s2 + $0x6] sm:$0x1]
  %v2241 = vld [vmem:[%s2 + $0x7] sm:$0x1]
  %v2242 = vpack.c.bf16 %v2231, %v2228
  %v2243 = vlaneseq
  %v2244 = vshrl.u32 %v2243, 7
  %v2245 = vsub.s32 0, %v2244
  %v2246 = vrot.slane %v2240, %v2245
  %2248 = vrot.lane.b32.xlu0 %v2242, 64
  %v2249 = vpop.permute.xlu0 %2248
  %v2254 = vunpack.c.l.b16 %v2232
  %v2255 = vunpack.c.l.b16 %v2233
  %v2256 = vunpack.c.l.b16 %v2234
  %v2257 = vunpack.c.l.b16 %v2235
  %v2258 = vpack.c.b16 %v2255, %v2254
  %v2259 = vpack.c.b16 %v2257, %v2256
  %v2263 = vsel %vm50, %v2249, 0
  %2265 = vmatprep.subr.bf16.mxu0 0
  %2266 = vmatpush1.bf16.msra.mxu0 %v2258
  %2267 = vmatprep.subr.bf16.mxu0 0
  %2268 = vmatpush1.bf16.msra.mxu0 %v2259
  %2269 = vmatprep.subr.bf16.mxu0 0
  %2270 = vmatpush1.bf16.msra.mxu0 0
  %2271 = vmatprep.subr.bf16.mxu0 0
  %2272 = vmatpush1.bf16.msra.mxu0 0
  %2273 = vmatprep.subr.bf16.mxu0 0
  %2274 = vmatpush1.bf16.msra.mxu0 0
  %2275 = vmatprep.subr.bf16.mxu0 0
  %2276 = vmatpush1.bf16.msra.mxu0 0
  %2277 = vmatprep.subr.bf16.mxu0 0
  %2278 = vmatpush1.bf16.msra.mxu0 0
  %2279 = vmatprep.subr.bf16.mxu0 0
  %2280 = vmatpush1.bf16.msra.mxu0 0
  %2281 = vmatprep.subr.bf16.mxu0 0
  %2282 = vmatpush1.bf16.msra.mxu0 0
  %2283 = vmatprep.subr.bf16.mxu0 0
  %2284 = vmatpush1.bf16.msra.mxu0 0
  %2285 = vmatprep.subr.bf16.mxu0 0
  %2286 = vmatpush1.bf16.msra.mxu0 0
  %2287 = vmatprep.subr.bf16.mxu0 0
  %2288 = vmatpush1.bf16.msra.mxu0 0
  %2289 = vmatprep.subr.bf16.mxu0 0
  %2290 = vmatpush1.bf16.msra.mxu0 0
  %2291 = vmatprep.subr.bf16.mxu0 0
  %2292 = vmatpush1.bf16.msra.mxu0 0
  %2293 = vmatprep.subr.bf16.mxu0 0
  %2294 = vmatpush1.bf16.msra.mxu0 0
  %2295 = vmatprep.subr.bf16.mxu0 0
  %2296 = vmatpush1.bf16.msra.mxu0 0
  %2297 = vmatprep.mubr.bf16.mxu0 0
  %2298 = vmatmul.mubr.bf16.gmra.mrb[0].mxu0 %v2263
  %v2299 = vpop.f32.mrb[0].mxu0
  %v2300 = vadd.f32 %v2246, %v2299
  %v2301 = vpop.f32.mrb[0].mxu0
  %v2302 = vpop.f32.mrb[0].mxu0
  %v2303 = vadd.f32 %v2246, %v2302
  %v2304 = vpop.f32.mrb[0].mxu0
  %2305 = vdwg.mxu0
  %v2310 = vunpack.c.l.b16 %v2236
  %v2311 = vunpack.c.l.b16 %v2237
  %v2312 = vunpack.c.l.b16 %v2238
  %v2313 = vunpack.c.l.b16 %v2239
  %v2314 = vpack.c.b16 %v2311, %v2310
  %v2315 = vpack.c.b16 %v2313, %v2312
  %2318 = vmatprep.subr.bf16.mxu0 0
  %2319 = vmatpush1.bf16.msra.mxu0 %v2314
  %2320 = vmatprep.subr.bf16.mxu0 0
  %2321 = vmatpush1.bf16.msra.mxu0 %v2315
  %2322 = vmatprep.subr.bf16.mxu0 0
  %2323 = vmatpush1.bf16.msra.mxu0 0
  %2324 = vmatprep.subr.bf16.mxu0 0
  %2325 = vmatpush1.bf16.msra.mxu0 0
  %2326 = vmatprep.subr.bf16.mxu0 0
  %2327 = vmatpush1.bf16.msra.mxu0 0
  %2328 = vmatprep.subr.bf16.mxu0 0
  %2329 = vmatpush1.bf16.msra.mxu0 0
  %2330 = vmatprep.subr.bf16.mxu0 0
  %2331 = vmatpush1.bf16.msra.mxu0 0
  %2332 = vmatprep.subr.bf16.mxu0 0
  %2333 = vmatpush1.bf16.msra.mxu0 0
  %2334 = vmatprep.subr.bf16.mxu0 0
  %2335 = vmatpush1.bf16.msra.mxu0 0
  %2336 = vmatprep.subr.bf16.mxu0 0
  %2337 = vmatpush1.bf16.msra.mxu0 0
  %2338 = vmatprep.subr.bf16.mxu0 0
  %2339 = vmatpush1.bf16.msra.mxu0 0
  %2340 = vmatprep.subr.bf16.mxu0 0
  %2341 = vmatpush1.bf16.msra.mxu0 0
  %2342 = vmatprep.subr.bf16.mxu0 0
  %2343 = vmatpush1.bf16.msra.mxu0 0
  %2344 = vmatprep.subr.bf16.mxu0 0
  %2345 = vmatpush1.bf16.msra.mxu0 0
  %2346 = vmatprep.subr.bf16.mxu0 0
  %2347 = vmatpush1.bf16.msra.mxu0 0
  %2348 = vmatprep.subr.bf16.mxu0 0
  %2349 = vmatpush1.bf16.msra.mxu0 0
  %2350 = vmatprep.mubr.bf16.mxu0 0
  %2351 = vmatmul.mubr.bf16.gmra.mrb[0].mxu0 %v1545
  %v2352 = vpop.f32.mrb[0].mxu0
  %v2353 = vadd.f32 0.0, %v2352
  %v2354 = vpop.f32.mrb[0].mxu0
  %v2355 = vpop.f32.mrb[0].mxu0
  %v2356 = vpop.f32.mrb[0].mxu0
  %2357 = vdwg.mxu0
  %v2358 = vadd.f32 %v2300, %v2353
  %v2359 = vmul.f32 %v2358, 0.5
  %v2360 = vtanh.pop %v2359
  %v2361 = vadd.f32 %v2360, 1.0
  %v2362 = vmul.f32 %v2361, 0.5
  %v2363 = vlaneseq
  %v2364 = vshrl.u32 %v2363, 7
  %v2365 = vsub.s32 0, %v2364
  %v2366 = vrot.slane %v2241, %v2365
  %v2367 = vadd.f32 %v2353, %v2366
  %2369 = vrot.lane.b32.xlu0 %v2367, 64
  %v2370 = vpop.permute.xlu0 %2369
  %v2372 = vmul.f32 %v2362, %v2370
  %2374 = vrot.lane.b32.xlu0 %v2372, 64
  %v2375 = vpop.permute.xlu0 %2374
  %v2377 = vadd.f32 %v2300, %v2375
  %v2378 = vtanh.pop %v2377
  %v2380 = vrot.slane %v2378, 2
  %v2382 = vsub.f32 %v1512, %v2380
  %v2384 = vrot.slane %v2382, 6
  %2385 = vrot.lane.b32.xlu0 %v2384, 96
  %v2386 = vpop.permute.xlu0 %2385
  %v2388 = vmul.f32 %v2362, %v2386
  %2390 = vrot.lane.b32.xlu0 %v2388, 32
  %v2391 = vpop.permute.xlu0 %2390
  %v2393 = vadd.f32 %v2378, %v2391
  %v2394 = vpack.c.bf16 %v2393, %v2393
  %2396 = vrot.lane.b32.xlu0 %v2394, 64
  %v2397 = vpop.permute.xlu0 %2396
  %v2399 = vsel %vm50, %v2397, 0
  %2401 = vmatprep.subr.bf16.mxu0 0
  %2402 = vmatpush1.bf16.msra.mxu0 %v2314
  %2403 = vmatprep.subr.bf16.mxu0 0
  %2404 = vmatpush1.bf16.msra.mxu0 %v2315
  %2405 = vmatprep.subr.bf16.mxu0 0
  %2406 = vmatpush1.bf16.msra.mxu0 0
  %2407 = vmatprep.subr.bf16.mxu0 0
  %2408 = vmatpush1.bf16.msra.mxu0 0
  %2409 = vmatprep.subr.bf16.mxu0 0
  %2410 = vmatpush1.bf16.msra.mxu0 0
  %2411 = vmatprep.subr.bf16.mxu0 0
  %2412 = vmatpush1.bf16.msra.mxu0 0
  %2413 = vmatprep.subr.bf16.mxu0 0
  %2414 = vmatpush1.bf16.msra.mxu0 0
  %2415 = vmatprep.subr.bf16.mxu0 0
  %2416 = vmatpush1.bf16.msra.mxu0 0
  %2417 = vmatprep.subr.bf16.mxu0 0
  %2418 = vmatpush1.bf16.msra.mxu0 0
  %2419 = vmatprep.subr.bf16.mxu0 0
  %2420 = vmatpush1.bf16.msra.mxu0 0
  %2421 = vmatprep.subr.bf16.mxu0 0
  %2422 = vmatpush1.bf16.msra.mxu0 0
  %2423 = vmatprep.subr.bf16.mxu0 0
  %2424 = vmatpush1.bf16.msra.mxu0 0
  %2425 = vmatprep.subr.bf16.mxu0 0
  %2426 = vmatpush1.bf16.msra.mxu0 0
  %2427 = vmatprep.subr.bf16.mxu0 0
  %2428 = vmatpush1.bf16.msra.mxu0 0
  %2429 = vmatprep.subr.bf16.mxu0 0
  %2430 = vmatpush1.bf16.msra.mxu0 0
  %2431 = vmatprep.subr.bf16.mxu0 0
  %2432 = vmatpush1.bf16.msra.mxu0 0
  %2433 = vmatprep.mubr.bf16.mxu0 0
  %2434 = vmatmul.mubr.bf16.gmra.mrb[0].mxu0 %v2399
  %v2435 = vpop.f32.mrb[0].mxu0
  %v2436 = vadd.f32 0.0, %v2435
  %v2437 = vpop.f32.mrb[0].mxu0
  %v2438 = vpop.f32.mrb[0].mxu0
  %v2439 = vpop.f32.mrb[0].mxu0
  %2440 = vdwg.mxu0
  %v2442 = vrot.slane %v2436, 6
  %v2444 = vadd.f32 %v2300, %v2442
  %v2445 = vmul.f32 %v2444, 0.5
  %v2446 = vtanh.pop %v2445
  %v2447 = vadd.f32 %v2446, 1.0
  %v2448 = vmul.f32 %v2447, 0.5
  %v2449 = vadd.f32 %v2436, %v2366
  %v2451 = vrot.slane %v2449, 6
  %2452 = vrot.lane.b32.xlu0 %v2451, 64
  %v2453 = vpop.permute.xlu0 %2452
  %v2455 = vmul.f32 %v2448, %v2453
  %2457 = vrot.lane.b32.xlu0 %v2455, 64
  %v2458 = vpop.permute.xlu0 %2457
  %v2460 = vadd.f32 %v2300, %v2458
  %v2461 = vtanh.pop %v2460
  %v2463 = vrot.slane %v2461, 2
  %v2465 = vsub.f32 %v2393, %v2463
  %v2467 = vrot.slane %v2465, 6
  %2468 = vrot.lane.b32.xlu0 %v2467, 96
  %v2469 = vpop.permute.xlu0 %2468
  %v2471 = vmul.f32 %v2448, %v2469
  %2473 = vrot.lane.b32.xlu0 %v2471, 32
  %v2474 = vpop.permute.xlu0 %2473
  %v2476 = vadd.f32 %v2461, %v2474
  %v2477 = vpack.c.bf16 %v2476, %v2476
  %v2479 = vrot.slane %v2477, 1
  %2480 = vrot.lane.b32.xlu0 %v2479, 64
  %v2481 = vpop.permute.xlu0 %2480
  %v2483 = vsel %vm50, %v2481, 0
  %2485 = vmatprep.subr.bf16.mxu0 0
  %2486 = vmatpush1.bf16.msra.mxu0 %v2314
  %2487 = vmatprep.subr.bf16.mxu0 0
  %2488 = vmatpush1.bf16.msra.mxu0 %v2315
  %2489 = vmatprep.subr.bf16.mxu0 0
  %2490 = vmatpush1.bf16.msra.mxu0 0
  %2491 = vmatprep.subr.bf16.mxu0 0
  %2492 = vmatpush1.bf16.msra.mxu0 0
  %2493 = vmatprep.subr.bf16.mxu0 0
  %2494 = vmatpush1.bf16.msra.mxu0 0
  %2495 = vmatprep.subr.bf16.mxu0 0
  %2496 = vmatpush1.bf16.msra.mxu0 0
  %2497 = vmatprep.subr.bf16.mxu0 0
  %2498 = vmatpush1.bf16.msra.mxu0 0
  %2499 = vmatprep.subr.bf16.mxu0 0
  %2500 = vmatpush1.bf16.msra.mxu0 0
  %2501 = vmatprep.subr.bf16.mxu0 0
  %2502 = vmatpush1.bf16.msra.mxu0 0
  %2503 = vmatprep.subr.bf16.mxu0 0
  %2504 = vmatpush1.bf16.msra.mxu0 0
  %2505 = vmatprep.subr.bf16.mxu0 0
  %2506 = vmatpush1.bf16.msra.mxu0 0
  %2507 = vmatprep.subr.bf16.mxu0 0
  %2508 = vmatpush1.bf16.msra.mxu0 0
  %2509 = vmatprep.subr.bf16.mxu0 0
  %2510 = vmatpush1.bf16.msra.mxu0 0
  %2511 = vmatprep.subr.bf16.mxu0 0
  %2512 = vmatpush1.bf16.msra.mxu0 0
  %2513 = vmatprep.subr.bf16.mxu0 0
  %2514 = vmatpush1.bf16.msra.mxu0 0
  %2515 = vmatprep.subr.bf16.mxu0 0
  %2516 = vmatpush1.bf16.msra.mxu0 0
  %2517 = vmatprep.mubr.bf16.mxu0 0
  %2518 = vmatmul.mubr.bf16.gmra.mrb[0].mxu0 %v2483
  %v2519 = vpop.f32.mrb[0].mxu0
  %v2520 = vadd.f32 0.0, %v2519
  %v2521 = vpop.f32.mrb[0].mxu0
  %v2522 = vpop.f32.mrb[0].mxu0
  %v2523 = vpop.f32.mrb[0].mxu0
  %2524 = vdwg.mxu0
  %v2526 = vrot.slane %v2520, 4
  %v2528 = vadd.f32 %v2300, %v2526
  %v2529 = vmul.f32 %v2528, 0.5
  %v2530 = vtanh.pop %v2529
  %v2531 = vadd.f32 %v2530, 1.0
  %v2532 = vmul.f32 %v2531, 0.5
  %v2533 = vadd.f32 %v2520, %v2366
  %v2535 = vrot.slane %v2533, 4
  %2536 = vrot.lane.b32.xlu0 %v2535, 64
  %v2537 = vpop.permute.xlu0 %2536
  %v2539 = vmul.f32 %v2532, %v2537
  %2541 = vrot.lane.b32.xlu0 %v2539, 64
  %v2542 = vpop.permute.xlu0 %2541
  %v2544 = vadd.f32 %v2300, %v2542
  %v2545 = vtanh.pop %v2544
  %v2547 = vrot.slane %v2545, 2
  %v2549 = vsub.f32 %v2476, %v2547
  %v2551 = vrot.slane %v2549, 6
  %2552 = vrot.lane.b32.xlu0 %v2551, 96
  %v2553 = vpop.permute.xlu0 %2552
  %v2555 = vmul.f32 %v2532, %v2553
  %2557 = vrot.lane.b32.xlu0 %v2555, 32
  %v2558 = vpop.permute.xlu0 %2557
  %v2560 = vadd.f32 %v2545, %v2558
  %v2561 = vpack.c.bf16 %v2560, %v2560
  %v2563 = vrot.slane %v2561, 2
  %2564 = vrot.lane.b32.xlu0 %v2563, 64
  %v2565 = vpop.permute.xlu0 %2564
  %v2567 = vsel %vm50, %v2565, 0
  %2569 = vmatprep.subr.bf16.mxu0 0
  %2570 = vmatpush1.bf16.msra.mxu0 %v2314
  %2571 = vmatprep.subr.bf16.mxu0 0
  %2572 = vmatpush1.bf16.msra.mxu0 %v2315
  %2573 = vmatprep.subr.bf16.mxu0 0
  %2574 = vmatpush1.bf16.msra.mxu0 0
  %2575 = vmatprep.subr.bf16.mxu0 0
  %2576 = vmatpush1.bf16.msra.mxu0 0
  %2577 = vmatprep.subr.bf16.mxu0 0
  %2578 = vmatpush1.bf16.msra.mxu0 0
  %2579 = vmatprep.subr.bf16.mxu0 0
  %2580 = vmatpush1.bf16.msra.mxu0 0
  %2581 = vmatprep.subr.bf16.mxu0 0
  %2582 = vmatpush1.bf16.msra.mxu0 0
  %2583 = vmatprep.subr.bf16.mxu0 0
  %2584 = vmatpush1.bf16.msra.mxu0 0
  %2585 = vmatprep.subr.bf16.mxu0 0
  %2586 = vmatpush1.bf16.msra.mxu0 0
  %2587 = vmatprep.subr.bf16.mxu0 0
  %2588 = vmatpush1.bf16.msra.mxu0 0
  %2589 = vmatprep.subr.bf16.mxu0 0
  %2590 = vmatpush1.bf16.msra.mxu0 0
  %2591 = vmatprep.subr.bf16.mxu0 0
  %2592 = vmatpush1.bf16.msra.mxu0 0
  %2593 = vmatprep.subr.bf16.mxu0 0
  %2594 = vmatpush1.bf16.msra.mxu0 0
  %2595 = vmatprep.subr.bf16.mxu0 0
  %2596 = vmatpush1.bf16.msra.mxu0 0
  %2597 = vmatprep.subr.bf16.mxu0 0
  %2598 = vmatpush1.bf16.msra.mxu0 0
  %2599 = vmatprep.subr.bf16.mxu0 0
  %2600 = vmatpush1.bf16.msra.mxu0 0
  %2601 = vmatprep.mubr.bf16.mxu0 0
  %2602 = vmatmul.mubr.bf16.gmra.mrb[0].mxu0 %v2567
  %v2603 = vpop.f32.mrb[0].mxu0
  %v2604 = vadd.f32 0.0, %v2603
  %v2605 = vpop.f32.mrb[0].mxu0
  %v2606 = vpop.f32.mrb[0].mxu0
  %v2607 = vpop.f32.mrb[0].mxu0
  %2608 = vdwg.mxu0
  %v2610 = vrot.slane %v2604, 2
  %v2612 = vadd.f32 %v2300, %v2610
  %v2613 = vmul.f32 %v2612, 0.5
  %v2614 = vtanh.pop %v2613
  %v2615 = vadd.f32 %v2614, 1.0
  %v2616 = vmul.f32 %v2615, 0.5
  %v2617 = vadd.f32 %v2604, %v2366
  %v2619 = vrot.slane %v2617, 2
  %2620 = vrot.lane.b32.xlu0 %v2619, 64
  %v2621 = vpop.permute.xlu0 %2620
  %v2623 = vmul.f32 %v2616, %v2621
  %2625 = vrot.lane.b32.xlu0 %v2623, 64
  %v2626 = vpop.permute.xlu0 %2625
  %v2628 = vadd.f32 %v2300, %v2626
  %v2629 = vtanh.pop %v2628
  %v2631 = vrot.slane %v2629, 2
  %v2633 = vsub.f32 %v2560, %v2631
  %v2635 = vrot.slane %v2633, 6
  %2636 = vrot.lane.b32.xlu0 %v2635, 96
  %v2637 = vpop.permute.xlu0 %2636
  %v2639 = vmul.f32 %v2616, %v2637
  %2641 = vrot.lane.b32.xlu0 %v2639, 32
  %v2642 = vpop.permute.xlu0 %2641
  %v2644 = vadd.f32 %v2629, %v2642
  %v2645 = vpack.c.bf16 %v2644, %v2644
  %v2647 = vrot.slane %v2645, 3
  %2648 = vrot.lane.b32.xlu0 %v2647, 64
  %v2649 = vpop.permute.xlu0 %2648
  %v2651 = vsel %vm50, %v2649, 0
  %2653 = vmatprep.subr.bf16.mxu0 0
  %2654 = vmatpush1.bf16.msra.mxu0 %v2314
  %2655 = vmatprep.subr.bf16.mxu0 0
  %2656 = vmatpush1.bf16.msra.mxu0 %v2315
  %2657 = vmatprep.subr.bf16.mxu0 0
  %2658 = vmatpush1.bf16.msra.mxu0 0
  %2659 = vmatprep.subr.bf16.mxu0 0
  %2660 = vmatpush1.bf16.msra.mxu0 0
  %2661 = vmatprep.subr.bf16.mxu0 0
  %2662 = vmatpush1.bf16.msra.mxu0 0
  %2663 = vmatprep.subr.bf16.mxu0 0
  %2664 = vmatpush1.bf16.msra.mxu0 0
  %2665 = vmatprep.subr.bf16.mxu0 0
  %2666 = vmatpush1.bf16.msra.mxu0 0
  %2667 = vmatprep.subr.bf16.mxu0 0
  %2668 = vmatpush1.bf16.msra.mxu0 0
  %2669 = vmatprep.subr.bf16.mxu0 0
  %2670 = vmatpush1.bf16.msra.mxu0 0
  %2671 = vmatprep.subr.bf16.mxu0 0
  %2672 = vmatpush1.bf16.msra.mxu0 0
  %2673 = vmatprep.subr.bf16.mxu0 0
  %2674 = vmatpush1.bf16.msra.mxu0 0
  %2675 = vmatprep.subr.bf16.mxu0 0
  %2676 = vmatpush1.bf16.msra.mxu0 0
  %2677 = vmatprep.subr.bf16.mxu0 0
  %2678 = vmatpush1.bf16.msra.mxu0 0
  %2679 = vmatprep.subr.bf16.mxu0 0
  %2680 = vmatpush1.bf16.msra.mxu0 0
  %2681 = vmatprep.subr.bf16.mxu0 0
  %2682 = vmatpush1.bf16.msra.mxu0 0
  %2683 = vmatprep.subr.bf16.mxu0 0
  %2684 = vmatpush1.bf16.msra.mxu0 0
  %2685 = vmatprep.mubr.bf16.mxu0 0
  %2686 = vmatmul.mubr.bf16.gmra.mrb[0].mxu0 %v2651
  %v2687 = vpop.f32.mrb[0].mxu0
  %v2688 = vadd.f32 0.0, %v2687
  %v2689 = vpop.f32.mrb[0].mxu0
  %v2690 = vpop.f32.mrb[0].mxu0
  %v2691 = vpop.f32.mrb[0].mxu0
  %2692 = vdwg.mxu0
  %v2693 = vadd.f32 %v2303, %v2688
  %v2694 = vmul.f32 %v2693, 0.5
  %v2695 = vtanh.pop %v2694
  %v2696 = vadd.f32 %v2695, 1.0
  %v2697 = vmul.f32 %v2696, 0.5
  %v2698 = vadd.f32 %v2688, %v2366
  %2700 = vrot.lane.b32.xlu0 %v2698, 64
  %v2701 = vpop.permute.xlu0 %2700
  %v2703 = vmul.f32 %v2697, %v2701
  %2705 = vrot.lane.b32.xlu0 %v2703, 64
  %v2706 = vpop.permute.xlu0 %2705
  %v2708 = vadd.f32 %v2303, %v2706
  %v2709 = vtanh.pop %v2708
  %v2711 = vrot.slane %v2709, 2
  %v2713 = vsub.f32 %v2644, %v2711
  %v2715 = vrot.slane %v2713, 6
  %2716 = vrot.lane.b32.xlu0 %v2715, 96
  %v2717 = vpop.permute.xlu0 %2716
  %v2719 = vmul.f32 %v2697, %v2717
  %2721 = vrot.lane.b32.xlu0 %v2719, 32
  %v2722 = vpop.permute.xlu0 %2721
  %v2724 = vadd.f32 %v2709, %v2722
  %v2725 = vpack.c.bf16 %v2724, %v2724
  %2727 = vrot.lane.b32.xlu0 %v2725, 64
  %v2728 = vpop.permute.xlu0 %2727
  %v2730 = vsel %vm50, %v2728, 0
  %2732 = vmatprep.subr.bf16.mxu0 0
  %2733 = vmatpush1.bf16.msra.mxu0 %v2314
  %2734 = vmatprep.subr.bf16.mxu0 0
  %2735 = vmatpush1.bf16.msra.mxu0 %v2315
  %2736 = vmatprep.subr.bf16.mxu0 0
  %2737 = vmatpush1.bf16.msra.mxu0 0
  %2738 = vmatprep.subr.bf16.mxu0 0
  %2739 = vmatpush1.bf16.msra.mxu0 0
  %2740 = vmatprep.subr.bf16.mxu0 0
  %2741 = vmatpush1.bf16.msra.mxu0 0
  %2742 = vmatprep.subr.bf16.mxu0 0
  %2743 = vmatpush1.bf16.msra.mxu0 0
  %2744 = vmatprep.subr.bf16.mxu0 0
  %2745 = vmatpush1.bf16.msra.mxu0 0
  %2746 = vmatprep.subr.bf16.mxu0 0
  %2747 = vmatpush1.bf16.msra.mxu0 0
  %2748 = vmatprep.subr.bf16.mxu0 0
  %2749 = vmatpush1.bf16.msra.mxu0 0
  %2750 = vmatprep.subr.bf16.mxu0 0
  %2751 = vmatpush1.bf16.msra.mxu0 0
  %2752 = vmatprep.subr.bf16.mxu0 0
  %2753 = vmatpush1.bf16.msra.mxu0 0
  %2754 = vmatprep.subr.bf16.mxu0 0
  %2755 = vmatpush1.bf16.msra.mxu0 0
  %2756 = vmatprep.subr.bf16.mxu0 0
  %2757 = vmatpush1.bf16.msra.mxu0 0
  %2758 = vmatprep.subr.bf16.mxu0 0
  %2759 = vmatpush1.bf16.msra.mxu0 0
  %2760 = vmatprep.subr.bf16.mxu0 0
  %2761 = vmatpush1.bf16.msra.mxu0 0
  %2762 = vmatprep.subr.bf16.mxu0 0
  %2763 = vmatpush1.bf16.msra.mxu0 0
  %2764 = vmatprep.mubr.bf16.mxu0 0
  %2765 = vmatmul.mubr.bf16.gmra.mrb[0].mxu0 %v2730
  %v2766 = vpop.f32.mrb[0].mxu0
  %v2767 = vadd.f32 0.0, %v2766
  %v2768 = vpop.f32.mrb[0].mxu0
  %v2769 = vpop.f32.mrb[0].mxu0
  %v2770 = vpop.f32.mrb[0].mxu0
  %2771 = vdwg.mxu0
  %v2773 = vrot.slane %v2767, 6
  %v2775 = vadd.f32 %v2303, %v2773
  %v2776 = vmul.f32 %v2775, 0.5
  %v2777 = vtanh.pop %v2776
  %v2778 = vadd.f32 %v2777, 1.0
  %v2779 = vmul.f32 %v2778, 0.5
  %v2780 = vadd.f32 %v2767, %v2366
  %v2782 = vrot.slane %v2780, 6
  %2783 = vrot.lane.b32.xlu0 %v2782, 64
  %v2784 = vpop.permute.xlu0 %2783
  %v2786 = vmul.f32 %v2779, %v2784
  %2788 = vrot.lane.b32.xlu0 %v2786, 64
  %v2789 = vpop.permute.xlu0 %2788
  %v2791 = vadd.f32 %v2303, %v2789
  %v2792 = vtanh.pop %v2791
  %v2794 = vrot.slane %v2792, 2
  %v2796 = vsub.f32 %v2724, %v2794
  %v2798 = vrot.slane %v2796, 6
  %2799 = vrot.lane.b32.xlu0 %v2798, 96
  %v2800 = vpop.permute.xlu0 %2799
  %v2802 = vmul.f32 %v2779, %v2800
  %2804 = vrot.lane.b32.xlu0 %v2802, 32
  %v2805 = vpop.permute.xlu0 %2804
  %v2807 = vadd.f32 %v2792, %v2805
  %v2808 = vpack.c.bf16 %v2807, %v2807
  %v2810 = vrot.slane %v2808, 1
  %2811 = vrot.lane.b32.xlu0 %v2810, 64
  %v2812 = vpop.permute.xlu0 %2811
  %v2814 = vsel %vm50, %v2812, 0
  %2816 = vmatprep.subr.bf16.mxu0 0
  %2817 = vmatpush1.bf16.msra.mxu0 %v2314
  %2818 = vmatprep.subr.bf16.mxu0 0
  %2819 = vmatpush1.bf16.msra.mxu0 %v2315
  %2820 = vmatprep.subr.bf16.mxu0 0
  %2821 = vmatpush1.bf16.msra.mxu0 0
  %2822 = vmatprep.subr.bf16.mxu0 0
  %2823 = vmatpush1.bf16.msra.mxu0 0
  %2824 = vmatprep.subr.bf16.mxu0 0
  %2825 = vmatpush1.bf16.msra.mxu0 0
  %2826 = vmatprep.subr.bf16.mxu0 0
  %2827 = vmatpush1.bf16.msra.mxu0 0
  %2828 = vmatprep.subr.bf16.mxu0 0
  %2829 = vmatpush1.bf16.msra.mxu0 0
  %2830 = vmatprep.subr.bf16.mxu0 0
  %2831 = vmatpush1.bf16.msra.mxu0 0
  %2832 = vmatprep.subr.bf16.mxu0 0
  %2833 = vmatpush1.bf16.msra.mxu0 0
  %2834 = vmatprep.subr.bf16.mxu0 0
  %2835 = vmatpush1.bf16.msra.mxu0 0
  %2836 = vmatprep.subr.bf16.mxu0 0
  %2837 = vmatpush1.bf16.msra.mxu0 0
  %2838 = vmatprep.subr.bf16.mxu0 0
  %2839 = vmatpush1.bf16.msra.mxu0 0
  %2840 = vmatprep.subr.bf16.mxu0 0
  %2841 = vmatpush1.bf16.msra.mxu0 0
  %2842 = vmatprep.subr.bf16.mxu0 0
  %2843 = vmatpush1.bf16.msra.mxu0 0
  %2844 = vmatprep.subr.bf16.mxu0 0
  %2845 = vmatpush1.bf16.msra.mxu0 0
  %2846 = vmatprep.subr.bf16.mxu0 0
  %2847 = vmatpush1.bf16.msra.mxu0 0
  %2848 = vmatprep.mubr.bf16.mxu0 0
  %2849 = vmatmul.mubr.bf16.gmra.mrb[0].mxu0 %v2814
  %v2850 = vpop.f32.mrb[0].mxu0
  %v2851 = vadd.f32 0.0, %v2850
  %v2852 = vpop.f32.mrb[0].mxu0
  %v2853 = vpop.f32.mrb[0].mxu0
  %v2854 = vpop.f32.mrb[0].mxu0
  %2855 = vdwg.mxu0
  %v2857 = vrot.slane %v2851, 4
  %v2859 = vadd.f32 %v2303, %v2857
  %v2860 = vmul.f32 %v2859, 0.5
  %v2861 = vtanh.pop %v2860
  %v2862 = vadd.f32 %v2861, 1.0
  %v2863 = vmul.f32 %v2862, 0.5
  %v2864 = vadd.f32 %v2851, %v2366
  %v2866 = vrot.slane %v2864, 4
  %2867 = vrot.lane.b32.xlu0 %v2866, 64
  %v2868 = vpop.permute.xlu0 %2867
  %v2870 = vmul.f32 %v2863, %v2868
  %2872 = vrot.lane.b32.xlu0 %v2870, 64
  %v2873 = vpop.permute.xlu0 %2872
  %v2875 = vadd.f32 %v2303, %v2873
  %v2876 = vtanh.pop %v2875
  %v2878 = vrot.slane %v2876, 2
  %v2880 = vsub.f32 %v2807, %v2878
  %v2882 = vrot.slane %v2880, 6
  %2883 = vrot.lane.b32.xlu0 %v2882, 96
  %v2884 = vpop.permute.xlu0 %2883
  %v2886 = vmul.f32 %v2863, %v2884
  %2888 = vrot.lane.b32.xlu0 %v2886, 32
  %v2889 = vpop.permute.xlu0 %2888
  %v2891 = vadd.f32 %v2876, %v2889
  %v2892 = vpack.c.bf16 %v2891, %v2891
  %v2894 = vrot.slane %v2892, 2
  %2895 = vrot.lane.b32.xlu0 %v2894, 64
  %v2896 = vpop.permute.xlu0 %2895
  %v2898 = vsel %vm50, %v2896, 0
  %2900 = vmatprep.subr.bf16.mxu0 0
  %2901 = vmatpush1.bf16.msra.mxu0 %v2314
  %2902 = vmatprep.subr.bf16.mxu0 0
  %2903 = vmatpush1.bf16.msra.mxu0 %v2315
  %2904 = vmatprep.subr.bf16.mxu0 0
  %2905 = vmatpush1.bf16.msra.mxu0 0
  %2906 = vmatprep.subr.bf16.mxu0 0
  %2907 = vmatpush1.bf16.msra.mxu0 0
  %2908 = vmatprep.subr.bf16.mxu0 0
  %2909 = vmatpush1.bf16.msra.mxu0 0
  %2910 = vmatprep.subr.bf16.mxu0 0
  %2911 = vmatpush1.bf16.msra.mxu0 0
  %2912 = vmatprep.subr.bf16.mxu0 0
  %2913 = vmatpush1.bf16.msra.mxu0 0
  %2914 = vmatprep.subr.bf16.mxu0 0
  %2915 = vmatpush1.bf16.msra.mxu0 0
  %2916 = vmatprep.subr.bf16.mxu0 0
  %2917 = vmatpush1.bf16.msra.mxu0 0
  %2918 = vmatprep.subr.bf16.mxu0 0
  %2919 = vmatpush1.bf16.msra.mxu0 0
  %2920 = vmatprep.subr.bf16.mxu0 0
  %2921 = vmatpush1.bf16.msra.mxu0 0
  %2922 = vmatprep.subr.bf16.mxu0 0
  %2923 = vmatpush1.bf16.msra.mxu0 0
  %2924 = vmatprep.subr.bf16.mxu0 0
  %2925 = vmatpush1.bf16.msra.mxu0 0
  %2926 = vmatprep.subr.bf16.mxu0 0
  %2927 = vmatpush1.bf16.msra.mxu0 0
  %2928 = vmatprep.subr.bf16.mxu0 0
  %2929 = vmatpush1.bf16.msra.mxu0 0
  %2930 = vmatprep.subr.bf16.mxu0 0
  %2931 = vmatpush1.bf16.msra.mxu0 0
  %2932 = vmatprep.mubr.bf16.mxu0 0
  %2933 = vmatmul.mubr.bf16.gmra.mrb[0].mxu0 %v2898
  %v2934 = vpop.f32.mrb[0].mxu0
  %v2935 = vadd.f32 0.0, %v2934
  %v2936 = vpop.f32.mrb[0].mxu0
  %v2937 = vpop.f32.mrb[0].mxu0
  %v2938 = vpop.f32.mrb[0].mxu0
  %2939 = vdwg.mxu0
  %v2941 = vrot.slane %v2935, 2
  %v2943 = vadd.f32 %v2303, %v2941
  %v2944 = vmul.f32 %v2943, 0.5
  %v2945 = vtanh.pop %v2944
  %v2946 = vadd.f32 %v2945, 1.0
  %v2947 = vmul.f32 %v2946, 0.5
  %v2948 = vadd.f32 %v2935, %v2366
  %v2950 = vrot.slane %v2948, 2
  %2951 = vrot.lane.b32.xlu0 %v2950, 64
  %v2952 = vpop.permute.xlu0 %2951
  %v2954 = vmul.f32 %v2947, %v2952
  %2956 = vrot.lane.b32.xlu0 %v2954, 64
  %v2957 = vpop.permute.xlu0 %2956
  %v2959 = vadd.f32 %v2303, %v2957
  %v2960 = vtanh.pop %v2959
  %v2962 = vrot.slane %v2960, 2
  %v2964 = vsub.f32 %v2891, %v2962
  %v2966 = vrot.slane %v2964, 6
  %2967 = vrot.lane.b32.xlu0 %v2966, 96
  %v2968 = vpop.permute.xlu0 %2967
  %v2970 = vmul.f32 %v2947, %v2968
  %2972 = vrot.lane.b32.xlu0 %v2970, 32
  %v2973 = vpop.permute.xlu0 %2972
  %v2975 = vadd.f32 %v2960, %v2973
  %v2976 = vsel %vm764, %v2393, %v2476
  %v2977 = vsel %vm766, %v2976, %v2560
  %v2978 = vsel %vm768, %v2977, %v2644
  %v2979 = vsel %vm764, %v2724, %v2807
  %v2980 = vsel %vm766, %v2979, %v2891
  %v2981 = vsel %vm768, %v2980, %v2975
  %v2982 = vpack.c.bf16 %v2981, %v2978
  %v2983 = vld [vmem:[%s3] sm:$0xf]
  %v2984 = vld [vmem:[%s3 + $0x4] sm:$0xf]
  %v2985 = vld [vmem:[%s3 + $0x8] sm:$0xf]
  %v2986 = vld [vmem:[%s3 + $0xc] sm:$0xf]
  %v2987 = vld [vmem:[%s4] sm:$0x1]
  %v2989 = vlaneseq
  %v2990 = vshrl.u32 %v2989, 7
  %v2991 = vsub.s32 0, %v2990
  %v2992 = vrot.slane %v2987, %v2991
  %2995 = vrot.lane.b32.xlu0 %v2982, 64
  %v2996 = vpop.permute.xlu0 %2995
  %v3001 = vunpack.c.l.b16 %v2983
  %v3002 = vunpack.c.l.b16 %v2984
  %v3003 = vunpack.c.l.b16 %v2985
  %v3004 = vunpack.c.l.b16 %v2986
  %v3005 = vpack.c.b16 %v3002, %v3001
  %v3006 = vpack.c.b16 %v3004, %v3003
  %v3010 = vsel %vm50, %v2996, 0
  %3012 = vmatprep.subr.bf16.mxu0 0
  %3013 = vmatpush1.bf16.msra.mxu0 %v3005
  %3014 = vmatprep.subr.bf16.mxu0 0
  %3015 = vmatpush1.bf16.msra.mxu0 %v3006
  %3016 = vmatprep.subr.bf16.mxu0 0
  %3017 = vmatpush1.bf16.msra.mxu0 0
  %3018 = vmatprep.subr.bf16.mxu0 0
  %3019 = vmatpush1.bf16.msra.mxu0 0
  %3020 = vmatprep.subr.bf16.mxu0 0
  %3021 = vmatpush1.bf16.msra.mxu0 0
  %3022 = vmatprep.subr.bf16.mxu0 0
  %3023 = vmatpush1.bf16.msra.mxu0 0
  %3024 = vmatprep.subr.bf16.mxu0 0
  %3025 = vmatpush1.bf16.msra.mxu0 0
  %3026 = vmatprep.subr.bf16.mxu0 0
  %3027 = vmatpush1.bf16.msra.mxu0 0
  %3028 = vmatprep.subr.bf16.mxu0 0
  %3029 = vmatpush1.bf16.msra.mxu0 0
  %3030 = vmatprep.subr.bf16.mxu0 0
  %3031 = vmatpush1.bf16.msra.mxu0 0
  %3032 = vmatprep.subr.bf16.mxu0 0
  %3033 = vmatpush1.bf16.msra.mxu0 0
  %3034 = vmatprep.subr.bf16.mxu0 0
  %3035 = vmatpush1.bf16.msra.mxu0 0
  %3036 = vmatprep.subr.bf16.mxu0 0
  %3037 = vmatpush1.bf16.msra.mxu0 0
  %3038 = vmatprep.subr.bf16.mxu0 0
  %3039 = vmatpush1.bf16.msra.mxu0 0
  %3040 = vmatprep.subr.bf16.mxu0 0
  %3041 = vmatpush1.bf16.msra.mxu0 0
  %3042 = vmatprep.subr.bf16.mxu0 0
  %3043 = vmatpush1.bf16.msra.mxu0 0
  %3044 = vmatprep.mubr.bf16.mxu0 0
  %3045 = vmatmul.mubr.bf16.gmra.mrb[0].mxu0 %v3010
  %v3046 = vpop.f32.mrb[0].mxu0
  %v3047 = vadd.f32 %v2992, %v3046
  %v3048 = vpop.f32.mrb[0].mxu0
  %v3049 = vpop.f32.mrb[0].mxu0
  %v3050 = vadd.f32 %v2992, %v3049
  %v3051 = vpop.f32.mrb[0].mxu0
  %3052 = vdwg.mxu0
  %3053 = vst [vmem:[%s5] sm:$0xff] %v3047
  %3054 = vst [vmem:[%s5 + $0x8] sm:$0xff] %v3050
  // Predicated region
  $region22: #{gru_autoencoder_forward.1} parent=0 // pred_check
    _
  $region23: #{gru_autoencoder_forward.1} parent=0 // pred_check_branch
    %3056 = sbr.rel (0) target = $region25
  $region24: #{gru_autoencoder_forward.1} parent=0 // pred_region
    _
  $region25: #{gru_autoencoder_forward.1} parent=0 // pred_fallthru
    _
  // Predicated region
  $region26: #{gru_autoencoder_forward.1} parent=0 // pred_check
    _
  $region27: #{gru_autoencoder_forward.1} parent=0 // pred_check_branch
    %3058 = sbr.rel (0) target = $region29
  $region28: #{gru_autoencoder_forward.1} parent=0 // pred_region
    _
  $region29: #{gru_autoencoder_forward.1} parent=0 // pred_fallthru
    _

</llo_original>
